<compile_context>
chip_gen: v6e
topology: v6e:2x2x1
jax: 0.10.0
libtpu: 0.0.40
codegen_flags: <defaults>
</compile_context>

<pallas_src>
import functools

import jax
import jax.numpy as jnp
import numpy as np
from jax import lax
from jax.experimental import pallas as pl
from jax.experimental.pallas import tpu as pltpu

EPS = 1e-5  # torch.nn.GroupNorm default


def _interp_matrix(n_in, n_out):
    """Row-interpolation matrix for 1-D linear upsample, align_corners=True."""
    if n_in == 1:
        return jnp.ones((n_out, 1), jnp.float32)
    pos = jnp.arange(n_out, dtype=jnp.float32) * (n_in - 1) / (n_out - 1)
    i0 = jnp.clip(jnp.floor(pos).astype(jnp.int32), 0, n_in - 2)
    w = pos - i0.astype(jnp.float32)
    m = jnp.zeros((n_out, n_in), jnp.float32)
    rows = jnp.arange(n_out)
    m = m.at[rows, i0].add(1.0 - w)
    m = m.at[rows, i0 + 1].add(w)
    return m


def _conv_pass1_kernel(x_hbm, m9t_ref, w_ref, y_ref, stats_ref, xs_ref, ups_ref,
                       *, td, c_in, c_out, h2w2, rows_per_b):
    """Pass 1: fused upsample + 3D conv (no bias) + per-tile GroupNorm partial stats.

    One grid step = (batch b, depth tile dt).  x is fetched as a depth slab
    (td + 2 halo slices) straight from HBM -> VMEM; nothing x27-inflated ever
    touches HBM.
    """
    b = pl.program_id(0)
    dt = pl.program_id(1)
    rows_slab = (td + 2) * c_in
    start = b * rows_per_b + dt * (td * c_in)

    # Depth slab (with +/-1 halo) HBM -> VMEM.  x rows are (depth, channel)-major,
    # spatially flattened, so this is one contiguous DMA.
    # TODO(synk): double-buffer this copy (make_async_copy, 2 slots) to overlap the
    # slab fetch of step i+1 with the compute of step i.
    pltpu.sync_copy(x_hbm.at[pl.ds(start, rows_slab)], xs_ref)
    xs = xs_ref[...]                                          # (rows_slab, H*W) bf16

    # Fused bilinear x2 upsample + conv zero-pad + (kh,kw) shift: one MXU matmul
    # per spatial tap against the precomputed kron(Uh_kh, Uw_kw)^T operator.
    for t in range(9):
        ups_ref[t] = jnp.dot(xs, m9t_ref[t],
                             preferred_element_type=jnp.float32)  # (rows_slab, h2w2)

    s1 = jnp.zeros((c_out, 1), jnp.float32)
    s2 = jnp.zeros((c_out, 1), jnp.float32)
    for dd in range(td):                                      # output depth in tile
        acc = jnp.zeros((c_out, h2w2), jnp.float32)
        for t in range(9):                                    # 9 spatial taps
            # 3 depth taps x C_in channels are contiguous rows of the slab.
            blk = ups_ref[t, dd * c_in:(dd + 3) * c_in, :]    # (3*C_in, h2w2)
            acc = acc + jnp.dot(w_ref[t], blk,
                                preferred_element_type=jnp.float32)
        y_ref[0, dd] = acc.astype(jnp.bfloat16)               # lane-dense write
        s1 = s1 + jnp.sum(acc, axis=1, keepdims=True)         # per-channel partials
        s2 = s2 + jnp.sum(acc * acc, axis=1, keepdims=True)
    stats_ref[0, 0] = jnp.concatenate([s1, s2], axis=1)       # (C_out, 2)


def _gn_relu_kernel(y_ref, scale_ref, shift_ref, o_ref):
    """Pass 2: single fused FMA epilogue  out = relu(y*scale + shift).

    `scale`/`shift` fold GroupNorm mean/var, gamma/beta AND the conv bias.
    """
    y = y_ref[0].astype(jnp.float32)                          # (td, C_out, H2*W2)
    o_ref[0] = jnp.maximum(y * scale_ref[0] + shift_ref[0], 0.0)


def upsample_conv3d(x, weight, bias, gamma, beta, *, groups, depth_tile=None):
    B, C_in, D, H, W = x.shape
    C_out, C_in_w, k, kh_, kw_ = weight.shape
    assert C_in_w == C_in and k == 3 and kh_ == 3 and kw_ == 3, "k=3 path implemented"
    H2, W2 = 2 * H, 2 * W
    HW, H2W2 = H * W, H2 * W2

    td = depth_tile if depth_tile is not None else min(D, 4)
    while D % td:                       # fall back to a divisor of D
        td -= 1
    n_dt = D // td
    rows_slab = (td + 2) * C_in
    rows_per_b = (D + 2) * C_in

    # ---------------- host-side prep (one cheap O(x) pass, tiny operators) --------
    # depth pad by 1 (conv pad on D), depth-major / channel-minor rows, flat spatial.
    x_dp = jnp.pad(x, ((0, 0), (0, 0), (1, 1), (0, 0), (0, 0)))
    x_rows = (jnp.transpose(x_dp, (0, 2, 1, 3, 4))
              .reshape(B * rows_per_b, HW).astype(jnp.bfloat16))

    # 9 fused "upsample + zero-pad + (kh,kw)-shift" operators: kron(Uh_kh, Uw_kw)^T.
    uh = jnp.pad(_interp_matrix(H, H2), ((1, 1), (0, 0)))     # (H2+2, H)
    uw = jnp.pad(_interp_matrix(W, W2), ((1, 1), (0, 0)))     # (W2+2, W)
    m9 = []
    for kh in range(3):
        for kw in range(3):
            m = jnp.einsum('ah,bw->hwab', uh[kh:kh + H2], uw[kw:kw + W2])
            m9.append(m.reshape(HW, H2W2))
    m9t = jnp.stack(m9, axis=0).astype(jnp.bfloat16)          # (9, HW, H2W2)

    # conv weights regrouped per spatial tap: (9, C_out, 3(kd)*C_in), ci-minor.
    w9 = jnp.transpose(weight, (3, 4, 0, 2, 1)).reshape(9, C_out, 3 * C_in)
    w9 = w9.astype(jnp.float32)                               # tiny; keep f32 accuracy

    flops = B * n_dt * (9 * 2 * rows_slab * HW * H2W2
                        + td * 9 * 2 * C_out * 3 * C_in * H2W2)
    bytes_accessed = (B * rows_per_b * HW * 2 + int(m9t.size) * 2 + int(w9.size) * 4
                      + B * D * C_out * H2W2 * 2 + B * n_dt * C_out * 2 * 4)

    kern1 = functools.partial(_conv_pass1_kernel, td=td, c_in=C_in, c_out=C_out,
                              h2w2=H2W2, rows_per_b=rows_per_b)

    y, stats = pl.pallas_call(
        kern1,
        out_shape=[jax.ShapeDtypeStruct((B, D, C_out, H2W2), jnp.bfloat16),
                   jax.ShapeDtypeStruct((B, n_dt, C_out, 2), jnp.float32)],
        grid_spec=pltpu.PrefetchScalarGridSpec(
            num_scalar_prefetch=0,
            grid=(B, n_dt),
            in_specs=[
                pl.BlockSpec(memory_space=pl.ANY),                      # x stays in HBM
                pl.BlockSpec((9, HW, H2W2), lambda b, d: (0, 0, 0)),    # resident ops
                pl.BlockSpec((9, C_out, 3 * C_in), lambda b, d: (0, 0, 0)),
            ],
            out_specs=[
                pl.BlockSpec((1, td, C_out, H2W2), lambda b, d: (b, d, 0, 0)),
                pl.BlockSpec((1, 1, C_out, 2), lambda b, d: (b, d, 0, 0)),
            ],
            scratch_shapes=[
                pltpu.VMEM((rows_slab, HW), jnp.bfloat16),              # x depth slab
                pltpu.VMEM((9, rows_slab, H2W2), jnp.float32),          # upsampled taps
            ],
        ),
        compiler_params=pltpu.CompilerParams(
            dimension_semantics=("parallel", "parallel"),
            # raise scoped VMEM (32 MiB default on v6e); actual use here is ~2 MiB.
            # TODO(synk): on v7x (64 MiB physical VMEM) re-derive tile sizes.
            vmem_limit_bytes=64 * 1024 * 1024),
        cost_estimate=pl.CostEstimate(flops=flops, transcendentals=0,
                                      bytes_accessed=bytes_accessed),
    )(x_rows, m9t, w9)

    # --------- tiny host-side GroupNorm stat finalization (O(B*C_out) scalars) -----
    s = stats.sum(axis=1)                                     # reduce over depth tiles
    s1, s2 = s[..., 0], s[..., 1]                             # per-channel sum / sumsq
    p_sp = float(D * H2W2)
    bias_f = bias.astype(jnp.float32)[None, :]
    s1b = s1 + p_sp * bias_f                                  # fold conv bias into stats
    s2b = s2 + 2.0 * bias_f * s1 + p_sp * bias_f * bias_f
    cg = C_out // groups
    n_g = cg * p_sp
    mu_g = s1b.reshape(B, groups, cg).sum(-1) / n_g
    var_g = s2b.reshape(B, groups, cg).sum(-1) / n_g - mu_g * mu_g
    inv_g = lax.rsqrt(var_g + EPS)
    mu_c = jnp.repeat(mu_g, cg, axis=1)
    inv_c = jnp.repeat(inv_g, cg, axis=1)
    gamma_f = gamma.astype(jnp.float32)[None, :]
    beta_f = beta.astype(jnp.float32)[None, :]
    scale = (gamma_f * inv_c).reshape(B, C_out, 1)
    shift = (beta_f + (bias_f - mu_c) * gamma_f * inv_c).reshape(B, C_out, 1)

    # TODO(synk): optional `residual` add (forward default residual=None) not wired in.
    out = pl.pallas_call(
        _gn_relu_kernel,
        out_shape=jax.ShapeDtypeStruct((B, D, C_out, H2W2), jnp.float32),
        grid_spec=pltpu.PrefetchScalarGridSpec(
            num_scalar_prefetch=0,
            grid=(B, n_dt),
            in_specs=[
                pl.BlockSpec((1, td, C_out, H2W2), lambda b, d: (b, d, 0, 0)),
                pl.BlockSpec((1, C_out, 1), lambda b, d: (b, 0, 0)),
                pl.BlockSpec((1, C_out, 1), lambda b, d: (b, 0, 0)),
            ],
            out_specs=pl.BlockSpec((1, td, C_out, H2W2), lambda b, d: (b, d, 0, 0)),
        ),
        compiler_params=pltpu.CompilerParams(
            dimension_semantics=("parallel", "parallel")),
    )(y, scale, shift)

    # back to PyTorch NCDHW
    return out.reshape(B, D, C_out, H2, W2).transpose(0, 2, 1, 3, 4)


def _reference(x, weight, bias, gamma, beta, groups):
    """Pure-JAX reference of Upsample(bilinear x2) -> Conv3d -> GroupNorm -> ReLU."""
    B, C_in, D, H, W = x.shape
    C_out = weight.shape[0]
    Uh = _interp_matrix(H, 2 * H)
    Uw = _interp_matrix(W, 2 * W)
    x_up = jnp.einsum('bcdhw,Hh,Ww->bcdHW', x, Uh, Uw)
    y = lax.conv_general_dilated(
        x_up, weight, window_strides=(1, 1, 1), padding=[(1, 1)] * 3,
        dimension_numbers=('NCDHW', 'OIDHW', 'NCDHW'))
    y = y + bias.reshape(1, -1, 1, 1, 1)
    cg = C_out // groups
    yg = y.reshape(B, groups, cg, *y.shape[2:])
    mu = yg.mean(axis=(2, 3, 4, 5), keepdims=True)
    var = ((yg - mu) ** 2).mean(axis=(2, 3, 4, 5), keepdims=True)
    yn = ((yg - mu) * lax.rsqrt(var + EPS)).reshape(y.shape)
    yn = yn * gamma.reshape(1, -1, 1, 1, 1) + beta.reshape(1, -1, 1, 1, 1)
    return jnp.maximum(yn, 0.0)


if __name__ == "__main__":
    key = jax.random.PRNGKey(0)
    B, C_in, C_out, D, H, W, k = 2, 4, 8, 4, 8, 8, 3
    groups = C_out // 4  # ch_out // 4, as in the module

    k0, k1, k2, k3, k4 = jax.random.split(key, 5)
    x = jax.random.normal(k0, (B, C_in, D, H, W), jnp.float32)
    weight = 0.1 * jax.random.normal(k1, (C_out, C_in, k, k, k), jnp.float32)
    bias = 0.1 * jax.random.normal(k2, (C_out,), jnp.float32)
    gamma = 1.0 + 0.1 * jax.random.normal(k3, (C_out,), jnp.float32)
    beta = 0.1 * jax.random.normal(k4, (C_out,), jnp.float32)

    out = jax.block_until_ready(
        upsample_conv3d(x, weight, bias, gamma, beta, groups=groups, depth_tile=2))
    ref = jax.block_until_ready(_reference(x, weight, bias, gamma, beta, groups))

    assert out.shape == (B, C_out, D, 2 * H, 2 * W)
    np.testing.assert_allclose(np.asarray(out), np.asarray(ref),
                               rtol=5e-2, atol=5e-2)
    print("KERNEL_OK")
</pallas_src>

<mosaic_0001>
module attributes {stable_mosaic.version = 11 : i64} {
  func.func @_conv_pass1_kernel(%arg0: i32, %arg1: i32, %arg2: memref<48x64xbf16, #tpu.memory_space<any>>, %arg3: memref<9x64x256xbf16, #tpu.memory_space<vmem>>, %arg4: memref<9x8x12xf32, #tpu.memory_space<vmem>>, %arg5: memref<1x2x8x256xbf16, #tpu.memory_space<vmem>>, %arg6: memref<1x1x8x2xf32, #tpu.memory_space<vmem>>, %arg7: memref<16x64xbf16, #tpu.memory_space<vmem>>, %arg8: memref<9x16x256xf32, #tpu.memory_space<vmem>>) attributes {dimension_semantics = [#tpu.dimension_semantics<parallel>, #tpu.dimension_semantics<parallel>], iteration_bounds = array<i64: 2, 2>, scalar_prefetch = 0 : i64, scratch_operands = 2 : i64, tpu.core_type = #tpu.core_type<tc>, window_params = [{}, {pipeline_mode = #tpu.pipeline_mode<synchronous>, transform_indices = @transform_1, window_bounds = array<i64: 9, 64, 256>}, {pipeline_mode = #tpu.pipeline_mode<synchronous>, transform_indices = @transform_2, window_bounds = array<i64: 9, 8, 12>}, {transform_indices = @transform_3, window_bounds = array<i64: 1, 2, 8, 256>}, {transform_indices = @transform_4, window_bounds = array<i64: 1, 1, 8, 2>}]} {
    %c24_i32 = arith.constant 24 : i32
    %0 = arith.muli %arg0, %c24_i32 : i32
    %c8_i32 = arith.constant 8 : i32
    %1 = arith.muli %arg1, %c8_i32 : i32
    %2 = arith.addi %0, %1 : i32
    "tpu.region"() ({
      %196 = tpu.sem_alloc : memref<!tpu.dma_semaphore, #tpu.memory_space<semaphore_mem>>
      %c0_i32 = arith.constant 0 : i32
      %197 = tpu.memref_slice %arg2[%2, %c0_i32] : memref<48x64xbf16, #tpu.memory_space<any>> -> memref<16x64xbf16, #tpu.memory_space<any>>
      tpu.enqueue_dma source(%197 : memref<16x64xbf16, #tpu.memory_space<any>>) target(%arg7 : memref<16x64xbf16, #tpu.memory_space<vmem>>) target_semaphore(%196 : memref<!tpu.dma_semaphore, #tpu.memory_space<semaphore_mem>>)
      %c0_i32_201 = arith.constant 0 : i32
      %198 = tpu.memref_slice %arg2[%2, %c0_i32_201] : memref<48x64xbf16, #tpu.memory_space<any>> -> memref<16x64xbf16, #tpu.memory_space<any>>
      tpu.wait_dma2 semaphore(%196 : memref<!tpu.dma_semaphore, #tpu.memory_space<semaphore_mem>>) src(%198 : memref<16x64xbf16, #tpu.memory_space<any>>) dst(%arg7 : memref<16x64xbf16, #tpu.memory_space<vmem>>)
      tpu.yield
    }) : () -> ()
    %c0 = arith.constant 0 : index
    %c0_0 = arith.constant 0 : index
    %3 = vector.load %arg7[%c0, %c0_0] : memref<16x64xbf16, #tpu.memory_space<vmem>>, vector<16x64xbf16>
    %c0_1 = arith.constant 0 : index
    %c0_2 = arith.constant 0 : index
    %c0_3 = arith.constant 0 : index
    %4 = vector.load %arg3[%c0_1, %c0_2, %c0_3] : memref<9x64x256xbf16, #tpu.memory_space<vmem>>, vector<1x64x256xbf16>
    %5 = vector.shape_cast %4 : vector<1x64x256xbf16> to vector<64x256xbf16>
    %cst = arith.constant dense<0.000000e+00> : vector<16x256xf32>
    %6 = tpu.matmul %3, %5, %cst {dimension_numbers = #tpu.dot_dimension_numbers<[1], [0], [0], [1], [0, 0, 1, 1], [], []>} : vector<16x64xbf16>, vector<64x256xbf16>, vector<16x256xf32> -> vector<16x256xf32>
    %c0_4 = arith.constant 0 : index
    %c0_5 = arith.constant 0 : index
    %c0_6 = arith.constant 0 : index
    %7 = vector.load %arg8[%c0_4, %c0_5, %c0_6] : memref<9x16x256xf32, #tpu.memory_space<vmem>>, vector<1x16x256xf32>
    %8 = vector.shape_cast %7 : vector<1x16x256xf32> to vector<16x256xf32>
    %9 = vector.shape_cast %6 : vector<16x256xf32> to vector<1x16x256xf32>
    tpu.vector_store %arg8[%c0_4, %c0_5, %c0_6], %9 {strides = array<i32>} : memref<9x16x256xf32, #tpu.memory_space<vmem>>, vector<1x16x256xf32>,
    %c1 = arith.constant 1 : index
    %c0_7 = arith.constant 0 : index
    %c0_8 = arith.constant 0 : index
    %10 = vector.load %arg3[%c1, %c0_7, %c0_8] : memref<9x64x256xbf16, #tpu.memory_space<vmem>>, vector<1x64x256xbf16>
    %11 = vector.shape_cast %10 : vector<1x64x256xbf16> to vector<64x256xbf16>
    %cst_9 = arith.constant dense<0.000000e+00> : vector<16x256xf32>
    %12 = tpu.matmul %3, %11, %cst_9 {dimension_numbers = #tpu.dot_dimension_numbers<[1], [0], [0], [1], [0, 0, 1, 1], [], []>} : vector<16x64xbf16>, vector<64x256xbf16>, vector<16x256xf32> -> vector<16x256xf32>
    %c1_10 = arith.constant 1 : index
    %c0_11 = arith.constant 0 : index
    %c0_12 = arith.constant 0 : index
    %13 = vector.load %arg8[%c1_10, %c0_11, %c0_12] : memref<9x16x256xf32, #tpu.memory_space<vmem>>, vector<1x16x256xf32>
    %14 = vector.shape_cast %13 : vector<1x16x256xf32> to vector<16x256xf32>
    %15 = vector.shape_cast %12 : vector<16x256xf32> to vector<1x16x256xf32>
    tpu.vector_store %arg8[%c1_10, %c0_11, %c0_12], %15 {strides = array<i32>} : memref<9x16x256xf32, #tpu.memory_space<vmem>>, vector<1x16x256xf32>,
    %c2 = arith.constant 2 : index
    %c0_13 = arith.constant 0 : index
    %c0_14 = arith.constant 0 : index
    %16 = vector.load %arg3[%c2, %c0_13, %c0_14] : memref<9x64x256xbf16, #tpu.memory_space<vmem>>, vector<1x64x256xbf16>
    %17 = vector.shape_cast %16 : vector<1x64x256xbf16> to vector<64x256xbf16>
    %cst_15 = arith.constant dense<0.000000e+00> : vector<16x256xf32>
    %18 = tpu.matmul %3, %17, %cst_15 {dimension_numbers = #tpu.dot_dimension_numbers<[1], [0], [0], [1], [0, 0, 1, 1], [], []>} : vector<16x64xbf16>, vector<64x256xbf16>, vector<16x256xf32> -> vector<16x256xf32>
    %c2_16 = arith.constant 2 : index
    %c0_17 = arith.constant 0 : index
    %c0_18 = arith.constant 0 : index
    %19 = vector.load %arg8[%c2_16, %c0_17, %c0_18] : memref<9x16x256xf32, #tpu.memory_space<vmem>>, vector<1x16x256xf32>
    %20 = vector.shape_cast %19 : vector<1x16x256xf32> to vector<16x256xf32>
    %21 = vector.shape_cast %18 : vector<16x256xf32> to vector<1x16x256xf32>
    tpu.vector_store %arg8[%c2_16, %c0_17, %c0_18], %21 {strides = array<i32>} : memref<9x16x256xf32, #tpu.memory_space<vmem>>, vector<1x16x256xf32>,
    %c3 = arith.constant 3 : index
    %c0_19 = arith.constant 0 : index
    %c0_20 = arith.constant 0 : index
    %22 = vector.load %arg3[%c3, %c0_19, %c0_20] : memref<9x64x256xbf16, #tpu.memory_space<vmem>>, vector<1x64x256xbf16>
    %23 = vector.shape_cast %22 : vector<1x64x256xbf16> to vector<64x256xbf16>
    %cst_21 = arith.constant dense<0.000000e+00> : vector<16x256xf32>
    %24 = tpu.matmul %3, %23, %cst_21 {dimension_numbers = #tpu.dot_dimension_numbers<[1], [0], [0], [1], [0, 0, 1, 1], [], []>} : vector<16x64xbf16>, vector<64x256xbf16>, vector<16x256xf32> -> vector<16x256xf32>
    %c3_22 = arith.constant 3 : index
    %c0_23 = arith.constant 0 : index
    %c0_24 = arith.constant 0 : index
    %25 = vector.load %arg8[%c3_22, %c0_23, %c0_24] : memref<9x16x256xf32, #tpu.memory_space<vmem>>, vector<1x16x256xf32>
    %26 = vector.shape_cast %25 : vector<1x16x256xf32> to vector<16x256xf32>
    %27 = vector.shape_cast %24 : vector<16x256xf32> to vector<1x16x256xf32>
    tpu.vector_store %arg8[%c3_22, %c0_23, %c0_24], %27 {strides = array<i32>} : memref<9x16x256xf32, #tpu.memory_space<vmem>>, vector<1x16x256xf32>,
    %c4 = arith.constant 4 : index
    %c0_25 = arith.constant 0 : index
    %c0_26 = arith.constant 0 : index
    %28 = vector.load %arg3[%c4, %c0_25, %c0_26] : memref<9x64x256xbf16, #tpu.memory_space<vmem>>, vector<1x64x256xbf16>
    %29 = vector.shape_cast %28 : vector<1x64x256xbf16> to vector<64x256xbf16>
    %cst_27 = arith.constant dense<0.000000e+00> : vector<16x256xf32>
    %30 = tpu.matmul %3, %29, %cst_27 {dimension_numbers = #tpu.dot_dimension_numbers<[1], [0], [0], [1], [0, 0, 1, 1], [], []>} : vector<16x64xbf16>, vector<64x256xbf16>, vector<16x256xf32> -> vector<16x256xf32>
    %c4_28 = arith.constant 4 : index
    %c0_29 = arith.constant 0 : index
    %c0_30 = arith.constant 0 : index
    %31 = vector.load %arg8[%c4_28, %c0_29, %c0_30] : memref<9x16x256xf32, #tpu.memory_space<vmem>>, vector<1x16x256xf32>
    %32 = vector.shape_cast %31 : vector<1x16x256xf32> to vector<16x256xf32>
    %33 = vector.shape_cast %30 : vector<16x256xf32> to vector<1x16x256xf32>
    tpu.vector_store %arg8[%c4_28, %c0_29, %c0_30], %33 {strides = array<i32>} : memref<9x16x256xf32, #tpu.memory_space<vmem>>, vector<1x16x256xf32>,
    %c5 = arith.constant 5 : index
    %c0_31 = arith.constant 0 : index
    %c0_32 = arith.constant 0 : index
    %34 = vector.load %arg3[%c5, %c0_31, %c0_32] : memref<9x64x256xbf16, #tpu.memory_space<vmem>>, vector<1x64x256xbf16>
    %35 = vector.shape_cast %34 : vector<1x64x256xbf16> to vector<64x256xbf16>
    %cst_33 = arith.constant dense<0.000000e+00> : vector<16x256xf32>
    %36 = tpu.matmul %3, %35, %cst_33 {dimension_numbers = #tpu.dot_dimension_numbers<[1], [0], [0], [1], [0, 0, 1, 1], [], []>} : vector<16x64xbf16>, vector<64x256xbf16>, vector<16x256xf32> -> vector<16x256xf32>
    %c5_34 = arith.constant 5 : index
    %c0_35 = arith.constant 0 : index
    %c0_36 = arith.constant 0 : index
    %37 = vector.load %arg8[%c5_34, %c0_35, %c0_36] : memref<9x16x256xf32, #tpu.memory_space<vmem>>, vector<1x16x256xf32>
    %38 = vector.shape_cast %37 : vector<1x16x256xf32> to vector<16x256xf32>
    %39 = vector.shape_cast %36 : vector<16x256xf32> to vector<1x16x256xf32>
    tpu.vector_store %arg8[%c5_34, %c0_35, %c0_36], %39 {strides = array<i32>} : memref<9x16x256xf32, #tpu.memory_space<vmem>>, vector<1x16x256xf32>,
    %c6 = arith.constant 6 : index
    %c0_37 = arith.constant 0 : index
    %c0_38 = arith.constant 0 : index
    %40 = vector.load %arg3[%c6, %c0_37, %c0_38] : memref<9x64x256xbf16, #tpu.memory_space<vmem>>, vector<1x64x256xbf16>
    %41 = vector.shape_cast %40 : vector<1x64x256xbf16> to vector<64x256xbf16>
    %cst_39 = arith.constant dense<0.000000e+00> : vector<16x256xf32>
    %42 = tpu.matmul %3, %41, %cst_39 {dimension_numbers = #tpu.dot_dimension_numbers<[1], [0], [0], [1], [0, 0, 1, 1], [], []>} : vector<16x64xbf16>, vector<64x256xbf16>, vector<16x256xf32> -> vector<16x256xf32>
    %c6_40 = arith.constant 6 : index
    %c0_41 = arith.constant 0 : index
    %c0_42 = arith.constant 0 : index
    %43 = vector.load %arg8[%c6_40, %c0_41, %c0_42] : memref<9x16x256xf32, #tpu.memory_space<vmem>>, vector<1x16x256xf32>
    %44 = vector.shape_cast %43 : vector<1x16x256xf32> to vector<16x256xf32>
    %45 = vector.shape_cast %42 : vector<16x256xf32> to vector<1x16x256xf32>
    tpu.vector_store %arg8[%c6_40, %c0_41, %c0_42], %45 {strides = array<i32>} : memref<9x16x256xf32, #tpu.memory_space<vmem>>, vector<1x16x256xf32>,
    %c7 = arith.constant 7 : index
    %c0_43 = arith.constant 0 : index
    %c0_44 = arith.constant 0 : index
    %46 = vector.load %arg3[%c7, %c0_43, %c0_44] : memref<9x64x256xbf16, #tpu.memory_space<vmem>>, vector<1x64x256xbf16>
    %47 = vector.shape_cast %46 : vector<1x64x256xbf16> to vector<64x256xbf16>
    %cst_45 = arith.constant dense<0.000000e+00> : vector<16x256xf32>
    %48 = tpu.matmul %3, %47, %cst_45 {dimension_numbers = #tpu.dot_dimension_numbers<[1], [0], [0], [1], [0, 0, 1, 1], [], []>} : vector<16x64xbf16>, vector<64x256xbf16>, vector<16x256xf32> -> vector<16x256xf32>
    %c7_46 = arith.constant 7 : index
    %c0_47 = arith.constant 0 : index
    %c0_48 = arith.constant 0 : index
    %49 = vector.load %arg8[%c7_46, %c0_47, %c0_48] : memref<9x16x256xf32, #tpu.memory_space<vmem>>, vector<1x16x256xf32>
    %50 = vector.shape_cast %49 : vector<1x16x256xf32> to vector<16x256xf32>
    %51 = vector.shape_cast %48 : vector<16x256xf32> to vector<1x16x256xf32>
    tpu.vector_store %arg8[%c7_46, %c0_47, %c0_48], %51 {strides = array<i32>} : memref<9x16x256xf32, #tpu.memory_space<vmem>>, vector<1x16x256xf32>,
    %c8 = arith.constant 8 : index
    %c0_49 = arith.constant 0 : index
    %c0_50 = arith.constant 0 : index
    %52 = vector.load %arg3[%c8, %c0_49, %c0_50] : memref<9x64x256xbf16, #tpu.memory_space<vmem>>, vector<1x64x256xbf16>
    %53 = vector.shape_cast %52 : vector<1x64x256xbf16> to vector<64x256xbf16>
    %cst_51 = arith.constant dense<0.000000e+00> : vector<16x256xf32>
    %54 = tpu.matmul %3, %53, %cst_51 {dimension_numbers = #tpu.dot_dimension_numbers<[1], [0], [0], [1], [0, 0, 1, 1], [], []>} : vector<16x64xbf16>, vector<64x256xbf16>, vector<16x256xf32> -> vector<16x256xf32>
    %c8_52 = arith.constant 8 : index
    %c0_53 = arith.constant 0 : index
    %c0_54 = arith.constant 0 : index
    %55 = vector.load %arg8[%c8_52, %c0_53, %c0_54] : memref<9x16x256xf32, #tpu.memory_space<vmem>>, vector<1x16x256xf32>
    %56 = vector.shape_cast %55 : vector<1x16x256xf32> to vector<16x256xf32>
    %57 = vector.shape_cast %54 : vector<16x256xf32> to vector<1x16x256xf32>
    tpu.vector_store %arg8[%c8_52, %c0_53, %c0_54], %57 {strides = array<i32>} : memref<9x16x256xf32, #tpu.memory_space<vmem>>, vector<1x16x256xf32>,
    %cst_55 = arith.constant 0.000000e+00 : f32
    %58 = vector.broadcast %cst_55 : f32 to vector<8x1xf32>
    %cst_56 = arith.constant 0.000000e+00 : f32
    %59 = vector.broadcast %cst_56 : f32 to vector<8x1xf32>
    %cst_57 = arith.constant 0.000000e+00 : f32
    %60 = vector.broadcast %cst_57 : f32 to vector<8x256xf32>
    %c0_58 = arith.constant 0 : index
    %c0_59 = arith.constant 0 : index
    %c0_60 = arith.constant 0 : index
    %61 = vector.load %arg8[%c0_58, %c0_59, %c0_60] : memref<9x16x256xf32, #tpu.memory_space<vmem>>, vector<1x12x256xf32>
    %62 = vector.shape_cast %61 : vector<1x12x256xf32> to vector<12x256xf32>
    %c0_61 = arith.constant 0 : index
    %c0_62 = arith.constant 0 : index
    %c0_63 = arith.constant 0 : index
    %63 = vector.load %arg4[%c0_61, %c0_62, %c0_63] : memref<9x8x12xf32, #tpu.memory_space<vmem>>, vector<1x8x12xf32>
    %64 = vector.shape_cast %63 : vector<1x8x12xf32> to vector<8x12xf32>
    %cst_64 = arith.constant dense<0.000000e+00> : vector<8x256xf32>
    %65 = tpu.matmul %64, %62, %cst_64 {dimension_numbers = #tpu.dot_dimension_numbers<[1], [0], [0], [1], [0, 0, 1, 1], [], []>} : vector<8x12xf32>, vector<12x256xf32>, vector<8x256xf32> -> vector<8x256xf32>
    %66 = arith.addf %60, %65 : vector<8x256xf32>
    %c1_65 = arith.constant 1 : index
    %c0_66 = arith.constant 0 : index
    %c0_67 = arith.constant 0 : index
    %67 = vector.load %arg8[%c1_65, %c0_66, %c0_67] : memref<9x16x256xf32, #tpu.memory_space<vmem>>, vector<1x12x256xf32>
    %68 = vector.shape_cast %67 : vector<1x12x256xf32> to vector<12x256xf32>
    %c1_68 = arith.constant 1 : index
    %c0_69 = arith.constant 0 : index
    %c0_70 = arith.constant 0 : index
    %69 = vector.load %arg4[%c1_68, %c0_69, %c0_70] : memref<9x8x12xf32, #tpu.memory_space<vmem>>, vector<1x8x12xf32>
    %70 = vector.shape_cast %69 : vector<1x8x12xf32> to vector<8x12xf32>
    %cst_71 = arith.constant dense<0.000000e+00> : vector<8x256xf32>
    %71 = tpu.matmul %70, %68, %cst_71 {dimension_numbers = #tpu.dot_dimension_numbers<[1], [0], [0], [1], [0, 0, 1, 1], [], []>} : vector<8x12xf32>, vector<12x256xf32>, vector<8x256xf32> -> vector<8x256xf32>
    %72 = arith.addf %66, %71 : vector<8x256xf32>
    %c2_72 = arith.constant 2 : index
    %c0_73 = arith.constant 0 : index
    %c0_74 = arith.constant 0 : index
    %73 = vector.load %arg8[%c2_72, %c0_73, %c0_74] : memref<9x16x256xf32, #tpu.memory_space<vmem>>, vector<1x12x256xf32>
    %74 = vector.shape_cast %73 : vector<1x12x256xf32> to vector<12x256xf32>
    %c2_75 = arith.constant 2 : index
    %c0_76 = arith.constant 0 : index
    %c0_77 = arith.constant 0 : index
    %75 = vector.load %arg4[%c2_75, %c0_76, %c0_77] : memref<9x8x12xf32, #tpu.memory_space<vmem>>, vector<1x8x12xf32>
    %76 = vector.shape_cast %75 : vector<1x8x12xf32> to vector<8x12xf32>
    %cst_78 = arith.constant dense<0.000000e+00> : vector<8x256xf32>
    %77 = tpu.matmul %76, %74, %cst_78 {dimension_numbers = #tpu.dot_dimension_numbers<[1], [0], [0], [1], [0, 0, 1, 1], [], []>} : vector<8x12xf32>, vector<12x256xf32>, vector<8x256xf32> -> vector<8x256xf32>
    %78 = arith.addf %72, %77 : vector<8x256xf32>
    %c3_79 = arith.constant 3 : index
    %c0_80 = arith.constant 0 : index
    %c0_81 = arith.constant 0 : index
    %79 = vector.load %arg8[%c3_79, %c0_80, %c0_81] : memref<9x16x256xf32, #tpu.memory_space<vmem>>, vector<1x12x256xf32>
    %80 = vector.shape_cast %79 : vector<1x12x256xf32> to vector<12x256xf32>
    %c3_82 = arith.constant 3 : index
    %c0_83 = arith.constant 0 : index
    %c0_84 = arith.constant 0 : index
    %81 = vector.load %arg4[%c3_82, %c0_83, %c0_84] : memref<9x8x12xf32, #tpu.memory_space<vmem>>, vector<1x8x12xf32>
    %82 = vector.shape_cast %81 : vector<1x8x12xf32> to vector<8x12xf32>
    %cst_85 = arith.constant dense<0.000000e+00> : vector<8x256xf32>
    %83 = tpu.matmul %82, %80, %cst_85 {dimension_numbers = #tpu.dot_dimension_numbers<[1], [0], [0], [1], [0, 0, 1, 1], [], []>} : vector<8x12xf32>, vector<12x256xf32>, vector<8x256xf32> -> vector<8x256xf32>
    %84 = arith.addf %78, %83 : vector<8x256xf32>
    %c4_86 = arith.constant 4 : index
    %c0_87 = arith.constant 0 : index
    %c0_88 = arith.constant 0 : index
    %85 = vector.load %arg8[%c4_86, %c0_87, %c0_88] : memref<9x16x256xf32, #tpu.memory_space<vmem>>, vector<1x12x256xf32>
    %86 = vector.shape_cast %85 : vector<1x12x256xf32> to vector<12x256xf32>
    %c4_89 = arith.constant 4 : index
    %c0_90 = arith.constant 0 : index
    %c0_91 = arith.constant 0 : index
    %87 = vector.load %arg4[%c4_89, %c0_90, %c0_91] : memref<9x8x12xf32, #tpu.memory_space<vmem>>, vector<1x8x12xf32>
    %88 = vector.shape_cast %87 : vector<1x8x12xf32> to vector<8x12xf32>
    %cst_92 = arith.constant dense<0.000000e+00> : vector<8x256xf32>
    %89 = tpu.matmul %88, %86, %cst_92 {dimension_numbers = #tpu.dot_dimension_numbers<[1], [0], [0], [1], [0, 0, 1, 1], [], []>} : vector<8x12xf32>, vector<12x256xf32>, vector<8x256xf32> -> vector<8x256xf32>
    %90 = arith.addf %84, %89 : vector<8x256xf32>
    %c5_93 = arith.constant 5 : index
    %c0_94 = arith.constant 0 : index
    %c0_95 = arith.constant 0 : index
    %91 = vector.load %arg8[%c5_93, %c0_94, %c0_95] : memref<9x16x256xf32, #tpu.memory_space<vmem>>, vector<1x12x256xf32>
    %92 = vector.shape_cast %91 : vector<1x12x256xf32> to vector<12x256xf32>
    %c5_96 = arith.constant 5 : index
    %c0_97 = arith.constant 0 : index
    %c0_98 = arith.constant 0 : index
    %93 = vector.load %arg4[%c5_96, %c0_97, %c0_98] : memref<9x8x12xf32, #tpu.memory_space<vmem>>, vector<1x8x12xf32>
    %94 = vector.shape_cast %93 : vector<1x8x12xf32> to vector<8x12xf32>
    %cst_99 = arith.constant dense<0.000000e+00> : vector<8x256xf32>
    %95 = tpu.matmul %94, %92, %cst_99 {dimension_numbers = #tpu.dot_dimension_numbers<[1], [0], [0], [1], [0, 0, 1, 1], [], []>} : vector<8x12xf32>, vector<12x256xf32>, vector<8x256xf32> -> vector<8x256xf32>
    %96 = arith.addf %90, %95 : vector<8x256xf32>
    %c6_100 = arith.constant 6 : index
    %c0_101 = arith.constant 0 : index
    %c0_102 = arith.constant 0 : index
    %97 = vector.load %arg8[%c6_100, %c0_101, %c0_102] : memref<9x16x256xf32, #tpu.memory_space<vmem>>, vector<1x12x256xf32>
    %98 = vector.shape_cast %97 : vector<1x12x256xf32> to vector<12x256xf32>
    %c6_103 = arith.constant 6 : index
    %c0_104 = arith.constant 0 : index
    %c0_105 = arith.constant 0 : index
    %99 = vector.load %arg4[%c6_103, %c0_104, %c0_105] : memref<9x8x12xf32, #tpu.memory_space<vmem>>, vector<1x8x12xf32>
    %100 = vector.shape_cast %99 : vector<1x8x12xf32> to vector<8x12xf32>
    %cst_106 = arith.constant dense<0.000000e+00> : vector<8x256xf32>
    %101 = tpu.matmul %100, %98, %cst_106 {dimension_numbers = #tpu.dot_dimension_numbers<[1], [0], [0], [1], [0, 0, 1, 1], [], []>} : vector<8x12xf32>, vector<12x256xf32>, vector<8x256xf32> -> vector<8x256xf32>
    %102 = arith.addf %96, %101 : vector<8x256xf32>
    %c7_107 = arith.constant 7 : index
    %c0_108 = arith.constant 0 : index
    %c0_109 = arith.constant 0 : index
    %103 = vector.load %arg8[%c7_107, %c0_108, %c0_109] : memref<9x16x256xf32, #tpu.memory_space<vmem>>, vector<1x12x256xf32>
    %104 = vector.shape_cast %103 : vector<1x12x256xf32> to vector<12x256xf32>
    %c7_110 = arith.constant 7 : index
    %c0_111 = arith.constant 0 : index
    %c0_112 = arith.constant 0 : index
    %105 = vector.load %arg4[%c7_110, %c0_111, %c0_112] : memref<9x8x12xf32, #tpu.memory_space<vmem>>, vector<1x8x12xf32>
    %106 = vector.shape_cast %105 : vector<1x8x12xf32> to vector<8x12xf32>
    %cst_113 = arith.constant dense<0.000000e+00> : vector<8x256xf32>
    %107 = tpu.matmul %106, %104, %cst_113 {dimension_numbers = #tpu.dot_dimension_numbers<[1], [0], [0], [1], [0, 0, 1, 1], [], []>} : vector<8x12xf32>, vector<12x256xf32>, vector<8x256xf32> -> vector<8x256xf32>
    %108 = arith.addf %102, %107 : vector<8x256xf32>
    %c8_114 = arith.constant 8 : index
    %c0_115 = arith.constant 0 : index
    %c0_116 = arith.constant 0 : index
    %109 = vector.load %arg8[%c8_114, %c0_115, %c0_116] : memref<9x16x256xf32, #tpu.memory_space<vmem>>, vector<1x12x256xf32>
    %110 = vector.shape_cast %109 : vector<1x12x256xf32> to vector<12x256xf32>
    %c8_117 = arith.constant 8 : index
    %c0_118 = arith.constant 0 : index
    %c0_119 = arith.constant 0 : index
    %111 = vector.load %arg4[%c8_117, %c0_118, %c0_119] : memref<9x8x12xf32, #tpu.memory_space<vmem>>, vector<1x8x12xf32>
    %112 = vector.shape_cast %111 : vector<1x8x12xf32> to vector<8x12xf32>
    %cst_120 = arith.constant dense<0.000000e+00> : vector<8x256xf32>
    %113 = tpu.matmul %112, %110, %cst_120 {dimension_numbers = #tpu.dot_dimension_numbers<[1], [0], [0], [1], [0, 0, 1, 1], [], []>} : vector<8x12xf32>, vector<12x256xf32>, vector<8x256xf32> -> vector<8x256xf32>
    %114 = arith.addf %108, %113 : vector<8x256xf32>
    %115 = arith.truncf %114 : vector<8x256xf32> to vector<8x256xbf16>
    %c0_121 = arith.constant 0 : index
    %c0_122 = arith.constant 0 : index
    %c0_123 = arith.constant 0 : index
    %c0_124 = arith.constant 0 : index
    %116 = vector.load %arg5[%c0_121, %c0_122, %c0_123, %c0_124] : memref<1x2x8x256xbf16, #tpu.memory_space<vmem>>, vector<1x1x8x256xbf16>
    %117 = vector.shape_cast %116 : vector<1x1x8x256xbf16> to vector<8x256xbf16>
    %118 = vector.shape_cast %115 : vector<8x256xbf16> to vector<1x1x8x256xbf16>
    tpu.vector_store %arg5[%c0_121, %c0_122, %c0_123, %c0_124], %118 {strides = array<i32>} : memref<1x2x8x256xbf16, #tpu.memory_space<vmem>>, vector<1x1x8x256xbf16>,
    %cst_125 = arith.constant dense<0.000000e+00> : vector<8xf32>
    %119 = vector.multi_reduction <add>, %114, %cst_125 [1] : vector<8x256xf32> to vector<8xf32>
    %120 = vector.shape_cast %119 : vector<8xf32> to vector<8x1xf32>
    %121 = arith.addf %58, %120 : vector<8x1xf32>
    %122 = arith.mulf %114, %114 : vector<8x256xf32>
    %cst_126 = arith.constant dense<0.000000e+00> : vector<8xf32>
    %123 = vector.multi_reduction <add>, %122, %cst_126 [1] : vector<8x256xf32> to vector<8xf32>
    %124 = vector.shape_cast %123 : vector<8xf32> to vector<8x1xf32>
    %125 = arith.addf %59, %124 : vector<8x1xf32>
    %cst_127 = arith.constant 0.000000e+00 : f32
    %126 = vector.broadcast %cst_127 : f32 to vector<8x256xf32>
    %c0_128 = arith.constant 0 : index
    %c4_129 = arith.constant 4 : index
    %c0_130 = arith.constant 0 : index
    %127 = vector.load %arg8[%c0_128, %c4_129, %c0_130] : memref<9x16x256xf32, #tpu.memory_space<vmem>>, vector<1x12x256xf32>
    %128 = vector.shape_cast %127 : vector<1x12x256xf32> to vector<12x256xf32>
    %c0_131 = arith.constant 0 : index
    %c0_132 = arith.constant 0 : index
    %c0_133 = arith.constant 0 : index
    %129 = vector.load %arg4[%c0_131, %c0_132, %c0_133] : memref<9x8x12xf32, #tpu.memory_space<vmem>>, vector<1x8x12xf32>
    %130 = vector.shape_cast %129 : vector<1x8x12xf32> to vector<8x12xf32>
    %cst_134 = arith.constant dense<0.000000e+00> : vector<8x256xf32>
    %131 = tpu.matmul %130, %128, %cst_134 {dimension_numbers = #tpu.dot_dimension_numbers<[1], [0], [0], [1], [0, 0, 1, 1], [], []>} : vector<8x12xf32>, vector<12x256xf32>, vector<8x256xf32> -> vector<8x256xf32>
    %132 = arith.addf %126, %131 : vector<8x256xf32>
    %c1_135 = arith.constant 1 : index
    %c4_136 = arith.constant 4 : index
    %c0_137 = arith.constant 0 : index
    %133 = vector.load %arg8[%c1_135, %c4_136, %c0_137] : memref<9x16x256xf32, #tpu.memory_space<vmem>>, vector<1x12x256xf32>
    %134 = vector.shape_cast %133 : vector<1x12x256xf32> to vector<12x256xf32>
    %c1_138 = arith.constant 1 : index
    %c0_139 = arith.constant 0 : index
    %c0_140 = arith.constant 0 : index
    %135 = vector.load %arg4[%c1_138, %c0_139, %c0_140] : memref<9x8x12xf32, #tpu.memory_space<vmem>>, vector<1x8x12xf32>
    %136 = vector.shape_cast %135 : vector<1x8x12xf32> to vector<8x12xf32>
    %cst_141 = arith.constant dense<0.000000e+00> : vector<8x256xf32>
    %137 = tpu.matmul %136, %134, %cst_141 {dimension_numbers = #tpu.dot_dimension_numbers<[1], [0], [0], [1], [0, 0, 1, 1], [], []>} : vector<8x12xf32>, vector<12x256xf32>, vector<8x256xf32> -> vector<8x256xf32>
    %138 = arith.addf %132, %137 : vector<8x256xf32>
    %c2_142 = arith.constant 2 : index
    %c4_143 = arith.constant 4 : index
    %c0_144 = arith.constant 0 : index
    %139 = vector.load %arg8[%c2_142, %c4_143, %c0_144] : memref<9x16x256xf32, #tpu.memory_space<vmem>>, vector<1x12x256xf32>
    %140 = vector.shape_cast %139 : vector<1x12x256xf32> to vector<12x256xf32>
    %c2_145 = arith.constant 2 : index
    %c0_146 = arith.constant 0 : index
    %c0_147 = arith.constant 0 : index
    %141 = vector.load %arg4[%c2_145, %c0_146, %c0_147] : memref<9x8x12xf32, #tpu.memory_space<vmem>>, vector<1x8x12xf32>
    %142 = vector.shape_cast %141 : vector<1x8x12xf32> to vector<8x12xf32>
    %cst_148 = arith.constant dense<0.000000e+00> : vector<8x256xf32>
    %143 = tpu.matmul %142, %140, %cst_148 {dimension_numbers = #tpu.dot_dimension_numbers<[1], [0], [0], [1], [0, 0, 1, 1], [], []>} : vector<8x12xf32>, vector<12x256xf32>, vector<8x256xf32> -> vector<8x256xf32>
    %144 = arith.addf %138, %143 : vector<8x256xf32>
    %c3_149 = arith.constant 3 : index
    %c4_150 = arith.constant 4 : index
    %c0_151 = arith.constant 0 : index
    %145 = vector.load %arg8[%c3_149, %c4_150, %c0_151] : memref<9x16x256xf32, #tpu.memory_space<vmem>>, vector<1x12x256xf32>
    %146 = vector.shape_cast %145 : vector<1x12x256xf32> to vector<12x256xf32>
    %c3_152 = arith.constant 3 : index
    %c0_153 = arith.constant 0 : index
    %c0_154 = arith.constant 0 : index
    %147 = vector.load %arg4[%c3_152, %c0_153, %c0_154] : memref<9x8x12xf32, #tpu.memory_space<vmem>>, vector<1x8x12xf32>
    %148 = vector.shape_cast %147 : vector<1x8x12xf32> to vector<8x12xf32>
    %cst_155 = arith.constant dense<0.000000e+00> : vector<8x256xf32>
    %149 = tpu.matmul %148, %146, %cst_155 {dimension_numbers = #tpu.dot_dimension_numbers<[1], [0], [0], [1], [0, 0, 1, 1], [], []>} : vector<8x12xf32>, vector<12x256xf32>, vector<8x256xf32> -> vector<8x256xf32>
    %150 = arith.addf %144, %149 : vector<8x256xf32>
    %c4_156 = arith.constant 4 : index
    %c4_157 = arith.constant 4 : index
    %c0_158 = arith.constant 0 : index
    %151 = vector.load %arg8[%c4_156, %c4_157, %c0_158] : memref<9x16x256xf32, #tpu.memory_space<vmem>>, vector<1x12x256xf32>
    %152 = vector.shape_cast %151 : vector<1x12x256xf32> to vector<12x256xf32>
    %c4_159 = arith.constant 4 : index
    %c0_160 = arith.constant 0 : index
    %c0_161 = arith.constant 0 : index
    %153 = vector.load %arg4[%c4_159, %c0_160, %c0_161] : memref<9x8x12xf32, #tpu.memory_space<vmem>>, vector<1x8x12xf32>
    %154 = vector.shape_cast %153 : vector<1x8x12xf32> to vector<8x12xf32>
    %cst_162 = arith.constant dense<0.000000e+00> : vector<8x256xf32>
    %155 = tpu.matmul %154, %152, %cst_162 {dimension_numbers = #tpu.dot_dimension_numbers<[1], [0], [0], [1], [0, 0, 1, 1], [], []>} : vector<8x12xf32>, vector<12x256xf32>, vector<8x256xf32> -> vector<8x256xf32>
    %156 = arith.addf %150, %155 : vector<8x256xf32>
    %c5_163 = arith.constant 5 : index
    %c4_164 = arith.constant 4 : index
    %c0_165 = arith.constant 0 : index
    %157 = vector.load %arg8[%c5_163, %c4_164, %c0_165] : memref<9x16x256xf32, #tpu.memory_space<vmem>>, vector<1x12x256xf32>
    %158 = vector.shape_cast %157 : vector<1x12x256xf32> to vector<12x256xf32>
    %c5_166 = arith.constant 5 : index
    %c0_167 = arith.constant 0 : index
    %c0_168 = arith.constant 0 : index
    %159 = vector.load %arg4[%c5_166, %c0_167, %c0_168] : memref<9x8x12xf32, #tpu.memory_space<vmem>>, vector<1x8x12xf32>
    %160 = vector.shape_cast %159 : vector<1x8x12xf32> to vector<8x12xf32>
    %cst_169 = arith.constant dense<0.000000e+00> : vector<8x256xf32>
    %161 = tpu.matmul %160, %158, %cst_169 {dimension_numbers = #tpu.dot_dimension_numbers<[1], [0], [0], [1], [0, 0, 1, 1], [], []>} : vector<8x12xf32>, vector<12x256xf32>, vector<8x256xf32> -> vector<8x256xf32>
    %162 = arith.addf %156, %161 : vector<8x256xf32>
    %c6_170 = arith.constant 6 : index
    %c4_171 = arith.constant 4 : index
    %c0_172 = arith.constant 0 : index
    %163 = vector.load %arg8[%c6_170, %c4_171, %c0_172] : memref<9x16x256xf32, #tpu.memory_space<vmem>>, vector<1x12x256xf32>
    %164 = vector.shape_cast %163 : vector<1x12x256xf32> to vector<12x256xf32>
    %c6_173 = arith.constant 6 : index
    %c0_174 = arith.constant 0 : index
    %c0_175 = arith.constant 0 : index
    %165 = vector.load %arg4[%c6_173, %c0_174, %c0_175] : memref<9x8x12xf32, #tpu.memory_space<vmem>>, vector<1x8x12xf32>
    %166 = vector.shape_cast %165 : vector<1x8x12xf32> to vector<8x12xf32>
    %cst_176 = arith.constant dense<0.000000e+00> : vector<8x256xf32>
    %167 = tpu.matmul %166, %164, %cst_176 {dimension_numbers = #tpu.dot_dimension_numbers<[1], [0], [0], [1], [0, 0, 1, 1], [], []>} : vector<8x12xf32>, vector<12x256xf32>, vector<8x256xf32> -> vector<8x256xf32>
    %168 = arith.addf %162, %167 : vector<8x256xf32>
    %c7_177 = arith.constant 7 : index
    %c4_178 = arith.constant 4 : index
    %c0_179 = arith.constant 0 : index
    %169 = vector.load %arg8[%c7_177, %c4_178, %c0_179] : memref<9x16x256xf32, #tpu.memory_space<vmem>>, vector<1x12x256xf32>
    %170 = vector.shape_cast %169 : vector<1x12x256xf32> to vector<12x256xf32>
    %c7_180 = arith.constant 7 : index
    %c0_181 = arith.constant 0 : index
    %c0_182 = arith.constant 0 : index
    %171 = vector.load %arg4[%c7_180, %c0_181, %c0_182] : memref<9x8x12xf32, #tpu.memory_space<vmem>>, vector<1x8x12xf32>
    %172 = vector.shape_cast %171 : vector<1x8x12xf32> to vector<8x12xf32>
    %cst_183 = arith.constant dense<0.000000e+00> : vector<8x256xf32>
    %173 = tpu.matmul %172, %170, %cst_183 {dimension_numbers = #tpu.dot_dimension_numbers<[1], [0], [0], [1], [0, 0, 1, 1], [], []>} : vector<8x12xf32>, vector<12x256xf32>, vector<8x256xf32> -> vector<8x256xf32>
    %174 = arith.addf %168, %173 : vector<8x256xf32>
    %c8_184 = arith.constant 8 : index
    %c4_185 = arith.constant 4 : index
    %c0_186 = arith.constant 0 : index
    %175 = vector.load %arg8[%c8_184, %c4_185, %c0_186] : memref<9x16x256xf32, #tpu.memory_space<vmem>>, vector<1x12x256xf32>
    %176 = vector.shape_cast %175 : vector<1x12x256xf32> to vector<12x256xf32>
    %c8_187 = arith.constant 8 : index
    %c0_188 = arith.constant 0 : index
    %c0_189 = arith.constant 0 : index
    %177 = vector.load %arg4[%c8_187, %c0_188, %c0_189] : memref<9x8x12xf32, #tpu.memory_space<vmem>>, vector<1x8x12xf32>
    %178 = vector.shape_cast %177 : vector<1x8x12xf32> to vector<8x12xf32>
    %cst_190 = arith.constant dense<0.000000e+00> : vector<8x256xf32>
    %179 = tpu.matmul %178, %176, %cst_190 {dimension_numbers = #tpu.dot_dimension_numbers<[1], [0], [0], [1], [0, 0, 1, 1], [], []>} : vector<8x12xf32>, vector<12x256xf32>, vector<8x256xf32> -> vector<8x256xf32>
    %180 = arith.addf %174, %179 : vector<8x256xf32>
    %181 = arith.truncf %180 : vector<8x256xf32> to vector<8x256xbf16>
    %c0_191 = arith.constant 0 : index
    %c1_192 = arith.constant 1 : index
    %c0_193 = arith.constant 0 : index
    %c0_194 = arith.constant 0 : index
    %182 = vector.load %arg5[%c0_191, %c1_192, %c0_193, %c0_194] : memref<1x2x8x256xbf16, #tpu.memory_space<vmem>>, vector<1x1x8x256xbf16>
    %183 = vector.shape_cast %182 : vector<1x1x8x256xbf16> to vector<8x256xbf16>
    %184 = vector.shape_cast %181 : vector<8x256xbf16> to vector<1x1x8x256xbf16>
    tpu.vector_store %arg5[%c0_191, %c1_192, %c0_193, %c0_194], %184 {strides = array<i32>} : memref<1x2x8x256xbf16, #tpu.memory_space<vmem>>, vector<1x1x8x256xbf16>,
    %cst_195 = arith.constant dense<0.000000e+00> : vector<8xf32>
    %185 = vector.multi_reduction <add>, %180, %cst_195 [1] : vector<8x256xf32> to vector<8xf32>
    %186 = vector.shape_cast %185 : vector<8xf32> to vector<8x1xf32>
    %187 = arith.addf %121, %186 : vector<8x1xf32>
    %188 = arith.mulf %180, %180 : vector<8x256xf32>
    %cst_196 = arith.constant dense<0.000000e+00> : vector<8xf32>
    %189 = vector.multi_reduction <add>, %188, %cst_196 [1] : vector<8x256xf32> to vector<8xf32>
    %190 = vector.shape_cast %189 : vector<8xf32> to vector<8x1xf32>
    %191 = arith.addf %125, %190 : vector<8x1xf32>
    %192 = tpu.concatenate %187, %191 in 1 : vector<8x1xf32>, vector<8x1xf32> -> vector<8x2xf32>
    %c0_197 = arith.constant 0 : index
    %c0_198 = arith.constant 0 : index
    %c0_199 = arith.constant 0 : index
    %c0_200 = arith.constant 0 : index
    %193 = vector.load %arg6[%c0_197, %c0_198, %c0_199, %c0_200] : memref<1x1x8x2xf32, #tpu.memory_space<vmem>>, vector<1x1x8x2xf32>
    %194 = vector.shape_cast %193 : vector<1x1x8x2xf32> to vector<8x2xf32>
    %195 = vector.shape_cast %192 : vector<8x2xf32> to vector<1x1x8x2xf32>
    tpu.vector_store %arg6[%c0_197, %c0_198, %c0_199, %c0_200], %195 {strides = array<i32>} : memref<1x1x8x2xf32, #tpu.memory_space<vmem>>, vector<1x1x8x2xf32>,
    return
  }
  func.func @transform_1(%arg0: i32, %arg1: i32) -> (i32, i32, i32) {
    %c0_i32 = arith.constant 0 : i32
    %c0_i32_0 = arith.constant 0 : i32
    %c0_i32_1 = arith.constant 0 : i32
    %c0_i32_2 = arith.constant 0 : i32
    return %c0_i32, %c0_i32_0, %c0_i32_1 : i32, i32, i32
  }
  func.func @transform_2(%arg0: i32, %arg1: i32) -> (i32, i32, i32) {
    %c0_i32 = arith.constant 0 : i32
    %c0_i32_0 = arith.constant 0 : i32
    %c0_i32_1 = arith.constant 0 : i32
    %c0_i32_2 = arith.constant 0 : i32
    return %c0_i32, %c0_i32_0, %c0_i32_1 : i32, i32, i32
  }
  func.func @transform_3(%arg0: i32, %arg1: i32) -> (i32, i32, i32, i32) {
    %c0_i32 = arith.constant 0 : i32
    %c0_i32_0 = arith.constant 0 : i32
    %c0_i32_1 = arith.constant 0 : i32
    return %arg0, %arg1, %c0_i32, %c0_i32_0 : i32, i32, i32, i32
  }
  func.func @transform_4(%arg0: i32, %arg1: i32) -> (i32, i32, i32, i32) {
    %c0_i32 = arith.constant 0 : i32
    %c0_i32_0 = arith.constant 0 : i32
    %c0_i32_1 = arith.constant 0 : i32
    return %arg0, %arg1, %c0_i32, %c0_i32_0 : i32, i32, i32, i32
  }
}

</mosaic_0001>

<llo_original>
// kernel: tpu_custom_call.1
$region0: #{tpu_custom_call.1}
  #allocation0 [shape = 'u32[]', space=smem, size = 0x4, offset = 0x4, fixed_abs, tag = 'smem constant byte address 0x4 - core index']
  #allocation1 [shape = 'u32[144,128]{1,0:T(1,128)}', space=vmem, size = 0x12000, scoped, tag = 'internal scratch']
  #allocation2 [shape = 'bf16[16,64]{1,0:T(8,128)(2,1)}', space=vmem, size = 0x1000, scoped, tag = 'scratch operand']
  #allocation3 [shape = 'f32[9,16,256]{2,1,0:T(8,128)}', space=vmem, size = 0x24000, scoped, tag = 'scratch operand']
  #allocation11 [shape = 's32[]', space=sflag, size = 0x4, offset = 0, fixed_abs, tag = 'sflag constant byte address 0x0 - dummy sync flag']
  #allocation12 [shape = 's32[]', space=sflag, size = 0x4, offset = 0, fixed_abs, tag = 'sflag constant byte address 0x0 - dummy sync flag']
  #allocation13 [shape = 'u32[]', space=smem, size = 0x4, offset = 0x44, fixed_abs, tag = 'smem constant byte address 0x44 - assertion arg 0']
  #allocation14 [shape = 'u32[]', space=smem, size = 0x4, offset = 0x48, fixed_abs, tag = 'smem constant byte address 0x48 - assertion arg 1']
  %s0 = inlined_call_operand.hbm [shape: bf16[48,64], index: 0, kind: input, shape index: {}]
  %s1 = inlined_call_operand.hbm [shape: bf16[9,64,256], index: 1, kind: input, shape index: {}]
  %s2 = inlined_call_operand.hbm [shape: f32[9,8,12], index: 2, kind: input, shape index: {}]
  %s3 = inlined_call_operand.hbm [shape: bf16[2,4,8,256], index: 3, kind: output, shape index: {0}]
  %s4 = inlined_call_operand.vmem [shape: f32[2,2,8,2], index: 4, kind: output, shape index: {1}]
  %5 = xla_tuple %s3, %s4
  %s6 = sld [smem:[#allocation0]]
  $region62: #{tpu_custom_call.1} parent=0
    _
  %s8 = ssub.s32 1, %s6
  %s9 = scalar_select 0, %s8, %s6
  $region1: #{tpu_custom_call.1} parent=0
    #allocation4 [shape = 'u8[294912]{0}', space=vmem, size = 0x48000, scoped, tag = 'input window, operand 1, single buffered']
    #allocation5 [shape = 's32[2]{0}', space=sflag, size = 0x8, scoped, tag = 'scoped memory for tpu_custom_call.1']
    #allocation6 [shape = 's32[2]{0}', space=sflag, size = 0x8, scoped, tag = 'scoped memory for tpu_custom_call.1']
    #allocation7 [shape = 'u8[36864]{0}', space=vmem, size = 0x9000, scoped, tag = 'input window, operand 2, single buffered']
    #allocation8 [shape = 's32[1]{0}', space=sflag, size = 0x4, scoped, tag = 'scoped memory for tpu_custom_call.1']
    #allocation9 [shape = 'u8[16384]{0}', space=vmem, size = 0x4000, scoped, tag = 'output window, operand 0']
    %10 = vsyncpa [#allocation5], 0
    %11 = vsyncpa [#allocation8], 0
    %12 = vsyncpa [#allocation6], 0
    %s13 = scalar_lea.sflag [#allocation6], 1
    %14 = vsyncpa %s13, 0
    loop: start=0, step=1, limit=6
    $region2: #{tpu_custom_call.1} parent=1 // loop_pre_header
      _
    $region3: #{tpu_custom_call.1} parent=1 // loop_header
      %s16 = sphi 0, %s20
      %p17 = scmp.ge.s32.totalorder %s16, 6
      %s23 = sphi 0, %s35
      %s24 = sphi 0, %s31
      %s25 = sphi 0, %s23
      %s26 = sphi 0, %s24
      %s27 = sphi 0, %s25
      %s28 = sphi 0, %s26
      %s36 = sphi 0, %s36
      %s38 = sphi 0, %s36
      %s39 = sphi 0, %s38
      %s53 = sphi 0, %s39
      %s57 = sphi 0, %s57
      %s59 = sphi 0, %s57
      %s60 = sphi 0, %s59
      %s74 = sphi 0, %s60
      %s82 = sphi 0, %s84
      %s85 = sphi 0, %s82
      %s86 = sphi 0, %s85
      %s102 = sphi 0, %s86
      %s110 = sphi 0, %s112
      %s113 = sphi 0, %s110
      %s114 = sphi 0, %s113
      %s130 = sphi 0, %s114
    $region4: #{tpu_custom_call.1} parent=1 // loop_header_branch
      %19 = sbr.rel (%p17) target = $region8
    $region5: #{tpu_custom_call.1} parent=1 // loop_body
      %s21 = ssub.s32 %s16, 1
      %s22 = ssub.s32 %s16, 2
      %s29 = sadd.s32 1, %s24
      %p30 = scmp.ge.s32.totalorder %s29, 2
      %s31 = scalar_select %p30, 0, %s29
      %s32 = sadd.s32 1, %s23
      %s33 = scalar_select %p30, %s32, %s23
      %p34 = scmp.ge.s32.totalorder %s33, 2
      %s35 = scalar_select %p34, 0, %s33
      %s37 = sadd.s32 %s36, 1
      %p40 = scmp.eq.s32.totalorder %s16, 3
      %p41 = scmp.ne.s32.totalorder %s36, %s38
      %p42 = scmp.eq.s32.totalorder %s16, 0
      %p43 = por %p41, %p42
      %p44 = scmp.ne.s32.totalorder %s36, %s38
      %p45 = scmp.eq.s32.totalorder %s21, 3
      %p46 = por %p44, %p45
      %p47 = scmp.ne.s32.totalorder %s38, %s39
      %p48 = scmp.eq.s32.totalorder %s21, 0
      %p49 = por %p47, %p48
      %p50 = scmp.ne.s32.totalorder %s38, %s39
      %p51 = scmp.eq.s32.totalorder %s22, 3
      %p52 = por %p50, %p51
      %p54 = scmp.ne.s32.totalorder %s39, %s53
      %p55 = scmp.eq.s32.totalorder %s22, 0
      %p56 = por %p54, %p55
      %s58 = sadd.s32 %s57, 1
      %p61 = scmp.eq.s32.totalorder %s16, 3
      %p62 = scmp.ne.s32.totalorder %s57, %s59
      %p63 = scmp.eq.s32.totalorder %s16, 0
      %p64 = por %p62, %p63
      %p65 = scmp.ne.s32.totalorder %s57, %s59
      %p66 = scmp.eq.s32.totalorder %s21, 3
      %p67 = por %p65, %p66
      %p68 = scmp.ne.s32.totalorder %s59, %s60
      %p69 = scmp.eq.s32.totalorder %s21, 0
      %p70 = por %p68, %p69
      %p71 = scmp.ne.s32.totalorder %s59, %s60
      %p72 = scmp.eq.s32.totalorder %s22, 3
      %p73 = por %p71, %p72
      %p75 = scmp.ne.s32.totalorder %s60, %s74
      %p76 = scmp.eq.s32.totalorder %s22, 0
      %p77 = por %p75, %p76
      %s78 = ssub.s32 %s23, %s35
      %s79 = ssub.s32 %s24, %s31
      %s80 = sor.u32 %s78, %s79
      %p81 = scmp.eq.s32.totalorder %s80, 0
      %s83 = sadd.s32 %s82, 1
      %s84 = scalar_select %p81, %s82, %s83
      %p87 = pneg %p81
      %p88 = scmp.eq.s32.totalorder %s16, 3
      %p89 = por %p87, %p88
      %p90 = scmp.ne.s32.totalorder %s82, %s85
      %p91 = scmp.eq.s32.totalorder %s16, 0
      %p92 = por %p90, %p91
      %p93 = scmp.ne.s32.totalorder %s82, %s85
      %p94 = scmp.eq.s32.totalorder %s21, 3
      %p95 = por %p93, %p94
      %p96 = scmp.ne.s32.totalorder %s85, %s86
      %p97 = scmp.eq.s32.totalorder %s21, 0
      %p98 = por %p96, %p97
      %p99 = scmp.ne.s32.totalorder %s85, %s86
      %p100 = scmp.eq.s32.totalorder %s22, 3
      %p101 = por %p99, %p100
      %p103 = scmp.ne.s32.totalorder %s86, %s102
      %p104 = scmp.eq.s32.totalorder %s22, 0
      %p105 = por %p103, %p104
      %s106 = ssub.s32 %s23, %s35
      %s107 = ssub.s32 %s24, %s31
      %s108 = sor.u32 %s106, %s107
      %p109 = scmp.eq.s32.totalorder %s108, 0
      %s111 = sadd.s32 %s110, 1
      %s112 = scalar_select %p109, %s110, %s111
      %p115 = pneg %p109
      %p116 = scmp.eq.s32.totalorder %s16, 3
      %p117 = por %p115, %p116
      %p118 = scmp.ne.s32.totalorder %s110, %s113
      %p119 = scmp.eq.s32.totalorder %s16, 0
      %p120 = por %p118, %p119
      %p121 = scmp.ne.s32.totalorder %s110, %s113
      %p122 = scmp.eq.s32.totalorder %s21, 3
      %p123 = por %p121, %p122
      %p124 = scmp.ne.s32.totalorder %s113, %s114
      %p125 = scmp.eq.s32.totalorder %s21, 0
      %p126 = por %p124, %p125
      %p127 = scmp.ne.s32.totalorder %s113, %s114
      %p128 = scmp.eq.s32.totalorder %s22, 3
      %p129 = por %p127, %p128
      %p131 = scmp.ne.s32.totalorder %s114, %s130
      %p132 = scmp.eq.s32.totalorder %s22, 0
      %p133 = por %p131, %p132
      %p134 = scmp.le.s32.totalorder 1, %s16
      %p135 = scmp.lt.s32.totalorder %s16, 5
      %p136 = pnand %p134, %p135
      %p137 = pneg %p136
      // Predicated region
      $region9: #{tpu_custom_call.1} parent=5 // pred_check
        _
      $region10: #{tpu_custom_call.1} parent=5 // pred_check_branch
        %139 = sbr.rel (%p136) target = $region12
      $region11: #{tpu_custom_call.1} parent=5 // pred_region
        %s140 = ssub.s32 %s16, 1
        // Predicated region
        $region13: #{tpu_custom_call.1} parent=11 // pred_check
          %p141 = pneg %p49
        $region14: #{tpu_custom_call.1} parent=11 // pred_check_branch
          %143 = sbr.rel (%p141) target = $region16
        $region15: #{tpu_custom_call.1} parent=11 // pred_region
          %s145 = ssub.s32 9216, 9216
          %146 = vsyncadd [#allocation5], %s145
          %s147 = sshll.u32 [#allocation4], 4
          %s148 = int_to_ptr.vmem [resolvable:$true] %s147
          %153 = dma.hbm_to_vmem [thread:$0]  %s1, 9216, %s148, [#allocation5], 128, 128, 8
        $region16: #{tpu_custom_call.1} parent=11 // pred_fallthru
          _
        // Predicated region
        $region17: #{tpu_custom_call.1} parent=11 // pred_check
          %p154 = pneg %p70
        $region18: #{tpu_custom_call.1} parent=11 // pred_check_branch
          %156 = sbr.rel (%p154) target = $region20
        $region19: #{tpu_custom_call.1} parent=11 // pred_region
          %s158 = ssub.s32 1152, 1152
          %159 = vsyncadd [#allocation8], %s158
          %s160 = sshll.u32 [#allocation7], 4
          %s161 = int_to_ptr.vmem [resolvable:$true] %s160
          %166 = dma.hbm_to_vmem [thread:$0]  %s2, 1152, %s161, [#allocation8], 128, 128, 8
        $region20: #{tpu_custom_call.1} parent=11 // pred_fallthru
          _
      $region12: #{tpu_custom_call.1} parent=5 // pred_fallthru
        _
      %p167 = scmp.lt.s32.totalorder %s16, 4
      // Predicated region
      $region21: #{tpu_custom_call.1} parent=5 // pred_check
        %p168 = pneg %p167
      $region22: #{tpu_custom_call.1} parent=5 // pred_check_branch
        %170 = sbr.rel (%p168) target = $region24
      $region23: #{tpu_custom_call.1} parent=5 // pred_region
        _
      $region24: #{tpu_custom_call.1} parent=5 // pred_fallthru
        _
      %p171 = scmp.le.s32.totalorder 1, %s16
      %p172 = scmp.lt.s32.totalorder %s16, 5
      %p173 = pnand %p171, %p172
      %p174 = pneg %p173
      // Predicated region
      $region25: #{tpu_custom_call.1} parent=5 // pred_check
        _
      $region26: #{tpu_custom_call.1} parent=5 // pred_check_branch
        %176 = sbr.rel (%p173) target = $region28
      $region27: #{tpu_custom_call.1} parent=5 // pred_region
        %s177 = ssub.s32 %s16, 1
        // Predicated region
        $region29: #{tpu_custom_call.1} parent=27 // pred_check
          %p178 = pneg %p49
        $region30: #{tpu_custom_call.1} parent=27 // pred_check_branch
          %180 = sbr.rel (%p178) target = $region32
        $region31: #{tpu_custom_call.1} parent=27 // pred_region
          %181 = dma.done [#allocation5], 9216
        $region32: #{tpu_custom_call.1} parent=27 // pred_fallthru
          _
        // Predicated region
        $region33: #{tpu_custom_call.1} parent=27 // pred_check
          %p182 = pneg %p70
        $region34: #{tpu_custom_call.1} parent=27 // pred_check_branch
          %184 = sbr.rel (%p182) target = $region36
        $region35: #{tpu_custom_call.1} parent=27 // pred_region
          %185 = dma.done [#allocation8], 1152
        $region36: #{tpu_custom_call.1} parent=27 // pred_fallthru
          _
        %p186 = pneg %p49
        %p187 = pneg %p46
        %p188 = pneg %p70
        %p189 = pneg %p67
        %p190 = pneg %p98
        %p191 = pneg %p95
        %s192 = sand.u32 %s85, 1
        %s193 = scalar_lea.sflag [#allocation6], %s192
        %s194 = sand.u32 %s85, 1
        %s195 = smul.addr %s194, 16
        %s196 = scalar_lea.vmem [#allocation9], %s195
        %p197 = pneg %p126
        %p198 = pneg %p123
        %p199 = scmp.lt.s32.totalorder %s25, 1
        %s200 = scalar_select %p199, %s25, 1
        %p201 = scmp.lt.s32.totalorder %s26, 1
        %s202 = scalar_select %p201, %s26, 1
        %s203 = smul.addr %s200, 2
        %s204 = sadd.s32 %s202, %s203
        %s205 = smul.addr %s204, 8
        %s206 = scalar_lea.vmem %s4, %s205
        %s207 = smul.u32 2, %s26
        %p208 = scmp.lt.s32.totalorder %s25, 1
        %s209 = scalar_select %p208, %s25, 1
        %p210 = scmp.lt.s32.totalorder %s26, 1
        %s211 = scalar_select %p210, %s26, 1
        %s212 = smul.addr %s209, 2
        %s213 = sadd.s32 %s211, %s212
        %s214 = smul.addr %s213, 8
        %s215 = scalar_lea.vmem %s4, %s214
        %s217 = smul.u32 %s25, 24
        %s218 = smul.u32 %s26, 8
        %s219 = sadd.s32 %s217, %s218
        $region37: #{tpu_custom_call.1} parent=27
          #allocation10 [shape = 's32[1]{0}', space=sflag, size = 0x4, scoped, tag = 'scoped memory for tpu_custom_call.1']
          %s220 = sshra.s32 %s219, 3
          %s221 = sand.u32 %s219, 7
          %s222 = smul.addr %s220, 64
          %s223 = scalar_lea.hbm %s0, %s222
          // Predicated region
          $region38: #{tpu_custom_call.1} parent=37 // pred_check
            _
          $region39: #{tpu_custom_call.1} parent=37 // pred_check_branch
            %225 = sbr.rel target = $region41
          $region40: #{tpu_custom_call.1} parent=37 // pred_region
            %226 = sst [smem:[#allocation13]] [#allocation12]
            %227 = sst [smem:[#allocation14]] [#allocation11]
          $region41: #{tpu_custom_call.1} parent=37 // pred_fallthru
            _
          %229 = shalt.err (0)
          %s231 = sshll.u32 [#allocation2], 4
          %s232 = int_to_ptr.vmem [resolvable:$true] %s231
          %234 = dma.hbm_to_vmem [thread:$0]  %s223, 128, %s232, [#allocation10]
          %s235 = smul.u32 4, 2
          %s236 = smul.u32 %s235, 1
          %s237 = sshll.u32 %s236, 4
          %238 = dma.done [#allocation10], %s237
        %v239 = vld [vmem:[#allocation2] sm:$0xf]
        %v240 = vld [vmem:[#allocation2 + $0x4] sm:$0xf]
        %v241 = vld [vmem:[#allocation4] sm:$0xff]
        %v242 = vld [vmem:[#allocation4 + $0x8] sm:$0xff]
        %v243 = vld [vmem:[#allocation4 + $0x10] sm:$0xff]
        %v244 = vld [vmem:[#allocation4 + $0x18] sm:$0xff]
        %v245 = vld [vmem:[#allocation4 + $0x20] sm:$0xff]
        %v246 = vld [vmem:[#allocation4 + $0x28] sm:$0xff]
        %v247 = vld [vmem:[#allocation4 + $0x30] sm:$0xff]
        %v248 = vld [vmem:[#allocation4 + $0x38] sm:$0xff]
        %v251 = vunpack.c.l.b16 %v239
        %v252 = vunpack.c.l.b16 %v240
        %v253 = vpack.c.b16 %v252, %v251
        %v262 = vunpack.c.l.b16 %v241
        %v263 = vunpack.c.h.b16 %v241
        %v264 = vunpack.c.l.b16 %v242
        %v265 = vunpack.c.h.b16 %v242
        %v266 = vunpack.c.l.b16 %v243
        %v267 = vunpack.c.h.b16 %v243
        %v268 = vunpack.c.l.b16 %v244
        %v269 = vunpack.c.h.b16 %v244
        %v270 = vunpack.c.l.b16 %v245
        %v271 = vunpack.c.h.b16 %v245
        %v272 = vunpack.c.l.b16 %v246
        %v273 = vunpack.c.h.b16 %v246
        %v274 = vunpack.c.l.b16 %v247
        %v275 = vunpack.c.h.b16 %v247
        %v276 = vunpack.c.l.b16 %v248
        %v277 = vunpack.c.h.b16 %v248
        %v278 = vpack.c.b16 %v264, %v262
        %v279 = vpack.c.b16 %v265, %v263
        %v280 = vpack.c.b16 %v268, %v266
        %v281 = vpack.c.b16 %v269, %v267
        %v282 = vpack.c.b16 %v272, %v270
        %v283 = vpack.c.b16 %v273, %v271
        %v284 = vpack.c.b16 %v276, %v274
        %v285 = vpack.c.b16 %v277, %v275
        %vm294 = vcmask 523264
        %v296 = vsel %vm294, %v253, 0
        %298 = vmatprep.subr.bf16.mxu0 0
        %299 = vmatpush1.bf16.msra.mxu0 0
        %300 = vmatprep.subr.bf16.mxu0 0
        %301 = vmatpush1.bf16.msra.mxu0 0
        %302 = vmatprep.subr.bf16.mxu0 0
        %303 = vmatpush1.bf16.msra.mxu0 0
        %304 = vmatprep.subr.bf16.mxu0 0
        %305 = vmatpush1.bf16.msra.mxu0 0
        %306 = vmatprep.subr.bf16.mxu0 %v285
        %307 = vmatpush1.bf16.msra.mxu0 %v284
        %308 = vmatprep.subr.bf16.mxu0 %v283
        %309 = vmatpush1.bf16.msra.mxu0 %v282
        %310 = vmatprep.subr.bf16.mxu0 %v281
        %311 = vmatpush1.bf16.msra.mxu0 %v280
        %312 = vmatprep.subr.bf16.mxu0 %v279
        %313 = vmatpush1.bf16.msra.mxu0 %v278
        %314 = vmatprep.subr.bf16.mxu0 0
        %315 = vmatpush2.bf16.msra.mxu0 0
        %316 = vmatprep.subr.bf16.mxu0 0
        %317 = vmatpush2.bf16.msra.mxu0 0
        %318 = vmatprep.subr.bf16.mxu0 0
        %319 = vmatpush2.bf16.msra.mxu0 0
        %320 = vmatprep.subr.bf16.mxu0 0
        %321 = vmatpush2.bf16.msra.mxu0 0
        %322 = vmatprep.subr.bf16.mxu0 0
        %323 = vmatpush2.bf16.msra.mxu0 0
        %324 = vmatprep.subr.bf16.mxu0 0
        %325 = vmatpush2.bf16.msra.mxu0 0
        %326 = vmatprep.subr.bf16.mxu0 0
        %327 = vmatpush2.bf16.msra.mxu0 0
        %328 = vmatprep.subr.bf16.mxu0 0
        %329 = vmatpush2.bf16.msra.mxu0 0
        %330 = vmatprep.mubr.bf16.mxu0 0
        %331 = vmatmul.mubr.bf16.gmra.mxu0 %v296
        %v332 = vpop.f32.mrf.mxu0
        %v333 = vadd.f32 0.0, %v332
        %v334 = vpop.f32.mrf.mxu0
        %v335 = vadd.f32 0.0, %v334
        %v336 = vpop.f32.mrf.mxu0
        %v337 = vadd.f32 0.0, %v336
        %v338 = vpop.f32.mrf.mxu0
        %v339 = vadd.f32 0.0, %v338
        %340 = vdwg.mxu0
        %341 = vst [vmem:[#allocation3] sm:$0xff] %v333
        %342 = vst [vmem:[#allocation3 + $0x8] sm:$0xff] %v335
        %343 = vst [vmem:[#allocation3 + $0x10] sm:$0xff] %v337
        %344 = vst [vmem:[#allocation3 + $0x18] sm:$0xff] %v339
        %s345 = scalar_lea.vmem [#allocation4], 64
        %v346 = vld [vmem:[%s345] sm:$0xff]
        %v347 = vld [vmem:[%s345 + $0x8] sm:$0xff]
        %v348 = vld [vmem:[%s345 + $0x10] sm:$0xff]
        %v349 = vld [vmem:[%s345 + $0x18] sm:$0xff]
        %v350 = vld [vmem:[%s345 + $0x20] sm:$0xff]
        %v351 = vld [vmem:[%s345 + $0x28] sm:$0xff]
        %v352 = vld [vmem:[%s345 + $0x30] sm:$0xff]
        %v353 = vld [vmem:[%s345 + $0x38] sm:$0xff]
        %v362 = vunpack.c.l.b16 %v346
        %v363 = vunpack.c.h.b16 %v346
        %v364 = vunpack.c.l.b16 %v347
        %v365 = vunpack.c.h.b16 %v347
        %v366 = vunpack.c.l.b16 %v348
        %v367 = vunpack.c.h.b16 %v348
        %v368 = vunpack.c.l.b16 %v349
        %v369 = vunpack.c.h.b16 %v349
        %v370 = vunpack.c.l.b16 %v350
        %v371 = vunpack.c.h.b16 %v350
        %v372 = vunpack.c.l.b16 %v351
        %v373 = vunpack.c.h.b16 %v351
        %v374 = vunpack.c.l.b16 %v352
        %v375 = vunpack.c.h.b16 %v352
        %v376 = vunpack.c.l.b16 %v353
        %v377 = vunpack.c.h.b16 %v353
        %v378 = vpack.c.b16 %v364, %v362
        %v379 = vpack.c.b16 %v365, %v363
        %v380 = vpack.c.b16 %v368, %v366
        %v381 = vpack.c.b16 %v369, %v367
        %v382 = vpack.c.b16 %v372, %v370
        %v383 = vpack.c.b16 %v373, %v371
        %v384 = vpack.c.b16 %v376, %v374
        %v385 = vpack.c.b16 %v377, %v375
        %394 = vmatprep.subr.bf16.mxu0 0
        %395 = vmatpush1.bf16.msra.mxu0 0
        %396 = vmatprep.subr.bf16.mxu0 0
        %397 = vmatpush1.bf16.msra.mxu0 0
        %398 = vmatprep.subr.bf16.mxu0 0
        %399 = vmatpush1.bf16.msra.mxu0 0
        %400 = vmatprep.subr.bf16.mxu0 0
        %401 = vmatpush1.bf16.msra.mxu0 0
        %402 = vmatprep.subr.bf16.mxu0 %v385
        %403 = vmatpush1.bf16.msra.mxu0 %v384
        %404 = vmatprep.subr.bf16.mxu0 %v383
        %405 = vmatpush1.bf16.msra.mxu0 %v382
        %406 = vmatprep.subr.bf16.mxu0 %v381
        %407 = vmatpush1.bf16.msra.mxu0 %v380
        %408 = vmatprep.subr.bf16.mxu0 %v379
        %409 = vmatpush1.bf16.msra.mxu0 %v378
        %410 = vmatprep.subr.bf16.mxu0 0
        %411 = vmatpush2.bf16.msra.mxu0 0
        %412 = vmatprep.subr.bf16.mxu0 0
        %413 = vmatpush2.bf16.msra.mxu0 0
        %414 = vmatprep.subr.bf16.mxu0 0
        %415 = vmatpush2.bf16.msra.mxu0 0
        %416 = vmatprep.subr.bf16.mxu0 0
        %417 = vmatpush2.bf16.msra.mxu0 0
        %418 = vmatprep.subr.bf16.mxu0 0
        %419 = vmatpush2.bf16.msra.mxu0 0
        %420 = vmatprep.subr.bf16.mxu0 0
        %421 = vmatpush2.bf16.msra.mxu0 0
        %422 = vmatprep.subr.bf16.mxu0 0
        %423 = vmatpush2.bf16.msra.mxu0 0
        %424 = vmatprep.subr.bf16.mxu0 0
        %425 = vmatpush2.bf16.msra.mxu0 0
        %426 = vmatprep.mubr.bf16.mxu0 0
        %427 = vmatmul.mubr.bf16.gmra.mxu0 %v296
        %v428 = vpop.f32.mrf.mxu0
        %v429 = vadd.f32 0.0, %v428
        %v430 = vpop.f32.mrf.mxu0
        %v431 = vadd.f32 0.0, %v430
        %v432 = vpop.f32.mrf.mxu0
        %v433 = vadd.f32 0.0, %v432
        %v434 = vpop.f32.mrf.mxu0
        %v435 = vadd.f32 0.0, %v434
        %436 = vdwg.mxu0
        %s437 = scalar_lea.vmem [#allocation3], 32
        %438 = vst [vmem:[%s437] sm:$0xff] %v429
        %439 = vst [vmem:[%s437 + $0x8] sm:$0xff] %v431
        %440 = vst [vmem:[%s437 + $0x10] sm:$0xff] %v433
        %441 = vst [vmem:[%s437 + $0x18] sm:$0xff] %v435
        %s442 = scalar_lea.vmem [#allocation4], 128
        %v443 = vld [vmem:[%s442] sm:$0xff]
        %v444 = vld [vmem:[%s442 + $0x8] sm:$0xff]
        %v445 = vld [vmem:[%s442 + $0x10] sm:$0xff]
        %v446 = vld [vmem:[%s442 + $0x18] sm:$0xff]
        %v447 = vld [vmem:[%s442 + $0x20] sm:$0xff]
        %v448 = vld [vmem:[%s442 + $0x28] sm:$0xff]
        %v449 = vld [vmem:[%s442 + $0x30] sm:$0xff]
        %v450 = vld [vmem:[%s442 + $0x38] sm:$0xff]
        %v459 = vunpack.c.l.b16 %v443
        %v460 = vunpack.c.h.b16 %v443
        %v461 = vunpack.c.l.b16 %v444
        %v462 = vunpack.c.h.b16 %v444
        %v463 = vunpack.c.l.b16 %v445
        %v464 = vunpack.c.h.b16 %v445
        %v465 = vunpack.c.l.b16 %v446
        %v466 = vunpack.c.h.b16 %v446
        %v467 = vunpack.c.l.b16 %v447
        %v468 = vunpack.c.h.b16 %v447
        %v469 = vunpack.c.l.b16 %v448
        %v470 = vunpack.c.h.b16 %v448
        %v471 = vunpack.c.l.b16 %v449
        %v472 = vunpack.c.h.b16 %v449
        %v473 = vunpack.c.l.b16 %v450
        %v474 = vunpack.c.h.b16 %v450
        %v475 = vpack.c.b16 %v461, %v459
        %v476 = vpack.c.b16 %v462, %v460
        %v477 = vpack.c.b16 %v465, %v463
        %v478 = vpack.c.b16 %v466, %v464
        %v479 = vpack.c.b16 %v469, %v467
        %v480 = vpack.c.b16 %v470, %v468
        %v481 = vpack.c.b16 %v473, %v471
        %v482 = vpack.c.b16 %v474, %v472
        %491 = vmatprep.subr.bf16.mxu0 0
        %492 = vmatpush1.bf16.msra.mxu0 0
        %493 = vmatprep.subr.bf16.mxu0 0
        %494 = vmatpush1.bf16.msra.mxu0 0
        %495 = vmatprep.subr.bf16.mxu0 0
        %496 = vmatpush1.bf16.msra.mxu0 0
        %497 = vmatprep.subr.bf16.mxu0 0
        %498 = vmatpush1.bf16.msra.mxu0 0
        %499 = vmatprep.subr.bf16.mxu0 %v482
        %500 = vmatpush1.bf16.msra.mxu0 %v481
        %501 = vmatprep.subr.bf16.mxu0 %v480
        %502 = vmatpush1.bf16.msra.mxu0 %v479
        %503 = vmatprep.subr.bf16.mxu0 %v478
        %504 = vmatpush1.bf16.msra.mxu0 %v477
        %505 = vmatprep.subr.bf16.mxu0 %v476
        %506 = vmatpush1.bf16.msra.mxu0 %v475
        %507 = vmatprep.subr.bf16.mxu0 0
        %508 = vmatpush2.bf16.msra.mxu0 0
        %509 = vmatprep.subr.bf16.mxu0 0
        %510 = vmatpush2.bf16.msra.mxu0 0
        %511 = vmatprep.subr.bf16.mxu0 0
        %512 = vmatpush2.bf16.msra.mxu0 0
        %513 = vmatprep.subr.bf16.mxu0 0
        %514 = vmatpush2.bf16.msra.mxu0 0
        %515 = vmatprep.subr.bf16.mxu0 0
        %516 = vmatpush2.bf16.msra.mxu0 0
        %517 = vmatprep.subr.bf16.mxu0 0
        %518 = vmatpush2.bf16.msra.mxu0 0
        %519 = vmatprep.subr.bf16.mxu0 0
        %520 = vmatpush2.bf16.msra.mxu0 0
        %521 = vmatprep.subr.bf16.mxu0 0
        %522 = vmatpush2.bf16.msra.mxu0 0
        %523 = vmatprep.mubr.bf16.mxu0 0
        %524 = vmatmul.mubr.bf16.gmra.mxu0 %v296
        %v525 = vpop.f32.mrf.mxu0
        %v526 = vadd.f32 0.0, %v525
        %v527 = vpop.f32.mrf.mxu0
        %v528 = vadd.f32 0.0, %v527
        %v529 = vpop.f32.mrf.mxu0
        %v530 = vadd.f32 0.0, %v529
        %v531 = vpop.f32.mrf.mxu0
        %v532 = vadd.f32 0.0, %v531
        %533 = vdwg.mxu0
        %s534 = scalar_lea.vmem [#allocation3], 64
        %535 = vst [vmem:[%s534] sm:$0xff] %v526
        %536 = vst [vmem:[%s534 + $0x8] sm:$0xff] %v528
        %537 = vst [vmem:[%s534 + $0x10] sm:$0xff] %v530
        %538 = vst [vmem:[%s534 + $0x18] sm:$0xff] %v532
        %s539 = scalar_lea.vmem [#allocation4], 192
        %v540 = vld [vmem:[%s539] sm:$0xff]
        %v541 = vld [vmem:[%s539 + $0x8] sm:$0xff]
        %v542 = vld [vmem:[%s539 + $0x10] sm:$0xff]
        %v543 = vld [vmem:[%s539 + $0x18] sm:$0xff]
        %v544 = vld [vmem:[%s539 + $0x20] sm:$0xff]
        %v545 = vld [vmem:[%s539 + $0x28] sm:$0xff]
        %v546 = vld [vmem:[%s539 + $0x30] sm:$0xff]
        %v547 = vld [vmem:[%s539 + $0x38] sm:$0xff]
        %v556 = vunpack.c.l.b16 %v540
        %v557 = vunpack.c.h.b16 %v540
        %v558 = vunpack.c.l.b16 %v541
        %v559 = vunpack.c.h.b16 %v541
        %v560 = vunpack.c.l.b16 %v542
        %v561 = vunpack.c.h.b16 %v542
        %v562 = vunpack.c.l.b16 %v543
        %v563 = vunpack.c.h.b16 %v543
        %v564 = vunpack.c.l.b16 %v544
        %v565 = vunpack.c.h.b16 %v544
        %v566 = vunpack.c.l.b16 %v545
        %v567 = vunpack.c.h.b16 %v545
        %v568 = vunpack.c.l.b16 %v546
        %v569 = vunpack.c.h.b16 %v546
        %v570 = vunpack.c.l.b16 %v547
        %v571 = vunpack.c.h.b16 %v547
        %v572 = vpack.c.b16 %v558, %v556
        %v573 = vpack.c.b16 %v559, %v557
        %v574 = vpack.c.b16 %v562, %v560
        %v575 = vpack.c.b16 %v563, %v561
        %v576 = vpack.c.b16 %v566, %v564
        %v577 = vpack.c.b16 %v567, %v565
        %v578 = vpack.c.b16 %v570, %v568
        %v579 = vpack.c.b16 %v571, %v569
        %588 = vmatprep.subr.bf16.mxu0 0
        %589 = vmatpush1.bf16.msra.mxu0 0
        %590 = vmatprep.subr.bf16.mxu0 0
        %591 = vmatpush1.bf16.msra.mxu0 0
        %592 = vmatprep.subr.bf16.mxu0 0
        %593 = vmatpush1.bf16.msra.mxu0 0
        %594 = vmatprep.subr.bf16.mxu0 0
        %595 = vmatpush1.bf16.msra.mxu0 0
        %596 = vmatprep.subr.bf16.mxu0 %v579
        %597 = vmatpush1.bf16.msra.mxu0 %v578
        %598 = vmatprep.subr.bf16.mxu0 %v577
        %599 = vmatpush1.bf16.msra.mxu0 %v576
        %600 = vmatprep.subr.bf16.mxu0 %v575
        %601 = vmatpush1.bf16.msra.mxu0 %v574
        %602 = vmatprep.subr.bf16.mxu0 %v573
        %603 = vmatpush1.bf16.msra.mxu0 %v572
        %604 = vmatprep.subr.bf16.mxu0 0
        %605 = vmatpush2.bf16.msra.mxu0 0
        %606 = vmatprep.subr.bf16.mxu0 0
        %607 = vmatpush2.bf16.msra.mxu0 0
        %608 = vmatprep.subr.bf16.mxu0 0
        %609 = vmatpush2.bf16.msra.mxu0 0
        %610 = vmatprep.subr.bf16.mxu0 0
        %611 = vmatpush2.bf16.msra.mxu0 0
        %612 = vmatprep.subr.bf16.mxu0 0
        %613 = vmatpush2.bf16.msra.mxu0 0
        %614 = vmatprep.subr.bf16.mxu0 0
        %615 = vmatpush2.bf16.msra.mxu0 0
        %616 = vmatprep.subr.bf16.mxu0 0
        %617 = vmatpush2.bf16.msra.mxu0 0
        %618 = vmatprep.subr.bf16.mxu0 0
        %619 = vmatpush2.bf16.msra.mxu0 0
        %620 = vmatprep.mubr.bf16.mxu0 0
        %621 = vmatmul.mubr.bf16.gmra.mxu0 %v296
        %v622 = vpop.f32.mrf.mxu0
        %v623 = vadd.f32 0.0, %v622
        %v624 = vpop.f32.mrf.mxu0
        %v625 = vadd.f32 0.0, %v624
        %v626 = vpop.f32.mrf.mxu0
        %v627 = vadd.f32 0.0, %v626
        %v628 = vpop.f32.mrf.mxu0
        %v629 = vadd.f32 0.0, %v628
        %630 = vdwg.mxu0
        %s631 = scalar_lea.vmem [#allocation3], 96
        %632 = vst [vmem:[%s631] sm:$0xff] %v623
        %633 = vst [vmem:[%s631 + $0x8] sm:$0xff] %v625
        %634 = vst [vmem:[%s631 + $0x10] sm:$0xff] %v627
        %635 = vst [vmem:[%s631 + $0x18] sm:$0xff] %v629
        %s636 = scalar_lea.vmem [#allocation4], 256
        %v637 = vld [vmem:[%s636] sm:$0xff]
        %v638 = vld [vmem:[%s636 + $0x8] sm:$0xff]
        %v639 = vld [vmem:[%s636 + $0x10] sm:$0xff]
        %v640 = vld [vmem:[%s636 + $0x18] sm:$0xff]
        %v641 = vld [vmem:[%s636 + $0x20] sm:$0xff]
        %v642 = vld [vmem:[%s636 + $0x28] sm:$0xff]
        %v643 = vld [vmem:[%s636 + $0x30] sm:$0xff]
        %v644 = vld [vmem:[%s636 + $0x38] sm:$0xff]
        %v653 = vunpack.c.l.b16 %v637
        %v654 = vunpack.c.h.b16 %v637
        %v655 = vunpack.c.l.b16 %v638
        %v656 = vunpack.c.h.b16 %v638
        %v657 = vunpack.c.l.b16 %v639
        %v658 = vunpack.c.h.b16 %v639
        %v659 = vunpack.c.l.b16 %v640
        %v660 = vunpack.c.h.b16 %v640
        %v661 = vunpack.c.l.b16 %v641
        %v662 = vunpack.c.h.b16 %v641
        %v663 = vunpack.c.l.b16 %v642
        %v664 = vunpack.c.h.b16 %v642
        %v665 = vunpack.c.l.b16 %v643
        %v666 = vunpack.c.h.b16 %v643
        %v667 = vunpack.c.l.b16 %v644
        %v668 = vunpack.c.h.b16 %v644
        %v669 = vpack.c.b16 %v655, %v653
        %v670 = vpack.c.b16 %v656, %v654
        %v671 = vpack.c.b16 %v659, %v657
        %v672 = vpack.c.b16 %v660, %v658
        %v673 = vpack.c.b16 %v663, %v661
        %v674 = vpack.c.b16 %v664, %v662
        %v675 = vpack.c.b16 %v667, %v665
        %v676 = vpack.c.b16 %v668, %v666
        %685 = vmatprep.subr.bf16.mxu0 0
        %686 = vmatpush1.bf16.msra.mxu0 0
        %687 = vmatprep.subr.bf16.mxu0 0
        %688 = vmatpush1.bf16.msra.mxu0 0
        %689 = vmatprep.subr.bf16.mxu0 0
        %690 = vmatpush1.bf16.msra.mxu0 0
        %691 = vmatprep.subr.bf16.mxu0 0
        %692 = vmatpush1.bf16.msra.mxu0 0
        %693 = vmatprep.subr.bf16.mxu0 %v676
        %694 = vmatpush1.bf16.msra.mxu0 %v675
        %695 = vmatprep.subr.bf16.mxu0 %v674
        %696 = vmatpush1.bf16.msra.mxu0 %v673
        %697 = vmatprep.subr.bf16.mxu0 %v672
        %698 = vmatpush1.bf16.msra.mxu0 %v671
        %699 = vmatprep.subr.bf16.mxu0 %v670
        %700 = vmatpush1.bf16.msra.mxu0 %v669
        %701 = vmatprep.subr.bf16.mxu0 0
        %702 = vmatpush2.bf16.msra.mxu0 0
        %703 = vmatprep.subr.bf16.mxu0 0
        %704 = vmatpush2.bf16.msra.mxu0 0
        %705 = vmatprep.subr.bf16.mxu0 0
        %706 = vmatpush2.bf16.msra.mxu0 0
        %707 = vmatprep.subr.bf16.mxu0 0
        %708 = vmatpush2.bf16.msra.mxu0 0
        %709 = vmatprep.subr.bf16.mxu0 0
        %710 = vmatpush2.bf16.msra.mxu0 0
        %711 = vmatprep.subr.bf16.mxu0 0
        %712 = vmatpush2.bf16.msra.mxu0 0
        %713 = vmatprep.subr.bf16.mxu0 0
        %714 = vmatpush2.bf16.msra.mxu0 0
        %715 = vmatprep.subr.bf16.mxu0 0
        %716 = vmatpush2.bf16.msra.mxu0 0
        %717 = vmatprep.mubr.bf16.mxu0 0
        %718 = vmatmul.mubr.bf16.gmra.mxu0 %v296
        %v719 = vpop.f32.mrf.mxu0
        %v720 = vadd.f32 0.0, %v719
        %v721 = vpop.f32.mrf.mxu0
        %v722 = vadd.f32 0.0, %v721
        %v723 = vpop.f32.mrf.mxu0
        %v724 = vadd.f32 0.0, %v723
        %v725 = vpop.f32.mrf.mxu0
        %v726 = vadd.f32 0.0, %v725
        %727 = vdwg.mxu0
        %s728 = scalar_lea.vmem [#allocation3], 128
        %729 = vst [vmem:[%s728] sm:$0xff] %v720
        %730 = vst [vmem:[%s728 + $0x8] sm:$0xff] %v722
        %731 = vst [vmem:[%s728 + $0x10] sm:$0xff] %v724
        %732 = vst [vmem:[%s728 + $0x18] sm:$0xff] %v726
        %s733 = scalar_lea.vmem [#allocation4], 320
        %v734 = vld [vmem:[%s733] sm:$0xff]
        %v735 = vld [vmem:[%s733 + $0x8] sm:$0xff]
        %v736 = vld [vmem:[%s733 + $0x10] sm:$0xff]
        %v737 = vld [vmem:[%s733 + $0x18] sm:$0xff]
        %v738 = vld [vmem:[%s733 + $0x20] sm:$0xff]
        %v739 = vld [vmem:[%s733 + $0x28] sm:$0xff]
        %v740 = vld [vmem:[%s733 + $0x30] sm:$0xff]
        %v741 = vld [vmem:[%s733 + $0x38] sm:$0xff]
        %v750 = vunpack.c.l.b16 %v734
        %v751 = vunpack.c.h.b16 %v734
        %v752 = vunpack.c.l.b16 %v735
        %v753 = vunpack.c.h.b16 %v735
        %v754 = vunpack.c.l.b16 %v736
        %v755 = vunpack.c.h.b16 %v736
        %v756 = vunpack.c.l.b16 %v737
        %v757 = vunpack.c.h.b16 %v737
        %v758 = vunpack.c.l.b16 %v738
        %v759 = vunpack.c.h.b16 %v738
        %v760 = vunpack.c.l.b16 %v739
        %v761 = vunpack.c.h.b16 %v739
        %v762 = vunpack.c.l.b16 %v740
        %v763 = vunpack.c.h.b16 %v740
        %v764 = vunpack.c.l.b16 %v741
        %v765 = vunpack.c.h.b16 %v741
        %v766 = vpack.c.b16 %v752, %v750
        %v767 = vpack.c.b16 %v753, %v751
        %v768 = vpack.c.b16 %v756, %v754
        %v769 = vpack.c.b16 %v757, %v755
        %v770 = vpack.c.b16 %v760, %v758
        %v771 = vpack.c.b16 %v761, %v759
        %v772 = vpack.c.b16 %v764, %v762
        %v773 = vpack.c.b16 %v765, %v763
        %782 = vmatprep.subr.bf16.mxu0 0
        %783 = vmatpush1.bf16.msra.mxu0 0
        %784 = vmatprep.subr.bf16.mxu0 0
        %785 = vmatpush1.bf16.msra.mxu0 0
        %786 = vmatprep.subr.bf16.mxu0 0
        %787 = vmatpush1.bf16.msra.mxu0 0
        %788 = vmatprep.subr.bf16.mxu0 0
        %789 = vmatpush1.bf16.msra.mxu0 0
        %790 = vmatprep.subr.bf16.mxu0 %v773
        %791 = vmatpush1.bf16.msra.mxu0 %v772
        %792 = vmatprep.subr.bf16.mxu0 %v771
        %793 = vmatpush1.bf16.msra.mxu0 %v770
        %794 = vmatprep.subr.bf16.mxu0 %v769
        %795 = vmatpush1.bf16.msra.mxu0 %v768
        %796 = vmatprep.subr.bf16.mxu0 %v767
        %797 = vmatpush1.bf16.msra.mxu0 %v766
        %798 = vmatprep.subr.bf16.mxu0 0
        %799 = vmatpush2.bf16.msra.mxu0 0
        %800 = vmatprep.subr.bf16.mxu0 0
        %801 = vmatpush2.bf16.msra.mxu0 0
        %802 = vmatprep.subr.bf16.mxu0 0
        %803 = vmatpush2.bf16.msra.mxu0 0
        %804 = vmatprep.subr.bf16.mxu0 0
        %805 = vmatpush2.bf16.msra.mxu0 0
        %806 = vmatprep.subr.bf16.mxu0 0
        %807 = vmatpush2.bf16.msra.mxu0 0
        %808 = vmatprep.subr.bf16.mxu0 0
        %809 = vmatpush2.bf16.msra.mxu0 0
        %810 = vmatprep.subr.bf16.mxu0 0
        %811 = vmatpush2.bf16.msra.mxu0 0
        %812 = vmatprep.subr.bf16.mxu0 0
        %813 = vmatpush2.bf16.msra.mxu0 0
        %814 = vmatprep.mubr.bf16.mxu0 0
        %815 = vmatmul.mubr.bf16.gmra.mxu0 %v296
        %v816 = vpop.f32.mrf.mxu0
        %v817 = vadd.f32 0.0, %v816
        %v818 = vpop.f32.mrf.mxu0
        %v819 = vadd.f32 0.0, %v818
        %v820 = vpop.f32.mrf.mxu0
        %v821 = vadd.f32 0.0, %v820
        %v822 = vpop.f32.mrf.mxu0
        %v823 = vadd.f32 0.0, %v822
        %824 = vdwg.mxu0
        %s825 = scalar_lea.vmem [#allocation3], 160
        %826 = vst [vmem:[%s825] sm:$0xff] %v817
        %827 = vst [vmem:[%s825 + $0x8] sm:$0xff] %v819
        %828 = vst [vmem:[%s825 + $0x10] sm:$0xff] %v821
        %829 = vst [vmem:[%s825 + $0x18] sm:$0xff] %v823
        %s830 = scalar_lea.vmem [#allocation4], 384
        %v831 = vld [vmem:[%s830] sm:$0xff]
        %v832 = vld [vmem:[%s830 + $0x8] sm:$0xff]
        %v833 = vld [vmem:[%s830 + $0x10] sm:$0xff]
        %v834 = vld [vmem:[%s830 + $0x18] sm:$0xff]
        %v835 = vld [vmem:[%s830 + $0x20] sm:$0xff]
        %v836 = vld [vmem:[%s830 + $0x28] sm:$0xff]
        %v837 = vld [vmem:[%s830 + $0x30] sm:$0xff]
        %v838 = vld [vmem:[%s830 + $0x38] sm:$0xff]
        %v847 = vunpack.c.l.b16 %v831
        %v848 = vunpack.c.h.b16 %v831
        %v849 = vunpack.c.l.b16 %v832
        %v850 = vunpack.c.h.b16 %v832
        %v851 = vunpack.c.l.b16 %v833
        %v852 = vunpack.c.h.b16 %v833
        %v853 = vunpack.c.l.b16 %v834
        %v854 = vunpack.c.h.b16 %v834
        %v855 = vunpack.c.l.b16 %v835
        %v856 = vunpack.c.h.b16 %v835
        %v857 = vunpack.c.l.b16 %v836
        %v858 = vunpack.c.h.b16 %v836
        %v859 = vunpack.c.l.b16 %v837
        %v860 = vunpack.c.h.b16 %v837
        %v861 = vunpack.c.l.b16 %v838
        %v862 = vunpack.c.h.b16 %v838
        %v863 = vpack.c.b16 %v849, %v847
        %v864 = vpack.c.b16 %v850, %v848
        %v865 = vpack.c.b16 %v853, %v851
        %v866 = vpack.c.b16 %v854, %v852
        %v867 = vpack.c.b16 %v857, %v855
        %v868 = vpack.c.b16 %v858, %v856
        %v869 = vpack.c.b16 %v861, %v859
        %v870 = vpack.c.b16 %v862, %v860
        %879 = vmatprep.subr.bf16.mxu0 0
        %880 = vmatpush1.bf16.msra.mxu0 0
        %881 = vmatprep.subr.bf16.mxu0 0
        %882 = vmatpush1.bf16.msra.mxu0 0
        %883 = vmatprep.subr.bf16.mxu0 0
        %884 = vmatpush1.bf16.msra.mxu0 0
        %885 = vmatprep.subr.bf16.mxu0 0
        %886 = vmatpush1.bf16.msra.mxu0 0
        %887 = vmatprep.subr.bf16.mxu0 %v870
        %888 = vmatpush1.bf16.msra.mxu0 %v869
        %889 = vmatprep.subr.bf16.mxu0 %v868
        %890 = vmatpush1.bf16.msra.mxu0 %v867
        %891 = vmatprep.subr.bf16.mxu0 %v866
        %892 = vmatpush1.bf16.msra.mxu0 %v865
        %893 = vmatprep.subr.bf16.mxu0 %v864
        %894 = vmatpush1.bf16.msra.mxu0 %v863
        %895 = vmatprep.subr.bf16.mxu0 0
        %896 = vmatpush2.bf16.msra.mxu0 0
        %897 = vmatprep.subr.bf16.mxu0 0
        %898 = vmatpush2.bf16.msra.mxu0 0
        %899 = vmatprep.subr.bf16.mxu0 0
        %900 = vmatpush2.bf16.msra.mxu0 0
        %901 = vmatprep.subr.bf16.mxu0 0
        %902 = vmatpush2.bf16.msra.mxu0 0
        %903 = vmatprep.subr.bf16.mxu0 0
        %904 = vmatpush2.bf16.msra.mxu0 0
        %905 = vmatprep.subr.bf16.mxu0 0
        %906 = vmatpush2.bf16.msra.mxu0 0
        %907 = vmatprep.subr.bf16.mxu0 0
        %908 = vmatpush2.bf16.msra.mxu0 0
        %909 = vmatprep.subr.bf16.mxu0 0
        %910 = vmatpush2.bf16.msra.mxu0 0
        %911 = vmatprep.mubr.bf16.mxu0 0
        %912 = vmatmul.mubr.bf16.gmra.mxu0 %v296
        %v913 = vpop.f32.mrf.mxu0
        %v914 = vadd.f32 0.0, %v913
        %v915 = vpop.f32.mrf.mxu0
        %v916 = vadd.f32 0.0, %v915
        %v917 = vpop.f32.mrf.mxu0
        %v918 = vadd.f32 0.0, %v917
        %v919 = vpop.f32.mrf.mxu0
        %v920 = vadd.f32 0.0, %v919
        %921 = vdwg.mxu0
        %s922 = scalar_lea.vmem [#allocation3], 192
        %923 = vst [vmem:[%s922] sm:$0xff] %v914
        %924 = vst [vmem:[%s922 + $0x8] sm:$0xff] %v916
        %925 = vst [vmem:[%s922 + $0x10] sm:$0xff] %v918
        %926 = vst [vmem:[%s922 + $0x18] sm:$0xff] %v920
        %s927 = scalar_lea.vmem [#allocation4], 448
        %v928 = vld [vmem:[%s927] sm:$0xff]
        %v929 = vld [vmem:[%s927 + $0x8] sm:$0xff]
        %v930 = vld [vmem:[%s927 + $0x10] sm:$0xff]
        %v931 = vld [vmem:[%s927 + $0x18] sm:$0xff]
        %v932 = vld [vmem:[%s927 + $0x20] sm:$0xff]
        %v933 = vld [vmem:[%s927 + $0x28] sm:$0xff]
        %v934 = vld [vmem:[%s927 + $0x30] sm:$0xff]
        %v935 = vld [vmem:[%s927 + $0x38] sm:$0xff]
        %v944 = vunpack.c.l.b16 %v928
        %v945 = vunpack.c.h.b16 %v928
        %v946 = vunpack.c.l.b16 %v929
        %v947 = vunpack.c.h.b16 %v929
        %v948 = vunpack.c.l.b16 %v930
        %v949 = vunpack.c.h.b16 %v930
        %v950 = vunpack.c.l.b16 %v931
        %v951 = vunpack.c.h.b16 %v931
        %v952 = vunpack.c.l.b16 %v932
        %v953 = vunpack.c.h.b16 %v932
        %v954 = vunpack.c.l.b16 %v933
        %v955 = vunpack.c.h.b16 %v933
        %v956 = vunpack.c.l.b16 %v934
        %v957 = vunpack.c.h.b16 %v934
        %v958 = vunpack.c.l.b16 %v935
        %v959 = vunpack.c.h.b16 %v935
        %v960 = vpack.c.b16 %v946, %v944
        %v961 = vpack.c.b16 %v947, %v945
        %v962 = vpack.c.b16 %v950, %v948
        %v963 = vpack.c.b16 %v951, %v949
        %v964 = vpack.c.b16 %v954, %v952
        %v965 = vpack.c.b16 %v955, %v953
        %v966 = vpack.c.b16 %v958, %v956
        %v967 = vpack.c.b16 %v959, %v957
        %976 = vmatprep.subr.bf16.mxu0 0
        %977 = vmatpush1.bf16.msra.mxu0 0
        %978 = vmatprep.subr.bf16.mxu0 0
        %979 = vmatpush1.bf16.msra.mxu0 0
        %980 = vmatprep.subr.bf16.mxu0 0
        %981 = vmatpush1.bf16.msra.mxu0 0
        %982 = vmatprep.subr.bf16.mxu0 0
        %983 = vmatpush1.bf16.msra.mxu0 0
        %984 = vmatprep.subr.bf16.mxu0 %v967
        %985 = vmatpush1.bf16.msra.mxu0 %v966
        %986 = vmatprep.subr.bf16.mxu0 %v965
        %987 = vmatpush1.bf16.msra.mxu0 %v964
        %988 = vmatprep.subr.bf16.mxu0 %v963
        %989 = vmatpush1.bf16.msra.mxu0 %v962
        %990 = vmatprep.subr.bf16.mxu0 %v961
        %991 = vmatpush1.bf16.msra.mxu0 %v960
        %992 = vmatprep.subr.bf16.mxu0 0
        %993 = vmatpush2.bf16.msra.mxu0 0
        %994 = vmatprep.subr.bf16.mxu0 0
        %995 = vmatpush2.bf16.msra.mxu0 0
        %996 = vmatprep.subr.bf16.mxu0 0
        %997 = vmatpush2.bf16.msra.mxu0 0
        %998 = vmatprep.subr.bf16.mxu0 0
        %999 = vmatpush2.bf16.msra.mxu0 0
        %1000 = vmatprep.subr.bf16.mxu0 0
        %1001 = vmatpush2.bf16.msra.mxu0 0
        %1002 = vmatprep.subr.bf16.mxu0 0
        %1003 = vmatpush2.bf16.msra.mxu0 0
        %1004 = vmatprep.subr.bf16.mxu0 0
        %1005 = vmatpush2.bf16.msra.mxu0 0
        %1006 = vmatprep.subr.bf16.mxu0 0
        %1007 = vmatpush2.bf16.msra.mxu0 0
        %1008 = vmatprep.mubr.bf16.mxu0 0
        %1009 = vmatmul.mubr.bf16.gmra.mxu0 %v296
        %v1010 = vpop.f32.mrf.mxu0
        %v1011 = vadd.f32 0.0, %v1010
        %v1012 = vpop.f32.mrf.mxu0
        %v1013 = vadd.f32 0.0, %v1012
        %v1014 = vpop.f32.mrf.mxu0
        %v1015 = vadd.f32 0.0, %v1014
        %v1016 = vpop.f32.mrf.mxu0
        %v1017 = vadd.f32 0.0, %v1016
        %1018 = vdwg.mxu0
        %s1019 = scalar_lea.vmem [#allocation3], 224
        %1020 = vst [vmem:[%s1019] sm:$0xff] %v1011
        %1021 = vst [vmem:[%s1019 + $0x8] sm:$0xff] %v1013
        %1022 = vst [vmem:[%s1019 + $0x10] sm:$0xff] %v1015
        %1023 = vst [vmem:[%s1019 + $0x18] sm:$0xff] %v1017
        %s1024 = scalar_lea.vmem [#allocation4], 512
        %v1025 = vld [vmem:[%s1024] sm:$0xff]
        %v1026 = vld [vmem:[%s1024 + $0x8] sm:$0xff]
        %v1027 = vld [vmem:[%s1024 + $0x10] sm:$0xff]
        %v1028 = vld [vmem:[%s1024 + $0x18] sm:$0xff]
        %v1029 = vld [vmem:[%s1024 + $0x20] sm:$0xff]
        %v1030 = vld [vmem:[%s1024 + $0x28] sm:$0xff]
        %v1031 = vld [vmem:[%s1024 + $0x30] sm:$0xff]
        %v1032 = vld [vmem:[%s1024 + $0x38] sm:$0xff]
        %v1041 = vunpack.c.l.b16 %v1025
        %v1042 = vunpack.c.h.b16 %v1025
        %v1043 = vunpack.c.l.b16 %v1026
        %v1044 = vunpack.c.h.b16 %v1026
        %v1045 = vunpack.c.l.b16 %v1027
        %v1046 = vunpack.c.h.b16 %v1027
        %v1047 = vunpack.c.l.b16 %v1028
        %v1048 = vunpack.c.h.b16 %v1028
        %v1049 = vunpack.c.l.b16 %v1029
        %v1050 = vunpack.c.h.b16 %v1029
        %v1051 = vunpack.c.l.b16 %v1030
        %v1052 = vunpack.c.h.b16 %v1030
        %v1053 = vunpack.c.l.b16 %v1031
        %v1054 = vunpack.c.h.b16 %v1031
        %v1055 = vunpack.c.l.b16 %v1032
        %v1056 = vunpack.c.h.b16 %v1032
        %v1057 = vpack.c.b16 %v1043, %v1041
        %v1058 = vpack.c.b16 %v1044, %v1042
        %v1059 = vpack.c.b16 %v1047, %v1045
        %v1060 = vpack.c.b16 %v1048, %v1046
        %v1061 = vpack.c.b16 %v1051, %v1049
        %v1062 = vpack.c.b16 %v1052, %v1050
        %v1063 = vpack.c.b16 %v1055, %v1053
        %v1064 = vpack.c.b16 %v1056, %v1054
        %1073 = vmatprep.subr.bf16.mxu0 0
        %1074 = vmatpush1.bf16.msra.mxu0 0
        %1075 = vmatprep.subr.bf16.mxu0 0
        %1076 = vmatpush1.bf16.msra.mxu0 0
        %1077 = vmatprep.subr.bf16.mxu0 0
        %1078 = vmatpush1.bf16.msra.mxu0 0
        %1079 = vmatprep.subr.bf16.mxu0 0
        %1080 = vmatpush1.bf16.msra.mxu0 0
        %1081 = vmatprep.subr.bf16.mxu0 %v1064
        %1082 = vmatpush1.bf16.msra.mxu0 %v1063
        %1083 = vmatprep.subr.bf16.mxu0 %v1062
        %1084 = vmatpush1.bf16.msra.mxu0 %v1061
        %1085 = vmatprep.subr.bf16.mxu0 %v1060
        %1086 = vmatpush1.bf16.msra.mxu0 %v1059
        %1087 = vmatprep.subr.bf16.mxu0 %v1058
        %1088 = vmatpush1.bf16.msra.mxu0 %v1057
        %1089 = vmatprep.subr.bf16.mxu0 0
        %1090 = vmatpush2.bf16.msra.mxu0 0
        %1091 = vmatprep.subr.bf16.mxu0 0
        %1092 = vmatpush2.bf16.msra.mxu0 0
        %1093 = vmatprep.subr.bf16.mxu0 0
        %1094 = vmatpush2.bf16.msra.mxu0 0
        %1095 = vmatprep.subr.bf16.mxu0 0
        %1096 = vmatpush2.bf16.msra.mxu0 0
        %1097 = vmatprep.subr.bf16.mxu0 0
        %1098 = vmatpush2.bf16.msra.mxu0 0
        %1099 = vmatprep.subr.bf16.mxu0 0
        %1100 = vmatpush2.bf16.msra.mxu0 0
        %1101 = vmatprep.subr.bf16.mxu0 0
        %1102 = vmatpush2.bf16.msra.mxu0 0
        %1103 = vmatprep.subr.bf16.mxu0 0
        %1104 = vmatpush2.bf16.msra.mxu0 0
        %1105 = vmatprep.mubr.bf16.mxu0 0
        %1106 = vmatmul.mubr.bf16.gmra.mxu0 %v296
        %v1107 = vpop.f32.mrf.mxu0
        %v1108 = vadd.f32 0.0, %v1107
        %v1109 = vpop.f32.mrf.mxu0
        %v1110 = vadd.f32 0.0, %v1109
        %v1111 = vpop.f32.mrf.mxu0
        %v1112 = vadd.f32 0.0, %v1111
        %v1113 = vpop.f32.mrf.mxu0
        %v1114 = vadd.f32 0.0, %v1113
        %1115 = vdwg.mxu0
        %s1116 = scalar_lea.vmem [#allocation3], 256
        %1117 = vst [vmem:[%s1116] sm:$0xff] %v1108
        %1118 = vst [vmem:[%s1116 + $0x8] sm:$0xff] %v1110
        %1119 = vst [vmem:[%s1116 + $0x10] sm:$0xff] %v1112
        %1120 = vst [vmem:[%s1116 + $0x18] sm:$0xff] %v1114
        %v1121 = vld [vmem:[#allocation3] sm:$0xff]
        %v1122 = vld [vmem:[#allocation3 + $0x8] sm:$0xff]
        %v1123 = vld [vmem:[#allocation3 + $0x10] sm:$0xf]
        %v1124 = vld [vmem:[#allocation3 + $0x18] sm:$0xf]
        %v1125 = vld [vmem:[#allocation7] sm:$0xff]
        %v1126 = vld [vmem:[%s437] sm:$0xff]
        %v1127 = vld [vmem:[%s437 + $0x8] sm:$0xff]
        %v1128 = vld [vmem:[%s437 + $0x10] sm:$0xf]
        %v1129 = vld [vmem:[%s437 + $0x18] sm:$0xf]
        %s1130 = scalar_lea.vmem [#allocation7], 8
        %v1131 = vld [vmem:[%s1130] sm:$0xff]
        %vm1132 = vcmask 97280
        %v1134 = vsel %vm1132, %v1131, 0
        %vm1136 = vcmask 1043456
        %v1138 = vsel %vm1136, %v1128, 0
        %v1141 = vsel %vm1136, %v1129, 0
        %1143 = vmatprep.subr.mxu0 0.0
        %1144 = vmatpush1.msra.mxu0 0.0
        %1145 = vmatprep.subr.mxu0 0.0
        %1146 = vmatpush1.msra.mxu0 0.0
        %1147 = vmatprep.subr.mxu0 0.0
        %1148 = vmatpush1.msra.mxu0 0.0
        %1149 = vmatprep.subr.mxu0 0.0
        %1150 = vmatpush1.msra.mxu0 0.0
        %1151 = vmatprep.subr.mxu0 0.0
        %1152 = vmatpush1.msra.mxu0 0.0
        %1153 = vmatprep.subr.mxu0 0.0
        %1154 = vmatpush1.msra.mxu0 0.0
        %1155 = vmatprep.subr.mxu0 0.0
        %1156 = vmatpush1.msra.mxu0 0.0
        %1157 = vmatprep.subr.mxu0 0.0
        %1158 = vmatpush1.msra.mxu0 0.0
        %1159 = vmatprep.subr.mxu0 0.0
        %1160 = vmatpush1.msra.mxu0 0.0
        %1161 = vmatprep.subr.mxu0 0.0
        %1162 = vmatpush1.msra.mxu0 0.0
        %1163 = vmatprep.subr.mxu0 0.0
        %1164 = vmatpush1.msra.mxu0 0.0
        %1165 = vmatprep.subr.mxu0 0.0
        %1166 = vmatpush1.msra.mxu0 0.0
        %1167 = vmatprep.subr.mxu0 0.0
        %1168 = vmatpush1.msra.mxu0 0.0
        %1169 = vmatprep.subr.mxu0 0.0
        %1170 = vmatpush1.msra.mxu0 0.0
        %1171 = vmatprep.subr.mxu0 %v1141
        %1172 = vmatpush1.msra.mxu0 %v1138
        %1173 = vmatprep.subr.mxu0 %v1127
        %1174 = vmatpush1.msra.mxu0 %v1126
        %1175 = vmatprep.subr.mxu0 0.0
        %1176 = vmatpush2.msra.mxu0 0.0
        %1177 = vmatprep.subr.mxu0 0.0
        %1178 = vmatpush2.msra.mxu0 0.0
        %1179 = vmatprep.subr.mxu0 0.0
        %1180 = vmatpush2.msra.mxu0 0.0
        %1181 = vmatprep.subr.mxu0 0.0
        %1182 = vmatpush2.msra.mxu0 0.0
        %1183 = vmatprep.subr.mxu0 0.0
        %1184 = vmatpush2.msra.mxu0 0.0
        %1185 = vmatprep.subr.mxu0 0.0
        %1186 = vmatpush2.msra.mxu0 0.0
        %1187 = vmatprep.subr.mxu0 0.0
        %1188 = vmatpush2.msra.mxu0 0.0
        %1189 = vmatprep.subr.mxu0 0.0
        %1190 = vmatpush2.msra.mxu0 0.0
        %1191 = vmatprep.subr.mxu0 0.0
        %1192 = vmatpush2.msra.mxu0 0.0
        %1193 = vmatprep.subr.mxu0 0.0
        %1194 = vmatpush2.msra.mxu0 0.0
        %1195 = vmatprep.subr.mxu0 0.0
        %1196 = vmatpush2.msra.mxu0 0.0
        %1197 = vmatprep.subr.mxu0 0.0
        %1198 = vmatpush2.msra.mxu0 0.0
        %1199 = vmatprep.subr.mxu0 0.0
        %1200 = vmatpush2.msra.mxu0 0.0
        %1201 = vmatprep.subr.mxu0 0.0
        %1202 = vmatpush2.msra.mxu0 0.0
        %1203 = vmatprep.subr.mxu0 0.0
        %1204 = vmatpush2.msra.mxu0 0.0
        %1205 = vmatprep.subr.mxu0 0.0
        %1206 = vmatpush2.msra.mxu0 0.0
        %1207 = vmatprep.mubr.f32.mxu0 0.0
        %1208 = vmatmul.mubr.f32.gmra.mxu0 %v1134
        %v1209 = vpop.f32.mrf.mxu0
        %v1210 = vadd.f32 0.0, %v1209
        %v1211 = vpop.f32.mrf.mxu0
        %v1212 = vadd.f32 0.0, %v1211
        %1213 = vdwg.mxu0
        %v1215 = vsel %vm1132, %v1125, 0
        %v1218 = vsel %vm1136, %v1123, 0
        %v1221 = vsel %vm1136, %v1124, 0
        %1223 = vmatprep.subr.mxu0 0.0
        %1224 = vmatpush1.msra.mxu0 0.0
        %1225 = vmatprep.subr.mxu0 0.0
        %1226 = vmatpush1.msra.mxu0 0.0
        %1227 = vmatprep.subr.mxu0 0.0
        %1228 = vmatpush1.msra.mxu0 0.0
        %1229 = vmatprep.subr.mxu0 0.0
        %1230 = vmatpush1.msra.mxu0 0.0
        %1231 = vmatprep.subr.mxu0 0.0
        %1232 = vmatpush1.msra.mxu0 0.0
        %1233 = vmatprep.subr.mxu0 0.0
        %1234 = vmatpush1.msra.mxu0 0.0
        %1235 = vmatprep.subr.mxu0 0.0
        %1236 = vmatpush1.msra.mxu0 0.0
        %1237 = vmatprep.subr.mxu0 0.0
        %1238 = vmatpush1.msra.mxu0 0.0
        %1239 = vmatprep.subr.mxu0 0.0
        %1240 = vmatpush1.msra.mxu0 0.0
        %1241 = vmatprep.subr.mxu0 0.0
        %1242 = vmatpush1.msra.mxu0 0.0
        %1243 = vmatprep.subr.mxu0 0.0
        %1244 = vmatpush1.msra.mxu0 0.0
        %1245 = vmatprep.subr.mxu0 0.0
        %1246 = vmatpush1.msra.mxu0 0.0
        %1247 = vmatprep.subr.mxu0 0.0
        %1248 = vmatpush1.msra.mxu0 0.0
        %1249 = vmatprep.subr.mxu0 0.0
        %1250 = vmatpush1.msra.mxu0 0.0
        %1251 = vmatprep.subr.mxu0 %v1221
        %1252 = vmatpush1.msra.mxu0 %v1218
        %1253 = vmatprep.subr.mxu0 %v1122
        %1254 = vmatpush1.msra.mxu0 %v1121
        %1255 = vmatprep.subr.mxu0 0.0
        %1256 = vmatpush2.msra.mxu0 0.0
        %1257 = vmatprep.subr.mxu0 0.0
        %1258 = vmatpush2.msra.mxu0 0.0
        %1259 = vmatprep.subr.mxu0 0.0
        %1260 = vmatpush2.msra.mxu0 0.0
        %1261 = vmatprep.subr.mxu0 0.0
        %1262 = vmatpush2.msra.mxu0 0.0
        %1263 = vmatprep.subr.mxu0 0.0
        %1264 = vmatpush2.msra.mxu0 0.0
        %1265 = vmatprep.subr.mxu0 0.0
        %1266 = vmatpush2.msra.mxu0 0.0
        %1267 = vmatprep.subr.mxu0 0.0
        %1268 = vmatpush2.msra.mxu0 0.0
        %1269 = vmatprep.subr.mxu0 0.0
        %1270 = vmatpush2.msra.mxu0 0.0
        %1271 = vmatprep.subr.mxu0 0.0
        %1272 = vmatpush2.msra.mxu0 0.0
        %1273 = vmatprep.subr.mxu0 0.0
        %1274 = vmatpush2.msra.mxu0 0.0
        %1275 = vmatprep.subr.mxu0 0.0
        %1276 = vmatpush2.msra.mxu0 0.0
        %1277 = vmatprep.subr.mxu0 0.0
        %1278 = vmatpush2.msra.mxu0 0.0
        %1279 = vmatprep.subr.mxu0 0.0
        %1280 = vmatpush2.msra.mxu0 0.0
        %1281 = vmatprep.subr.mxu0 0.0
        %1282 = vmatpush2.msra.mxu0 0.0
        %1283 = vmatprep.subr.mxu0 0.0
        %1284 = vmatpush2.msra.mxu0 0.0
        %1285 = vmatprep.subr.mxu0 0.0
        %1286 = vmatpush2.msra.mxu0 0.0
        %1287 = vmatprep.mubr.f32.mxu0 0.0
        %1288 = vmatmul.mubr.f32.gmra.mxu0 %v1215
        %v1289 = vpop.f32.mrf.mxu0
        %v1290 = vadd.f32 %v1210, %v1289
        %v1291 = vpop.f32.mrf.mxu0
        %v1292 = vadd.f32 %v1212, %v1291
        %1293 = vdwg.mxu0
        %v1294 = vld [vmem:[%s534] sm:$0xff]
        %v1295 = vld [vmem:[%s534 + $0x8] sm:$0xff]
        %v1296 = vld [vmem:[%s534 + $0x10] sm:$0xf]
        %v1297 = vld [vmem:[%s534 + $0x18] sm:$0xf]
        %s1298 = scalar_lea.vmem [#allocation7], 16
        %v1299 = vld [vmem:[%s1298] sm:$0xff]
        %v1301 = vsel %vm1132, %v1299, 0
        %v1304 = vsel %vm1136, %v1296, 0
        %v1307 = vsel %vm1136, %v1297, 0
        %1309 = vmatprep.subr.mxu0 0.0
        %1310 = vmatpush1.msra.mxu0 0.0
        %1311 = vmatprep.subr.mxu0 0.0
        %1312 = vmatpush1.msra.mxu0 0.0
        %1313 = vmatprep.subr.mxu0 0.0
        %1314 = vmatpush1.msra.mxu0 0.0
        %1315 = vmatprep.subr.mxu0 0.0
        %1316 = vmatpush1.msra.mxu0 0.0
        %1317 = vmatprep.subr.mxu0 0.0
        %1318 = vmatpush1.msra.mxu0 0.0
        %1319 = vmatprep.subr.mxu0 0.0
        %1320 = vmatpush1.msra.mxu0 0.0
        %1321 = vmatprep.subr.mxu0 0.0
        %1322 = vmatpush1.msra.mxu0 0.0
        %1323 = vmatprep.subr.mxu0 0.0
        %1324 = vmatpush1.msra.mxu0 0.0
        %1325 = vmatprep.subr.mxu0 0.0
        %1326 = vmatpush1.msra.mxu0 0.0
        %1327 = vmatprep.subr.mxu0 0.0
        %1328 = vmatpush1.msra.mxu0 0.0
        %1329 = vmatprep.subr.mxu0 0.0
        %1330 = vmatpush1.msra.mxu0 0.0
        %1331 = vmatprep.subr.mxu0 0.0
        %1332 = vmatpush1.msra.mxu0 0.0
        %1333 = vmatprep.subr.mxu0 0.0
        %1334 = vmatpush1.msra.mxu0 0.0
        %1335 = vmatprep.subr.mxu0 0.0
        %1336 = vmatpush1.msra.mxu0 0.0
        %1337 = vmatprep.subr.mxu0 %v1307
        %1338 = vmatpush1.msra.mxu0 %v1304
        %1339 = vmatprep.subr.mxu0 %v1295
        %1340 = vmatpush1.msra.mxu0 %v1294
        %1341 = vmatprep.subr.mxu0 0.0
        %1342 = vmatpush2.msra.mxu0 0.0
        %1343 = vmatprep.subr.mxu0 0.0
        %1344 = vmatpush2.msra.mxu0 0.0
        %1345 = vmatprep.subr.mxu0 0.0
        %1346 = vmatpush2.msra.mxu0 0.0
        %1347 = vmatprep.subr.mxu0 0.0
        %1348 = vmatpush2.msra.mxu0 0.0
        %1349 = vmatprep.subr.mxu0 0.0
        %1350 = vmatpush2.msra.mxu0 0.0
        %1351 = vmatprep.subr.mxu0 0.0
        %1352 = vmatpush2.msra.mxu0 0.0
        %1353 = vmatprep.subr.mxu0 0.0
        %1354 = vmatpush2.msra.mxu0 0.0
        %1355 = vmatprep.subr.mxu0 0.0
        %1356 = vmatpush2.msra.mxu0 0.0
        %1357 = vmatprep.subr.mxu0 0.0
        %1358 = vmatpush2.msra.mxu0 0.0
        %1359 = vmatprep.subr.mxu0 0.0
        %1360 = vmatpush2.msra.mxu0 0.0
        %1361 = vmatprep.subr.mxu0 0.0
        %1362 = vmatpush2.msra.mxu0 0.0
        %1363 = vmatprep.subr.mxu0 0.0
        %1364 = vmatpush2.msra.mxu0 0.0
        %1365 = vmatprep.subr.mxu0 0.0
        %1366 = vmatpush2.msra.mxu0 0.0
        %1367 = vmatprep.subr.mxu0 0.0
        %1368 = vmatpush2.msra.mxu0 0.0
        %1369 = vmatprep.subr.mxu0 0.0
        %1370 = vmatpush2.msra.mxu0 0.0
        %1371 = vmatprep.subr.mxu0 0.0
        %1372 = vmatpush2.msra.mxu0 0.0
        %1373 = vmatprep.mubr.f32.mxu0 0.0
        %1374 = vmatmul.mubr.f32.gmra.mxu0 %v1301
        %v1375 = vpop.f32.mrf.mxu0
        %v1376 = vadd.f32 0.0, %v1375
        %v1377 = vpop.f32.mrf.mxu0
        %v1378 = vadd.f32 0.0, %v1377
        %1379 = vdwg.mxu0
        %v1380 = vadd.f32 %v1290, %v1376
        %v1381 = vadd.f32 %v1292, %v1378
        %v1382 = vld [vmem:[%s631] sm:$0xff]
        %v1383 = vld [vmem:[%s631 + $0x8] sm:$0xff]
        %v1384 = vld [vmem:[%s631 + $0x10] sm:$0xf]
        %v1385 = vld [vmem:[%s631 + $0x18] sm:$0xf]
        %s1386 = scalar_lea.vmem [#allocation7], 24
        %v1387 = vld [vmem:[%s1386] sm:$0xff]
        %v1389 = vsel %vm1132, %v1387, 0
        %v1392 = vsel %vm1136, %v1384, 0
        %v1395 = vsel %vm1136, %v1385, 0
        %1397 = vmatprep.subr.mxu0 0.0
        %1398 = vmatpush1.msra.mxu0 0.0
        %1399 = vmatprep.subr.mxu0 0.0
        %1400 = vmatpush1.msra.mxu0 0.0
        %1401 = vmatprep.subr.mxu0 0.0
        %1402 = vmatpush1.msra.mxu0 0.0
        %1403 = vmatprep.subr.mxu0 0.0
        %1404 = vmatpush1.msra.mxu0 0.0
        %1405 = vmatprep.subr.mxu0 0.0
        %1406 = vmatpush1.msra.mxu0 0.0
        %1407 = vmatprep.subr.mxu0 0.0
        %1408 = vmatpush1.msra.mxu0 0.0
        %1409 = vmatprep.subr.mxu0 0.0
        %1410 = vmatpush1.msra.mxu0 0.0
        %1411 = vmatprep.subr.mxu0 0.0
        %1412 = vmatpush1.msra.mxu0 0.0
        %1413 = vmatprep.subr.mxu0 0.0
        %1414 = vmatpush1.msra.mxu0 0.0
        %1415 = vmatprep.subr.mxu0 0.0
        %1416 = vmatpush1.msra.mxu0 0.0
        %1417 = vmatprep.subr.mxu0 0.0
        %1418 = vmatpush1.msra.mxu0 0.0
        %1419 = vmatprep.subr.mxu0 0.0
        %1420 = vmatpush1.msra.mxu0 0.0
        %1421 = vmatprep.subr.mxu0 0.0
        %1422 = vmatpush1.msra.mxu0 0.0
        %1423 = vmatprep.subr.mxu0 0.0
        %1424 = vmatpush1.msra.mxu0 0.0
        %1425 = vmatprep.subr.mxu0 %v1395
        %1426 = vmatpush1.msra.mxu0 %v1392
        %1427 = vmatprep.subr.mxu0 %v1383
        %1428 = vmatpush1.msra.mxu0 %v1382
        %1429 = vmatprep.subr.mxu0 0.0
        %1430 = vmatpush2.msra.mxu0 0.0
        %1431 = vmatprep.subr.mxu0 0.0
        %1432 = vmatpush2.msra.mxu0 0.0
        %1433 = vmatprep.subr.mxu0 0.0
        %1434 = vmatpush2.msra.mxu0 0.0
        %1435 = vmatprep.subr.mxu0 0.0
        %1436 = vmatpush2.msra.mxu0 0.0
        %1437 = vmatprep.subr.mxu0 0.0
        %1438 = vmatpush2.msra.mxu0 0.0
        %1439 = vmatprep.subr.mxu0 0.0
        %1440 = vmatpush2.msra.mxu0 0.0
        %1441 = vmatprep.subr.mxu0 0.0
        %1442 = vmatpush2.msra.mxu0 0.0
        %1443 = vmatprep.subr.mxu0 0.0
        %1444 = vmatpush2.msra.mxu0 0.0
        %1445 = vmatprep.subr.mxu0 0.0
        %1446 = vmatpush2.msra.mxu0 0.0
        %1447 = vmatprep.subr.mxu0 0.0
        %1448 = vmatpush2.msra.mxu0 0.0
        %1449 = vmatprep.subr.mxu0 0.0
        %1450 = vmatpush2.msra.mxu0 0.0
        %1451 = vmatprep.subr.mxu0 0.0
        %1452 = vmatpush2.msra.mxu0 0.0
        %1453 = vmatprep.subr.mxu0 0.0
        %1454 = vmatpush2.msra.mxu0 0.0
        %1455 = vmatprep.subr.mxu0 0.0
        %1456 = vmatpush2.msra.mxu0 0.0
        %1457 = vmatprep.subr.mxu0 0.0
        %1458 = vmatpush2.msra.mxu0 0.0
        %1459 = vmatprep.subr.mxu0 0.0
        %1460 = vmatpush2.msra.mxu0 0.0
        %1461 = vmatprep.mubr.f32.mxu0 0.0
        %1462 = vmatmul.mubr.f32.gmra.mxu0 %v1389
        %v1463 = vpop.f32.mrf.mxu0
        %v1464 = vadd.f32 0.0, %v1463
        %v1465 = vpop.f32.mrf.mxu0
        %v1466 = vadd.f32 0.0, %v1465
        %1467 = vdwg.mxu0
        %v1468 = vadd.f32 %v1380, %v1464
        %v1469 = vadd.f32 %v1381, %v1466
        %v1470 = vld [vmem:[%s728] sm:$0xff]
        %v1471 = vld [vmem:[%s728 + $0x8] sm:$0xff]
        %v1472 = vld [vmem:[%s728 + $0x10] sm:$0xf]
        %v1473 = vld [vmem:[%s728 + $0x18] sm:$0xf]
        %s1474 = scalar_lea.vmem [#allocation7], 32
        %v1475 = vld [vmem:[%s1474] sm:$0xff]
        %v1477 = vsel %vm1132, %v1475, 0
        %v1480 = vsel %vm1136, %v1472, 0
        %v1483 = vsel %vm1136, %v1473, 0
        %1485 = vmatprep.subr.mxu0 0.0
        %1486 = vmatpush1.msra.mxu0 0.0
        %1487 = vmatprep.subr.mxu0 0.0
        %1488 = vmatpush1.msra.mxu0 0.0
        %1489 = vmatprep.subr.mxu0 0.0
        %1490 = vmatpush1.msra.mxu0 0.0
        %1491 = vmatprep.subr.mxu0 0.0
        %1492 = vmatpush1.msra.mxu0 0.0
        %1493 = vmatprep.subr.mxu0 0.0
        %1494 = vmatpush1.msra.mxu0 0.0
        %1495 = vmatprep.subr.mxu0 0.0
        %1496 = vmatpush1.msra.mxu0 0.0
        %1497 = vmatprep.subr.mxu0 0.0
        %1498 = vmatpush1.msra.mxu0 0.0
        %1499 = vmatprep.subr.mxu0 0.0
        %1500 = vmatpush1.msra.mxu0 0.0
        %1501 = vmatprep.subr.mxu0 0.0
        %1502 = vmatpush1.msra.mxu0 0.0
        %1503 = vmatprep.subr.mxu0 0.0
        %1504 = vmatpush1.msra.mxu0 0.0
        %1505 = vmatprep.subr.mxu0 0.0
        %1506 = vmatpush1.msra.mxu0 0.0
        %1507 = vmatprep.subr.mxu0 0.0
        %1508 = vmatpush1.msra.mxu0 0.0
        %1509 = vmatprep.subr.mxu0 0.0
        %1510 = vmatpush1.msra.mxu0 0.0
        %1511 = vmatprep.subr.mxu0 0.0
        %1512 = vmatpush1.msra.mxu0 0.0
        %1513 = vmatprep.subr.mxu0 %v1483
        %1514 = vmatpush1.msra.mxu0 %v1480
        %1515 = vmatprep.subr.mxu0 %v1471
        %1516 = vmatpush1.msra.mxu0 %v1470
        %1517 = vmatprep.subr.mxu0 0.0
        %1518 = vmatpush2.msra.mxu0 0.0
        %1519 = vmatprep.subr.mxu0 0.0
        %1520 = vmatpush2.msra.mxu0 0.0
        %1521 = vmatprep.subr.mxu0 0.0
        %1522 = vmatpush2.msra.mxu0 0.0
        %1523 = vmatprep.subr.mxu0 0.0
        %1524 = vmatpush2.msra.mxu0 0.0
        %1525 = vmatprep.subr.mxu0 0.0
        %1526 = vmatpush2.msra.mxu0 0.0
        %1527 = vmatprep.subr.mxu0 0.0
        %1528 = vmatpush2.msra.mxu0 0.0
        %1529 = vmatprep.subr.mxu0 0.0
        %1530 = vmatpush2.msra.mxu0 0.0
        %1531 = vmatprep.subr.mxu0 0.0
        %1532 = vmatpush2.msra.mxu0 0.0
        %1533 = vmatprep.subr.mxu0 0.0
        %1534 = vmatpush2.msra.mxu0 0.0
        %1535 = vmatprep.subr.mxu0 0.0
        %1536 = vmatpush2.msra.mxu0 0.0
        %1537 = vmatprep.subr.mxu0 0.0
        %1538 = vmatpush2.msra.mxu0 0.0
        %1539 = vmatprep.subr.mxu0 0.0
        %1540 = vmatpush2.msra.mxu0 0.0
        %1541 = vmatprep.subr.mxu0 0.0
        %1542 = vmatpush2.msra.mxu0 0.0
        %1543 = vmatprep.subr.mxu0 0.0
        %1544 = vmatpush2.msra.mxu0 0.0
        %1545 = vmatprep.subr.mxu0 0.0
        %1546 = vmatpush2.msra.mxu0 0.0
        %1547 = vmatprep.subr.mxu0 0.0
        %1548 = vmatpush2.msra.mxu0 0.0
        %1549 = vmatprep.mubr.f32.mxu0 0.0
        %1550 = vmatmul.mubr.f32.gmra.mxu0 %v1477
        %v1551 = vpop.f32.mrf.mxu0
        %v1552 = vadd.f32 0.0, %v1551
        %v1553 = vpop.f32.mrf.mxu0
        %v1554 = vadd.f32 0.0, %v1553
        %1555 = vdwg.mxu0
        %v1556 = vadd.f32 %v1468, %v1552
        %v1557 = vadd.f32 %v1469, %v1554
        %v1558 = vld [vmem:[%s825] sm:$0xff]
        %v1559 = vld [vmem:[%s825 + $0x8] sm:$0xff]
        %v1560 = vld [vmem:[%s825 + $0x10] sm:$0xf]
        %v1561 = vld [vmem:[%s825 + $0x18] sm:$0xf]
        %s1562 = scalar_lea.vmem [#allocation7], 40
        %v1563 = vld [vmem:[%s1562] sm:$0xff]
        %v1565 = vsel %vm1132, %v1563, 0
        %v1568 = vsel %vm1136, %v1560, 0
        %v1571 = vsel %vm1136, %v1561, 0
        %1573 = vmatprep.subr.mxu0 0.0
        %1574 = vmatpush1.msra.mxu0 0.0
        %1575 = vmatprep.subr.mxu0 0.0
        %1576 = vmatpush1.msra.mxu0 0.0
        %1577 = vmatprep.subr.mxu0 0.0
        %1578 = vmatpush1.msra.mxu0 0.0
        %1579 = vmatprep.subr.mxu0 0.0
        %1580 = vmatpush1.msra.mxu0 0.0
        %1581 = vmatprep.subr.mxu0 0.0
        %1582 = vmatpush1.msra.mxu0 0.0
        %1583 = vmatprep.subr.mxu0 0.0
        %1584 = vmatpush1.msra.mxu0 0.0
        %1585 = vmatprep.subr.mxu0 0.0
        %1586 = vmatpush1.msra.mxu0 0.0
        %1587 = vmatprep.subr.mxu0 0.0
        %1588 = vmatpush1.msra.mxu0 0.0
        %1589 = vmatprep.subr.mxu0 0.0
        %1590 = vmatpush1.msra.mxu0 0.0
        %1591 = vmatprep.subr.mxu0 0.0
        %1592 = vmatpush1.msra.mxu0 0.0
        %1593 = vmatprep.subr.mxu0 0.0
        %1594 = vmatpush1.msra.mxu0 0.0
        %1595 = vmatprep.subr.mxu0 0.0
        %1596 = vmatpush1.msra.mxu0 0.0
        %1597 = vmatprep.subr.mxu0 0.0
        %1598 = vmatpush1.msra.mxu0 0.0
        %1599 = vmatprep.subr.mxu0 0.0
        %1600 = vmatpush1.msra.mxu0 0.0
        %1601 = vmatprep.subr.mxu0 %v1571
        %1602 = vmatpush1.msra.mxu0 %v1568
        %1603 = vmatprep.subr.mxu0 %v1559
        %1604 = vmatpush1.msra.mxu0 %v1558
        %1605 = vmatprep.subr.mxu0 0.0
        %1606 = vmatpush2.msra.mxu0 0.0
        %1607 = vmatprep.subr.mxu0 0.0
        %1608 = vmatpush2.msra.mxu0 0.0
        %1609 = vmatprep.subr.mxu0 0.0
        %1610 = vmatpush2.msra.mxu0 0.0
        %1611 = vmatprep.subr.mxu0 0.0
        %1612 = vmatpush2.msra.mxu0 0.0
        %1613 = vmatprep.subr.mxu0 0.0
        %1614 = vmatpush2.msra.mxu0 0.0
        %1615 = vmatprep.subr.mxu0 0.0
        %1616 = vmatpush2.msra.mxu0 0.0
        %1617 = vmatprep.subr.mxu0 0.0
        %1618 = vmatpush2.msra.mxu0 0.0
        %1619 = vmatprep.subr.mxu0 0.0
        %1620 = vmatpush2.msra.mxu0 0.0
        %1621 = vmatprep.subr.mxu0 0.0
        %1622 = vmatpush2.msra.mxu0 0.0
        %1623 = vmatprep.subr.mxu0 0.0
        %1624 = vmatpush2.msra.mxu0 0.0
        %1625 = vmatprep.subr.mxu0 0.0
        %1626 = vmatpush2.msra.mxu0 0.0
        %1627 = vmatprep.subr.mxu0 0.0
        %1628 = vmatpush2.msra.mxu0 0.0
        %1629 = vmatprep.subr.mxu0 0.0
        %1630 = vmatpush2.msra.mxu0 0.0
        %1631 = vmatprep.subr.mxu0 0.0
        %1632 = vmatpush2.msra.mxu0 0.0
        %1633 = vmatprep.subr.mxu0 0.0
        %1634 = vmatpush2.msra.mxu0 0.0
        %1635 = vmatprep.subr.mxu0 0.0
        %1636 = vmatpush2.msra.mxu0 0.0
        %1637 = vmatprep.mubr.f32.mxu0 0.0
        %1638 = vmatmul.mubr.f32.gmra.mxu0 %v1565
        %v1639 = vpop.f32.mrf.mxu0
        %v1640 = vadd.f32 0.0, %v1639
        %v1641 = vpop.f32.mrf.mxu0
        %v1642 = vadd.f32 0.0, %v1641
        %1643 = vdwg.mxu0
        %v1644 = vadd.f32 %v1556, %v1640
        %v1645 = vadd.f32 %v1557, %v1642
        %v1646 = vld [vmem:[%s922] sm:$0xff]
        %v1647 = vld [vmem:[%s922 + $0x8] sm:$0xff]
        %v1648 = vld [vmem:[%s922 + $0x10] sm:$0xf]
        %v1649 = vld [vmem:[%s922 + $0x18] sm:$0xf]
        %s1650 = scalar_lea.vmem [#allocation7], 48
        %v1651 = vld [vmem:[%s1650] sm:$0xff]
        %v1653 = vsel %vm1132, %v1651, 0
        %v1656 = vsel %vm1136, %v1648, 0
        %v1659 = vsel %vm1136, %v1649, 0
        %1661 = vmatprep.subr.mxu0 0.0
        %1662 = vmatpush1.msra.mxu0 0.0
        %1663 = vmatprep.subr.mxu0 0.0
        %1664 = vmatpush1.msra.mxu0 0.0
        %1665 = vmatprep.subr.mxu0 0.0
        %1666 = vmatpush1.msra.mxu0 0.0
        %1667 = vmatprep.subr.mxu0 0.0
        %1668 = vmatpush1.msra.mxu0 0.0
        %1669 = vmatprep.subr.mxu0 0.0
        %1670 = vmatpush1.msra.mxu0 0.0
        %1671 = vmatprep.subr.mxu0 0.0
        %1672 = vmatpush1.msra.mxu0 0.0
        %1673 = vmatprep.subr.mxu0 0.0
        %1674 = vmatpush1.msra.mxu0 0.0
        %1675 = vmatprep.subr.mxu0 0.0
        %1676 = vmatpush1.msra.mxu0 0.0
        %1677 = vmatprep.subr.mxu0 0.0
        %1678 = vmatpush1.msra.mxu0 0.0
        %1679 = vmatprep.subr.mxu0 0.0
        %1680 = vmatpush1.msra.mxu0 0.0
        %1681 = vmatprep.subr.mxu0 0.0
        %1682 = vmatpush1.msra.mxu0 0.0
        %1683 = vmatprep.subr.mxu0 0.0
        %1684 = vmatpush1.msra.mxu0 0.0
        %1685 = vmatprep.subr.mxu0 0.0
        %1686 = vmatpush1.msra.mxu0 0.0
        %1687 = vmatprep.subr.mxu0 0.0
        %1688 = vmatpush1.msra.mxu0 0.0
        %1689 = vmatprep.subr.mxu0 %v1659
        %1690 = vmatpush1.msra.mxu0 %v1656
        %1691 = vmatprep.subr.mxu0 %v1647
        %1692 = vmatpush1.msra.mxu0 %v1646
        %1693 = vmatprep.subr.mxu0 0.0
        %1694 = vmatpush2.msra.mxu0 0.0
        %1695 = vmatprep.subr.mxu0 0.0
        %1696 = vmatpush2.msra.mxu0 0.0
        %1697 = vmatprep.subr.mxu0 0.0
        %1698 = vmatpush2.msra.mxu0 0.0
        %1699 = vmatprep.subr.mxu0 0.0
        %1700 = vmatpush2.msra.mxu0 0.0
        %1701 = vmatprep.subr.mxu0 0.0
        %1702 = vmatpush2.msra.mxu0 0.0
        %1703 = vmatprep.subr.mxu0 0.0
        %1704 = vmatpush2.msra.mxu0 0.0
        %1705 = vmatprep.subr.mxu0 0.0
        %1706 = vmatpush2.msra.mxu0 0.0
        %1707 = vmatprep.subr.mxu0 0.0
        %1708 = vmatpush2.msra.mxu0 0.0
        %1709 = vmatprep.subr.mxu0 0.0
        %1710 = vmatpush2.msra.mxu0 0.0
        %1711 = vmatprep.subr.mxu0 0.0
        %1712 = vmatpush2.msra.mxu0 0.0
        %1713 = vmatprep.subr.mxu0 0.0
        %1714 = vmatpush2.msra.mxu0 0.0
        %1715 = vmatprep.subr.mxu0 0.0
        %1716 = vmatpush2.msra.mxu0 0.0
        %1717 = vmatprep.subr.mxu0 0.0
        %1718 = vmatpush2.msra.mxu0 0.0
        %1719 = vmatprep.subr.mxu0 0.0
        %1720 = vmatpush2.msra.mxu0 0.0
        %1721 = vmatprep.subr.mxu0 0.0
        %1722 = vmatpush2.msra.mxu0 0.0
        %1723 = vmatprep.subr.mxu0 0.0
        %1724 = vmatpush2.msra.mxu0 0.0
        %1725 = vmatprep.mubr.f32.mxu0 0.0
        %1726 = vmatmul.mubr.f32.gmra.mxu0 %v1653
        %v1727 = vpop.f32.mrf.mxu0
        %v1728 = vadd.f32 0.0, %v1727
        %v1729 = vpop.f32.mrf.mxu0
        %v1730 = vadd.f32 0.0, %v1729
        %1731 = vdwg.mxu0
        %v1732 = vadd.f32 %v1644, %v1728
        %v1733 = vadd.f32 %v1645, %v1730
        %v1734 = vld [vmem:[%s1019] sm:$0xff]
        %v1735 = vld [vmem:[%s1019 + $0x8] sm:$0xff]
        %v1736 = vld [vmem:[%s1019 + $0x10] sm:$0xf]
        %v1737 = vld [vmem:[%s1019 + $0x18] sm:$0xf]
        %s1738 = scalar_lea.vmem [#allocation7], 56
        %v1739 = vld [vmem:[%s1738] sm:$0xff]
        %v1741 = vsel %vm1132, %v1739, 0
        %v1744 = vsel %vm1136, %v1736, 0
        %v1747 = vsel %vm1136, %v1737, 0
        %1749 = vmatprep.subr.mxu0 0.0
        %1750 = vmatpush1.msra.mxu0 0.0
        %1751 = vmatprep.subr.mxu0 0.0
        %1752 = vmatpush1.msra.mxu0 0.0
        %1753 = vmatprep.subr.mxu0 0.0
        %1754 = vmatpush1.msra.mxu0 0.0
        %1755 = vmatprep.subr.mxu0 0.0
        %1756 = vmatpush1.msra.mxu0 0.0
        %1757 = vmatprep.subr.mxu0 0.0
        %1758 = vmatpush1.msra.mxu0 0.0
        %1759 = vmatprep.subr.mxu0 0.0
        %1760 = vmatpush1.msra.mxu0 0.0
        %1761 = vmatprep.subr.mxu0 0.0
        %1762 = vmatpush1.msra.mxu0 0.0
        %1763 = vmatprep.subr.mxu0 0.0
        %1764 = vmatpush1.msra.mxu0 0.0
        %1765 = vmatprep.subr.mxu0 0.0
        %1766 = vmatpush1.msra.mxu0 0.0
        %1767 = vmatprep.subr.mxu0 0.0
        %1768 = vmatpush1.msra.mxu0 0.0
        %1769 = vmatprep.subr.mxu0 0.0
        %1770 = vmatpush1.msra.mxu0 0.0
        %1771 = vmatprep.subr.mxu0 0.0
        %1772 = vmatpush1.msra.mxu0 0.0
        %1773 = vmatprep.subr.mxu0 0.0
        %1774 = vmatpush1.msra.mxu0 0.0
        %1775 = vmatprep.subr.mxu0 0.0
        %1776 = vmatpush1.msra.mxu0 0.0
        %1777 = vmatprep.subr.mxu0 %v1747
        %1778 = vmatpush1.msra.mxu0 %v1744
        %1779 = vmatprep.subr.mxu0 %v1735
        %1780 = vmatpush1.msra.mxu0 %v1734
        %1781 = vmatprep.subr.mxu0 0.0
        %1782 = vmatpush2.msra.mxu0 0.0
        %1783 = vmatprep.subr.mxu0 0.0
        %1784 = vmatpush2.msra.mxu0 0.0
        %1785 = vmatprep.subr.mxu0 0.0
        %1786 = vmatpush2.msra.mxu0 0.0
        %1787 = vmatprep.subr.mxu0 0.0
        %1788 = vmatpush2.msra.mxu0 0.0
        %1789 = vmatprep.subr.mxu0 0.0
        %1790 = vmatpush2.msra.mxu0 0.0
        %1791 = vmatprep.subr.mxu0 0.0
        %1792 = vmatpush2.msra.mxu0 0.0
        %1793 = vmatprep.subr.mxu0 0.0
        %1794 = vmatpush2.msra.mxu0 0.0
        %1795 = vmatprep.subr.mxu0 0.0
        %1796 = vmatpush2.msra.mxu0 0.0
        %1797 = vmatprep.subr.mxu0 0.0
        %1798 = vmatpush2.msra.mxu0 0.0
        %1799 = vmatprep.subr.mxu0 0.0
        %1800 = vmatpush2.msra.mxu0 0.0
        %1801 = vmatprep.subr.mxu0 0.0
        %1802 = vmatpush2.msra.mxu0 0.0
        %1803 = vmatprep.subr.mxu0 0.0
        %1804 = vmatpush2.msra.mxu0 0.0
        %1805 = vmatprep.subr.mxu0 0.0
        %1806 = vmatpush2.msra.mxu0 0.0
        %1807 = vmatprep.subr.mxu0 0.0
        %1808 = vmatpush2.msra.mxu0 0.0
        %1809 = vmatprep.subr.mxu0 0.0
        %1810 = vmatpush2.msra.mxu0 0.0
        %1811 = vmatprep.subr.mxu0 0.0
        %1812 = vmatpush2.msra.mxu0 0.0
        %1813 = vmatprep.mubr.f32.mxu0 0.0
        %1814 = vmatmul.mubr.f32.gmra.mxu0 %v1741
        %v1815 = vpop.f32.mrf.mxu0
        %v1816 = vadd.f32 0.0, %v1815
        %v1817 = vpop.f32.mrf.mxu0
        %v1818 = vadd.f32 0.0, %v1817
        %1819 = vdwg.mxu0
        %v1820 = vadd.f32 %v1732, %v1816
        %v1821 = vadd.f32 %v1733, %v1818
        %v1822 = vld [vmem:[%s1116] sm:$0xff]
        %v1823 = vld [vmem:[%s1116 + $0x8] sm:$0xff]
        %v1824 = vld [vmem:[%s1116 + $0x10] sm:$0xf]
        %v1825 = vld [vmem:[%s1116 + $0x18] sm:$0xf]
        %s1826 = scalar_lea.vmem [#allocation7], 64
        %v1827 = vld [vmem:[%s1826] sm:$0xff]
        %v1829 = vsel %vm1132, %v1827, 0
        %v1832 = vsel %vm1136, %v1824, 0
        %v1835 = vsel %vm1136, %v1825, 0
        %1837 = vmatprep.subr.mxu0 0.0
        %1838 = vmatpush1.msra.mxu0 0.0
        %1839 = vmatprep.subr.mxu0 0.0
        %1840 = vmatpush1.msra.mxu0 0.0
        %1841 = vmatprep.subr.mxu0 0.0
        %1842 = vmatpush1.msra.mxu0 0.0
        %1843 = vmatprep.subr.mxu0 0.0
        %1844 = vmatpush1.msra.mxu0 0.0
        %1845 = vmatprep.subr.mxu0 0.0
        %1846 = vmatpush1.msra.mxu0 0.0
        %1847 = vmatprep.subr.mxu0 0.0
        %1848 = vmatpush1.msra.mxu0 0.0
        %1849 = vmatprep.subr.mxu0 0.0
        %1850 = vmatpush1.msra.mxu0 0.0
        %1851 = vmatprep.subr.mxu0 0.0
        %1852 = vmatpush1.msra.mxu0 0.0
        %1853 = vmatprep.subr.mxu0 0.0
        %1854 = vmatpush1.msra.mxu0 0.0
        %1855 = vmatprep.subr.mxu0 0.0
        %1856 = vmatpush1.msra.mxu0 0.0
        %1857 = vmatprep.subr.mxu0 0.0
        %1858 = vmatpush1.msra.mxu0 0.0
        %1859 = vmatprep.subr.mxu0 0.0
        %1860 = vmatpush1.msra.mxu0 0.0
        %1861 = vmatprep.subr.mxu0 0.0
        %1862 = vmatpush1.msra.mxu0 0.0
        %1863 = vmatprep.subr.mxu0 0.0
        %1864 = vmatpush1.msra.mxu0 0.0
        %1865 = vmatprep.subr.mxu0 %v1835
        %1866 = vmatpush1.msra.mxu0 %v1832
        %1867 = vmatprep.subr.mxu0 %v1823
        %1868 = vmatpush1.msra.mxu0 %v1822
        %1869 = vmatprep.subr.mxu0 0.0
        %1870 = vmatpush2.msra.mxu0 0.0
        %1871 = vmatprep.subr.mxu0 0.0
        %1872 = vmatpush2.msra.mxu0 0.0
        %1873 = vmatprep.subr.mxu0 0.0
        %1874 = vmatpush2.msra.mxu0 0.0
        %1875 = vmatprep.subr.mxu0 0.0
        %1876 = vmatpush2.msra.mxu0 0.0
        %1877 = vmatprep.subr.mxu0 0.0
        %1878 = vmatpush2.msra.mxu0 0.0
        %1879 = vmatprep.subr.mxu0 0.0
        %1880 = vmatpush2.msra.mxu0 0.0
        %1881 = vmatprep.subr.mxu0 0.0
        %1882 = vmatpush2.msra.mxu0 0.0
        %1883 = vmatprep.subr.mxu0 0.0
        %1884 = vmatpush2.msra.mxu0 0.0
        %1885 = vmatprep.subr.mxu0 0.0
        %1886 = vmatpush2.msra.mxu0 0.0
        %1887 = vmatprep.subr.mxu0 0.0
        %1888 = vmatpush2.msra.mxu0 0.0
        %1889 = vmatprep.subr.mxu0 0.0
        %1890 = vmatpush2.msra.mxu0 0.0
        %1891 = vmatprep.subr.mxu0 0.0
        %1892 = vmatpush2.msra.mxu0 0.0
        %1893 = vmatprep.subr.mxu0 0.0
        %1894 = vmatpush2.msra.mxu0 0.0
        %1895 = vmatprep.subr.mxu0 0.0
        %1896 = vmatpush2.msra.mxu0 0.0
        %1897 = vmatprep.subr.mxu0 0.0
        %1898 = vmatpush2.msra.mxu0 0.0
        %1899 = vmatprep.subr.mxu0 0.0
        %1900 = vmatpush2.msra.mxu0 0.0
        %1901 = vmatprep.mubr.f32.mxu0 0.0
        %1902 = vmatmul.mubr.f32.gmra.mxu0 %v1829
        %v1903 = vpop.f32.mrf.mxu0
        %v1904 = vadd.f32 0.0, %v1903
        %v1905 = vpop.f32.mrf.mxu0
        %v1906 = vadd.f32 0.0, %v1905
        %1907 = vdwg.mxu0
        %v1908 = vadd.f32 %v1820, %v1904
        %v1909 = vadd.f32 %v1821, %v1906
        %v1910 = vpack.c.bf16 %v1908, %v1908
        %v1911 = vpack.c.bf16 %v1909, %v1909
        %v1914 = vunpack.c.l.b16 %v1910
        %v1915 = vunpack.c.l.b16 %v1911
        %v1916 = vpack.c.b16 %v1915, %v1914
        %1918 = vst [vmem:[%s196] sm:$0xff] %v1916
        %v1919 = vadd.f32 %v1908, %v1909
        %1920 = vadd.xlane.f32.xlu0 %v1919
        %v1921 = vpop.xlane.xlu0 %1920
        %v1922 = vadd.f32 %v1921, 0.0
        %v1923 = vmul.f32 %v1908, %v1908
        %v1924 = vmul.f32 %v1909, %v1909
        %v1925 = vadd.f32 %v1923, %v1924
        %1926 = vadd.xlane.f32.xlu0 %v1925
        %v1927 = vpop.xlane.xlu0 %1926
        %v1928 = vadd.f32 %v1927, 0.0
        %v1929 = vld [vmem:[#allocation3] sm:$0xf0]
        %v1930 = vld [vmem:[#allocation3 + $0x8] sm:$0xf0]
        %v1931 = vld [vmem:[#allocation3 + $0x10] sm:$0xff]
        %v1932 = vld [vmem:[#allocation3 + $0x18] sm:$0xff]
        %v1933 = vld [vmem:[#allocation7] sm:$0xff]
        %v1934 = vld [vmem:[%s437] sm:$0xf0]
        %v1935 = vld [vmem:[%s437 + $0x8] sm:$0xf0]
        %v1936 = vld [vmem:[%s437 + $0x10] sm:$0xff]
        %v1937 = vld [vmem:[%s437 + $0x18] sm:$0xff]
        %v1938 = vld [vmem:[%s1130] sm:$0xff]
        %v1943 = vrot.slane %v1934, 4
        %v1944 = vrot.slane %v1936, 4
        %v1945 = vsel %vm1136, %v1943, %v1944
        %v1946 = vrot.slane %v1935, 4
        %v1947 = vrot.slane %v1937, 4
        %v1948 = vsel %vm1136, %v1946, %v1947
        %v1952 = vsel %vm1132, %v1938, 0
        %v1954 = vsel %vm1136, %v1944, 0
        %v1956 = vsel %vm1136, %v1947, 0
        %1958 = vmatprep.subr.mxu0 0.0
        %1959 = vmatpush1.msra.mxu0 0.0
        %1960 = vmatprep.subr.mxu0 0.0
        %1961 = vmatpush1.msra.mxu0 0.0
        %1962 = vmatprep.subr.mxu0 0.0
        %1963 = vmatpush1.msra.mxu0 0.0
        %1964 = vmatprep.subr.mxu0 0.0
        %1965 = vmatpush1.msra.mxu0 0.0
        %1966 = vmatprep.subr.mxu0 0.0
        %1967 = vmatpush1.msra.mxu0 0.0
        %1968 = vmatprep.subr.mxu0 0.0
        %1969 = vmatpush1.msra.mxu0 0.0
        %1970 = vmatprep.subr.mxu0 0.0
        %1971 = vmatpush1.msra.mxu0 0.0
        %1972 = vmatprep.subr.mxu0 0.0
        %1973 = vmatpush1.msra.mxu0 0.0
        %1974 = vmatprep.subr.mxu0 0.0
        %1975 = vmatpush1.msra.mxu0 0.0
        %1976 = vmatprep.subr.mxu0 0.0
        %1977 = vmatpush1.msra.mxu0 0.0
        %1978 = vmatprep.subr.mxu0 0.0
        %1979 = vmatpush1.msra.mxu0 0.0
        %1980 = vmatprep.subr.mxu0 0.0
        %1981 = vmatpush1.msra.mxu0 0.0
        %1982 = vmatprep.subr.mxu0 0.0
        %1983 = vmatpush1.msra.mxu0 0.0
        %1984 = vmatprep.subr.mxu0 0.0
        %1985 = vmatpush1.msra.mxu0 0.0
        %1986 = vmatprep.subr.mxu0 %v1956
        %1987 = vmatpush1.msra.mxu0 %v1954
        %1988 = vmatprep.subr.mxu0 %v1948
        %1989 = vmatpush1.msra.mxu0 %v1945
        %1990 = vmatprep.subr.mxu0 0.0
        %1991 = vmatpush2.msra.mxu0 0.0
        %1992 = vmatprep.subr.mxu0 0.0
        %1993 = vmatpush2.msra.mxu0 0.0
        %1994 = vmatprep.subr.mxu0 0.0
        %1995 = vmatpush2.msra.mxu0 0.0
        %1996 = vmatprep.subr.mxu0 0.0
        %1997 = vmatpush2.msra.mxu0 0.0
        %1998 = vmatprep.subr.mxu0 0.0
        %1999 = vmatpush2.msra.mxu0 0.0
        %2000 = vmatprep.subr.mxu0 0.0
        %2001 = vmatpush2.msra.mxu0 0.0
        %2002 = vmatprep.subr.mxu0 0.0
        %2003 = vmatpush2.msra.mxu0 0.0
        %2004 = vmatprep.subr.mxu0 0.0
        %2005 = vmatpush2.msra.mxu0 0.0
        %2006 = vmatprep.subr.mxu0 0.0
        %2007 = vmatpush2.msra.mxu0 0.0
        %2008 = vmatprep.subr.mxu0 0.0
        %2009 = vmatpush2.msra.mxu0 0.0
        %2010 = vmatprep.subr.mxu0 0.0
        %2011 = vmatpush2.msra.mxu0 0.0
        %2012 = vmatprep.subr.mxu0 0.0
        %2013 = vmatpush2.msra.mxu0 0.0
        %2014 = vmatprep.subr.mxu0 0.0
        %2015 = vmatpush2.msra.mxu0 0.0
        %2016 = vmatprep.subr.mxu0 0.0
        %2017 = vmatpush2.msra.mxu0 0.0
        %2018 = vmatprep.subr.mxu0 0.0
        %2019 = vmatpush2.msra.mxu0 0.0
        %2020 = vmatprep.subr.mxu0 0.0
        %2021 = vmatpush2.msra.mxu0 0.0
        %2022 = vmatprep.mubr.f32.mxu0 0.0
        %2023 = vmatmul.mubr.f32.gmra.mxu0 %v1952
        %v2024 = vpop.f32.mrf.mxu0
        %v2025 = vadd.f32 0.0, %v2024
        %v2026 = vpop.f32.mrf.mxu0
        %v2027 = vadd.f32 0.0, %v2026
        %2028 = vdwg.mxu0
        %v2033 = vrot.slane %v1929, 4
        %v2034 = vrot.slane %v1931, 4
        %v2035 = vsel %vm1136, %v2033, %v2034
        %v2036 = vrot.slane %v1930, 4
        %v2037 = vrot.slane %v1932, 4
        %v2038 = vsel %vm1136, %v2036, %v2037
        %v2042 = vsel %vm1132, %v1933, 0
        %v2044 = vsel %vm1136, %v2034, 0
        %v2046 = vsel %vm1136, %v2037, 0
        %2048 = vmatprep.subr.mxu0 0.0
        %2049 = vmatpush1.msra.mxu0 0.0
        %2050 = vmatprep.subr.mxu0 0.0
        %2051 = vmatpush1.msra.mxu0 0.0
        %2052 = vmatprep.subr.mxu0 0.0
        %2053 = vmatpush1.msra.mxu0 0.0
        %2054 = vmatprep.subr.mxu0 0.0
        %2055 = vmatpush1.msra.mxu0 0.0
        %2056 = vmatprep.subr.mxu0 0.0
        %2057 = vmatpush1.msra.mxu0 0.0
        %2058 = vmatprep.subr.mxu0 0.0
        %2059 = vmatpush1.msra.mxu0 0.0
        %2060 = vmatprep.subr.mxu0 0.0
        %2061 = vmatpush1.msra.mxu0 0.0
        %2062 = vmatprep.subr.mxu0 0.0
        %2063 = vmatpush1.msra.mxu0 0.0
        %2064 = vmatprep.subr.mxu0 0.0
        %2065 = vmatpush1.msra.mxu0 0.0
        %2066 = vmatprep.subr.mxu0 0.0
        %2067 = vmatpush1.msra.mxu0 0.0
        %2068 = vmatprep.subr.mxu0 0.0
        %2069 = vmatpush1.msra.mxu0 0.0
        %2070 = vmatprep.subr.mxu0 0.0
        %2071 = vmatpush1.msra.mxu0 0.0
        %2072 = vmatprep.subr.mxu0 0.0
        %2073 = vmatpush1.msra.mxu0 0.0
        %2074 = vmatprep.subr.mxu0 0.0
        %2075 = vmatpush1.msra.mxu0 0.0
        %2076 = vmatprep.subr.mxu0 %v2046
        %2077 = vmatpush1.msra.mxu0 %v2044
        %2078 = vmatprep.subr.mxu0 %v2038
        %2079 = vmatpush1.msra.mxu0 %v2035
        %2080 = vmatprep.subr.mxu0 0.0
        %2081 = vmatpush2.msra.mxu0 0.0
        %2082 = vmatprep.subr.mxu0 0.0
        %2083 = vmatpush2.msra.mxu0 0.0
        %2084 = vmatprep.subr.mxu0 0.0
        %2085 = vmatpush2.msra.mxu0 0.0
        %2086 = vmatprep.subr.mxu0 0.0
        %2087 = vmatpush2.msra.mxu0 0.0
        %2088 = vmatprep.subr.mxu0 0.0
        %2089 = vmatpush2.msra.mxu0 0.0
        %2090 = vmatprep.subr.mxu0 0.0
        %2091 = vmatpush2.msra.mxu0 0.0
        %2092 = vmatprep.subr.mxu0 0.0
        %2093 = vmatpush2.msra.mxu0 0.0
        %2094 = vmatprep.subr.mxu0 0.0
        %2095 = vmatpush2.msra.mxu0 0.0
        %2096 = vmatprep.subr.mxu0 0.0
        %2097 = vmatpush2.msra.mxu0 0.0
        %2098 = vmatprep.subr.mxu0 0.0
        %2099 = vmatpush2.msra.mxu0 0.0
        %2100 = vmatprep.subr.mxu0 0.0
        %2101 = vmatpush2.msra.mxu0 0.0
        %2102 = vmatprep.subr.mxu0 0.0
        %2103 = vmatpush2.msra.mxu0 0.0
        %2104 = vmatprep.subr.mxu0 0.0
        %2105 = vmatpush2.msra.mxu0 0.0
        %2106 = vmatprep.subr.mxu0 0.0
        %2107 = vmatpush2.msra.mxu0 0.0
        %2108 = vmatprep.subr.mxu0 0.0
        %2109 = vmatpush2.msra.mxu0 0.0
        %2110 = vmatprep.subr.mxu0 0.0
        %2111 = vmatpush2.msra.mxu0 0.0
        %2112 = vmatprep.mubr.f32.mxu0 0.0
        %2113 = vmatmul.mubr.f32.gmra.mxu0 %v2042
        %v2114 = vpop.f32.mrf.mxu0
        %v2115 = vadd.f32 %v2025, %v2114
        %v2116 = vpop.f32.mrf.mxu0
        %v2117 = vadd.f32 %v2027, %v2116
        %2118 = vdwg.mxu0
        %v2119 = vld [vmem:[%s534] sm:$0xf0]
        %v2120 = vld [vmem:[%s534 + $0x8] sm:$0xf0]
        %v2121 = vld [vmem:[%s534 + $0x10] sm:$0xff]
        %v2122 = vld [vmem:[%s534 + $0x18] sm:$0xff]
        %v2123 = vld [vmem:[%s1298] sm:$0xff]
        %v2128 = vrot.slane %v2119, 4
        %v2129 = vrot.slane %v2121, 4
        %v2130 = vsel %vm1136, %v2128, %v2129
        %v2131 = vrot.slane %v2120, 4
        %v2132 = vrot.slane %v2122, 4
        %v2133 = vsel %vm1136, %v2131, %v2132
        %v2137 = vsel %vm1132, %v2123, 0
        %v2139 = vsel %vm1136, %v2129, 0
        %v2141 = vsel %vm1136, %v2132, 0
        %2143 = vmatprep.subr.mxu0 0.0
        %2144 = vmatpush1.msra.mxu0 0.0
        %2145 = vmatprep.subr.mxu0 0.0
        %2146 = vmatpush1.msra.mxu0 0.0
        %2147 = vmatprep.subr.mxu0 0.0
        %2148 = vmatpush1.msra.mxu0 0.0
        %2149 = vmatprep.subr.mxu0 0.0
        %2150 = vmatpush1.msra.mxu0 0.0
        %2151 = vmatprep.subr.mxu0 0.0
        %2152 = vmatpush1.msra.mxu0 0.0
        %2153 = vmatprep.subr.mxu0 0.0
        %2154 = vmatpush1.msra.mxu0 0.0
        %2155 = vmatprep.subr.mxu0 0.0
        %2156 = vmatpush1.msra.mxu0 0.0
        %2157 = vmatprep.subr.mxu0 0.0
        %2158 = vmatpush1.msra.mxu0 0.0
        %2159 = vmatprep.subr.mxu0 0.0
        %2160 = vmatpush1.msra.mxu0 0.0
        %2161 = vmatprep.subr.mxu0 0.0
        %2162 = vmatpush1.msra.mxu0 0.0
        %2163 = vmatprep.subr.mxu0 0.0
        %2164 = vmatpush1.msra.mxu0 0.0
        %2165 = vmatprep.subr.mxu0 0.0
        %2166 = vmatpush1.msra.mxu0 0.0
        %2167 = vmatprep.subr.mxu0 0.0
        %2168 = vmatpush1.msra.mxu0 0.0
        %2169 = vmatprep.subr.mxu0 0.0
        %2170 = vmatpush1.msra.mxu0 0.0
        %2171 = vmatprep.subr.mxu0 %v2141
        %2172 = vmatpush1.msra.mxu0 %v2139
        %2173 = vmatprep.subr.mxu0 %v2133
        %2174 = vmatpush1.msra.mxu0 %v2130
        %2175 = vmatprep.subr.mxu0 0.0
        %2176 = vmatpush2.msra.mxu0 0.0
        %2177 = vmatprep.subr.mxu0 0.0
        %2178 = vmatpush2.msra.mxu0 0.0
        %2179 = vmatprep.subr.mxu0 0.0
        %2180 = vmatpush2.msra.mxu0 0.0
        %2181 = vmatprep.subr.mxu0 0.0
        %2182 = vmatpush2.msra.mxu0 0.0
        %2183 = vmatprep.subr.mxu0 0.0
        %2184 = vmatpush2.msra.mxu0 0.0
        %2185 = vmatprep.subr.mxu0 0.0
        %2186 = vmatpush2.msra.mxu0 0.0
        %2187 = vmatprep.subr.mxu0 0.0
        %2188 = vmatpush2.msra.mxu0 0.0
        %2189 = vmatprep.subr.mxu0 0.0
        %2190 = vmatpush2.msra.mxu0 0.0
        %2191 = vmatprep.subr.mxu0 0.0
        %2192 = vmatpush2.msra.mxu0 0.0
        %2193 = vmatprep.subr.mxu0 0.0
        %2194 = vmatpush2.msra.mxu0 0.0
        %2195 = vmatprep.subr.mxu0 0.0
        %2196 = vmatpush2.msra.mxu0 0.0
        %2197 = vmatprep.subr.mxu0 0.0
        %2198 = vmatpush2.msra.mxu0 0.0
        %2199 = vmatprep.subr.mxu0 0.0
        %2200 = vmatpush2.msra.mxu0 0.0
        %2201 = vmatprep.subr.mxu0 0.0
        %2202 = vmatpush2.msra.mxu0 0.0
        %2203 = vmatprep.subr.mxu0 0.0
        %2204 = vmatpush2.msra.mxu0 0.0
        %2205 = vmatprep.subr.mxu0 0.0
        %2206 = vmatpush2.msra.mxu0 0.0
        %2207 = vmatprep.mubr.f32.mxu0 0.0
        %2208 = vmatmul.mubr.f32.gmra.mxu0 %v2137
        %v2209 = vpop.f32.mrf.mxu0
        %v2210 = vadd.f32 0.0, %v2209
        %v2211 = vpop.f32.mrf.mxu0
        %v2212 = vadd.f32 0.0, %v2211
        %2213 = vdwg.mxu0
        %v2214 = vadd.f32 %v2115, %v2210
        %v2215 = vadd.f32 %v2117, %v2212
        %v2216 = vld [vmem:[%s631] sm:$0xf0]
        %v2217 = vld [vmem:[%s631 + $0x8] sm:$0xf0]
        %v2218 = vld [vmem:[%s631 + $0x10] sm:$0xff]
        %v2219 = vld [vmem:[%s631 + $0x18] sm:$0xff]
        %v2220 = vld [vmem:[%s1386] sm:$0xff]
        %v2225 = vrot.slane %v2216, 4
        %v2226 = vrot.slane %v2218, 4
        %v2227 = vsel %vm1136, %v2225, %v2226
        %v2228 = vrot.slane %v2217, 4
        %v2229 = vrot.slane %v2219, 4
        %v2230 = vsel %vm1136, %v2228, %v2229
        %v2234 = vsel %vm1132, %v2220, 0
        %v2236 = vsel %vm1136, %v2226, 0
        %v2238 = vsel %vm1136, %v2229, 0
        %2240 = vmatprep.subr.mxu0 0.0
        %2241 = vmatpush1.msra.mxu0 0.0
        %2242 = vmatprep.subr.mxu0 0.0
        %2243 = vmatpush1.msra.mxu0 0.0
        %2244 = vmatprep.subr.mxu0 0.0
        %2245 = vmatpush1.msra.mxu0 0.0
        %2246 = vmatprep.subr.mxu0 0.0
        %2247 = vmatpush1.msra.mxu0 0.0
        %2248 = vmatprep.subr.mxu0 0.0
        %2249 = vmatpush1.msra.mxu0 0.0
        %2250 = vmatprep.subr.mxu0 0.0
        %2251 = vmatpush1.msra.mxu0 0.0
        %2252 = vmatprep.subr.mxu0 0.0
        %2253 = vmatpush1.msra.mxu0 0.0
        %2254 = vmatprep.subr.mxu0 0.0
        %2255 = vmatpush1.msra.mxu0 0.0
        %2256 = vmatprep.subr.mxu0 0.0
        %2257 = vmatpush1.msra.mxu0 0.0
        %2258 = vmatprep.subr.mxu0 0.0
        %2259 = vmatpush1.msra.mxu0 0.0
        %2260 = vmatprep.subr.mxu0 0.0
        %2261 = vmatpush1.msra.mxu0 0.0
        %2262 = vmatprep.subr.mxu0 0.0
        %2263 = vmatpush1.msra.mxu0 0.0
        %2264 = vmatprep.subr.mxu0 0.0
        %2265 = vmatpush1.msra.mxu0 0.0
        %2266 = vmatprep.subr.mxu0 0.0
        %2267 = vmatpush1.msra.mxu0 0.0
        %2268 = vmatprep.subr.mxu0 %v2238
        %2269 = vmatpush1.msra.mxu0 %v2236
        %2270 = vmatprep.subr.mxu0 %v2230
        %2271 = vmatpush1.msra.mxu0 %v2227
        %2272 = vmatprep.subr.mxu0 0.0
        %2273 = vmatpush2.msra.mxu0 0.0
        %2274 = vmatprep.subr.mxu0 0.0
        %2275 = vmatpush2.msra.mxu0 0.0
        %2276 = vmatprep.subr.mxu0 0.0
        %2277 = vmatpush2.msra.mxu0 0.0
        %2278 = vmatprep.subr.mxu0 0.0
        %2279 = vmatpush2.msra.mxu0 0.0
        %2280 = vmatprep.subr.mxu0 0.0
        %2281 = vmatpush2.msra.mxu0 0.0
        %2282 = vmatprep.subr.mxu0 0.0
        %2283 = vmatpush2.msra.mxu0 0.0
        %2284 = vmatprep.subr.mxu0 0.0
        %2285 = vmatpush2.msra.mxu0 0.0
        %2286 = vmatprep.subr.mxu0 0.0
        %2287 = vmatpush2.msra.mxu0 0.0
        %2288 = vmatprep.subr.mxu0 0.0
        %2289 = vmatpush2.msra.mxu0 0.0
        %2290 = vmatprep.subr.mxu0 0.0
        %2291 = vmatpush2.msra.mxu0 0.0
        %2292 = vmatprep.subr.mxu0 0.0
        %2293 = vmatpush2.msra.mxu0 0.0
        %2294 = vmatprep.subr.mxu0 0.0
        %2295 = vmatpush2.msra.mxu0 0.0
        %2296 = vmatprep.subr.mxu0 0.0
        %2297 = vmatpush2.msra.mxu0 0.0
        %2298 = vmatprep.subr.mxu0 0.0
        %2299 = vmatpush2.msra.mxu0 0.0
        %2300 = vmatprep.subr.mxu0 0.0
        %2301 = vmatpush2.msra.mxu0 0.0
        %2302 = vmatprep.subr.mxu0 0.0
        %2303 = vmatpush2.msra.mxu0 0.0
        %2304 = vmatprep.mubr.f32.mxu0 0.0
        %2305 = vmatmul.mubr.f32.gmra.mxu0 %v2234
        %v2306 = vpop.f32.mrf.mxu0
        %v2307 = vadd.f32 0.0, %v2306
        %v2308 = vpop.f32.mrf.mxu0
        %v2309 = vadd.f32 0.0, %v2308
        %2310 = vdwg.mxu0
        %v2311 = vadd.f32 %v2214, %v2307
        %v2312 = vadd.f32 %v2215, %v2309
        %v2313 = vld [vmem:[%s728] sm:$0xf0]
        %v2314 = vld [vmem:[%s728 + $0x8] sm:$0xf0]
        %v2315 = vld [vmem:[%s728 + $0x10] sm:$0xff]
        %v2316 = vld [vmem:[%s728 + $0x18] sm:$0xff]
        %v2317 = vld [vmem:[%s1474] sm:$0xff]
        %v2322 = vrot.slane %v2313, 4
        %v2323 = vrot.slane %v2315, 4
        %v2324 = vsel %vm1136, %v2322, %v2323
        %v2325 = vrot.slane %v2314, 4
        %v2326 = vrot.slane %v2316, 4
        %v2327 = vsel %vm1136, %v2325, %v2326
        %v2331 = vsel %vm1132, %v2317, 0
        %v2333 = vsel %vm1136, %v2323, 0
        %v2335 = vsel %vm1136, %v2326, 0
        %2337 = vmatprep.subr.mxu0 0.0
        %2338 = vmatpush1.msra.mxu0 0.0
        %2339 = vmatprep.subr.mxu0 0.0
        %2340 = vmatpush1.msra.mxu0 0.0
        %2341 = vmatprep.subr.mxu0 0.0
        %2342 = vmatpush1.msra.mxu0 0.0
        %2343 = vmatprep.subr.mxu0 0.0
        %2344 = vmatpush1.msra.mxu0 0.0
        %2345 = vmatprep.subr.mxu0 0.0
        %2346 = vmatpush1.msra.mxu0 0.0
        %2347 = vmatprep.subr.mxu0 0.0
        %2348 = vmatpush1.msra.mxu0 0.0
        %2349 = vmatprep.subr.mxu0 0.0
        %2350 = vmatpush1.msra.mxu0 0.0
        %2351 = vmatprep.subr.mxu0 0.0
        %2352 = vmatpush1.msra.mxu0 0.0
        %2353 = vmatprep.subr.mxu0 0.0
        %2354 = vmatpush1.msra.mxu0 0.0
        %2355 = vmatprep.subr.mxu0 0.0
        %2356 = vmatpush1.msra.mxu0 0.0
        %2357 = vmatprep.subr.mxu0 0.0
        %2358 = vmatpush1.msra.mxu0 0.0
        %2359 = vmatprep.subr.mxu0 0.0
        %2360 = vmatpush1.msra.mxu0 0.0
        %2361 = vmatprep.subr.mxu0 0.0
        %2362 = vmatpush1.msra.mxu0 0.0
        %2363 = vmatprep.subr.mxu0 0.0
        %2364 = vmatpush1.msra.mxu0 0.0
        %2365 = vmatprep.subr.mxu0 %v2335
        %2366 = vmatpush1.msra.mxu0 %v2333
        %2367 = vmatprep.subr.mxu0 %v2327
        %2368 = vmatpush1.msra.mxu0 %v2324
        %2369 = vmatprep.subr.mxu0 0.0
        %2370 = vmatpush2.msra.mxu0 0.0
        %2371 = vmatprep.subr.mxu0 0.0
        %2372 = vmatpush2.msra.mxu0 0.0
        %2373 = vmatprep.subr.mxu0 0.0
        %2374 = vmatpush2.msra.mxu0 0.0
        %2375 = vmatprep.subr.mxu0 0.0
        %2376 = vmatpush2.msra.mxu0 0.0
        %2377 = vmatprep.subr.mxu0 0.0
        %2378 = vmatpush2.msra.mxu0 0.0
        %2379 = vmatprep.subr.mxu0 0.0
        %2380 = vmatpush2.msra.mxu0 0.0
        %2381 = vmatprep.subr.mxu0 0.0
        %2382 = vmatpush2.msra.mxu0 0.0
        %2383 = vmatprep.subr.mxu0 0.0
        %2384 = vmatpush2.msra.mxu0 0.0
        %2385 = vmatprep.subr.mxu0 0.0
        %2386 = vmatpush2.msra.mxu0 0.0
        %2387 = vmatprep.subr.mxu0 0.0
        %2388 = vmatpush2.msra.mxu0 0.0
        %2389 = vmatprep.subr.mxu0 0.0
        %2390 = vmatpush2.msra.mxu0 0.0
        %2391 = vmatprep.subr.mxu0 0.0
        %2392 = vmatpush2.msra.mxu0 0.0
        %2393 = vmatprep.subr.mxu0 0.0
        %2394 = vmatpush2.msra.mxu0 0.0
        %2395 = vmatprep.subr.mxu0 0.0
        %2396 = vmatpush2.msra.mxu0 0.0
        %2397 = vmatprep.subr.mxu0 0.0
        %2398 = vmatpush2.msra.mxu0 0.0
        %2399 = vmatprep.subr.mxu0 0.0
        %2400 = vmatpush2.msra.mxu0 0.0
        %2401 = vmatprep.mubr.f32.mxu0 0.0
        %2402 = vmatmul.mubr.f32.gmra.mxu0 %v2331
        %v2403 = vpop.f32.mrf.mxu0
        %v2404 = vadd.f32 0.0, %v2403
        %v2405 = vpop.f32.mrf.mxu0
        %v2406 = vadd.f32 0.0, %v2405
        %2407 = vdwg.mxu0
        %v2408 = vadd.f32 %v2311, %v2404
        %v2409 = vadd.f32 %v2312, %v2406
        %v2410 = vld [vmem:[%s825] sm:$0xf0]
        %v2411 = vld [vmem:[%s825 + $0x8] sm:$0xf0]
        %v2412 = vld [vmem:[%s825 + $0x10] sm:$0xff]
        %v2413 = vld [vmem:[%s825 + $0x18] sm:$0xff]
        %v2414 = vld [vmem:[%s1562] sm:$0xff]
        %v2419 = vrot.slane %v2410, 4
        %v2420 = vrot.slane %v2412, 4
        %v2421 = vsel %vm1136, %v2419, %v2420
        %v2422 = vrot.slane %v2411, 4
        %v2423 = vrot.slane %v2413, 4
        %v2424 = vsel %vm1136, %v2422, %v2423
        %v2428 = vsel %vm1132, %v2414, 0
        %v2430 = vsel %vm1136, %v2420, 0
        %v2432 = vsel %vm1136, %v2423, 0
        %2434 = vmatprep.subr.mxu0 0.0
        %2435 = vmatpush1.msra.mxu0 0.0
        %2436 = vmatprep.subr.mxu0 0.0
        %2437 = vmatpush1.msra.mxu0 0.0
        %2438 = vmatprep.subr.mxu0 0.0
        %2439 = vmatpush1.msra.mxu0 0.0
        %2440 = vmatprep.subr.mxu0 0.0
        %2441 = vmatpush1.msra.mxu0 0.0
        %2442 = vmatprep.subr.mxu0 0.0
        %2443 = vmatpush1.msra.mxu0 0.0
        %2444 = vmatprep.subr.mxu0 0.0
        %2445 = vmatpush1.msra.mxu0 0.0
        %2446 = vmatprep.subr.mxu0 0.0
        %2447 = vmatpush1.msra.mxu0 0.0
        %2448 = vmatprep.subr.mxu0 0.0
        %2449 = vmatpush1.msra.mxu0 0.0
        %2450 = vmatprep.subr.mxu0 0.0
        %2451 = vmatpush1.msra.mxu0 0.0
        %2452 = vmatprep.subr.mxu0 0.0
        %2453 = vmatpush1.msra.mxu0 0.0
        %2454 = vmatprep.subr.mxu0 0.0
        %2455 = vmatpush1.msra.mxu0 0.0
        %2456 = vmatprep.subr.mxu0 0.0
        %2457 = vmatpush1.msra.mxu0 0.0
        %2458 = vmatprep.subr.mxu0 0.0
        %2459 = vmatpush1.msra.mxu0 0.0
        %2460 = vmatprep.subr.mxu0 0.0
        %2461 = vmatpush1.msra.mxu0 0.0
        %2462 = vmatprep.subr.mxu0 %v2432
        %2463 = vmatpush1.msra.mxu0 %v2430
        %2464 = vmatprep.subr.mxu0 %v2424
        %2465 = vmatpush1.msra.mxu0 %v2421
        %2466 = vmatprep.subr.mxu0 0.0
        %2467 = vmatpush2.msra.mxu0 0.0
        %2468 = vmatprep.subr.mxu0 0.0
        %2469 = vmatpush2.msra.mxu0 0.0
        %2470 = vmatprep.subr.mxu0 0.0
        %2471 = vmatpush2.msra.mxu0 0.0
        %2472 = vmatprep.subr.mxu0 0.0
        %2473 = vmatpush2.msra.mxu0 0.0
        %2474 = vmatprep.subr.mxu0 0.0
        %2475 = vmatpush2.msra.mxu0 0.0
        %2476 = vmatprep.subr.mxu0 0.0
        %2477 = vmatpush2.msra.mxu0 0.0
        %2478 = vmatprep.subr.mxu0 0.0
        %2479 = vmatpush2.msra.mxu0 0.0
        %2480 = vmatprep.subr.mxu0 0.0
        %2481 = vmatpush2.msra.mxu0 0.0
        %2482 = vmatprep.subr.mxu0 0.0
        %2483 = vmatpush2.msra.mxu0 0.0
        %2484 = vmatprep.subr.mxu0 0.0
        %2485 = vmatpush2.msra.mxu0 0.0
        %2486 = vmatprep.subr.mxu0 0.0
        %2487 = vmatpush2.msra.mxu0 0.0
        %2488 = vmatprep.subr.mxu0 0.0
        %2489 = vmatpush2.msra.mxu0 0.0
        %2490 = vmatprep.subr.mxu0 0.0
        %2491 = vmatpush2.msra.mxu0 0.0
        %2492 = vmatprep.subr.mxu0 0.0
        %2493 = vmatpush2.msra.mxu0 0.0
        %2494 = vmatprep.subr.mxu0 0.0
        %2495 = vmatpush2.msra.mxu0 0.0
        %2496 = vmatprep.subr.mxu0 0.0
        %2497 = vmatpush2.msra.mxu0 0.0
        %2498 = vmatprep.mubr.f32.mxu0 0.0
        %2499 = vmatmul.mubr.f32.gmra.mxu0 %v2428
        %v2500 = vpop.f32.mrf.mxu0
        %v2501 = vadd.f32 0.0, %v2500
        %v2502 = vpop.f32.mrf.mxu0
        %v2503 = vadd.f32 0.0, %v2502
        %2504 = vdwg.mxu0
        %v2505 = vadd.f32 %v2408, %v2501
        %v2506 = vadd.f32 %v2409, %v2503
        %v2507 = vld [vmem:[%s922] sm:$0xf0]
        %v2508 = vld [vmem:[%s922 + $0x8] sm:$0xf0]
        %v2509 = vld [vmem:[%s922 + $0x10] sm:$0xff]
        %v2510 = vld [vmem:[%s922 + $0x18] sm:$0xff]
        %v2511 = vld [vmem:[%s1650] sm:$0xff]
        %v2516 = vrot.slane %v2507, 4
        %v2517 = vrot.slane %v2509, 4
        %v2518 = vsel %vm1136, %v2516, %v2517
        %v2519 = vrot.slane %v2508, 4
        %v2520 = vrot.slane %v2510, 4
        %v2521 = vsel %vm1136, %v2519, %v2520
        %v2525 = vsel %vm1132, %v2511, 0
        %v2527 = vsel %vm1136, %v2517, 0
        %v2529 = vsel %vm1136, %v2520, 0
        %2531 = vmatprep.subr.mxu0 0.0
        %2532 = vmatpush1.msra.mxu0 0.0
        %2533 = vmatprep.subr.mxu0 0.0
        %2534 = vmatpush1.msra.mxu0 0.0
        %2535 = vmatprep.subr.mxu0 0.0
        %2536 = vmatpush1.msra.mxu0 0.0
        %2537 = vmatprep.subr.mxu0 0.0
        %2538 = vmatpush1.msra.mxu0 0.0
        %2539 = vmatprep.subr.mxu0 0.0
        %2540 = vmatpush1.msra.mxu0 0.0
        %2541 = vmatprep.subr.mxu0 0.0
        %2542 = vmatpush1.msra.mxu0 0.0
        %2543 = vmatprep.subr.mxu0 0.0
        %2544 = vmatpush1.msra.mxu0 0.0
        %2545 = vmatprep.subr.mxu0 0.0
        %2546 = vmatpush1.msra.mxu0 0.0
        %2547 = vmatprep.subr.mxu0 0.0
        %2548 = vmatpush1.msra.mxu0 0.0
        %2549 = vmatprep.subr.mxu0 0.0
        %2550 = vmatpush1.msra.mxu0 0.0
        %2551 = vmatprep.subr.mxu0 0.0
        %2552 = vmatpush1.msra.mxu0 0.0
        %2553 = vmatprep.subr.mxu0 0.0
        %2554 = vmatpush1.msra.mxu0 0.0
        %2555 = vmatprep.subr.mxu0 0.0
        %2556 = vmatpush1.msra.mxu0 0.0
        %2557 = vmatprep.subr.mxu0 0.0
        %2558 = vmatpush1.msra.mxu0 0.0
        %2559 = vmatprep.subr.mxu0 %v2529
        %2560 = vmatpush1.msra.mxu0 %v2527
        %2561 = vmatprep.subr.mxu0 %v2521
        %2562 = vmatpush1.msra.mxu0 %v2518
        %2563 = vmatprep.subr.mxu0 0.0
        %2564 = vmatpush2.msra.mxu0 0.0
        %2565 = vmatprep.subr.mxu0 0.0
        %2566 = vmatpush2.msra.mxu0 0.0
        %2567 = vmatprep.subr.mxu0 0.0
        %2568 = vmatpush2.msra.mxu0 0.0
        %2569 = vmatprep.subr.mxu0 0.0
        %2570 = vmatpush2.msra.mxu0 0.0
        %2571 = vmatprep.subr.mxu0 0.0
        %2572 = vmatpush2.msra.mxu0 0.0
        %2573 = vmatprep.subr.mxu0 0.0
        %2574 = vmatpush2.msra.mxu0 0.0
        %2575 = vmatprep.subr.mxu0 0.0
        %2576 = vmatpush2.msra.mxu0 0.0
        %2577 = vmatprep.subr.mxu0 0.0
        %2578 = vmatpush2.msra.mxu0 0.0
        %2579 = vmatprep.subr.mxu0 0.0
        %2580 = vmatpush2.msra.mxu0 0.0
        %2581 = vmatprep.subr.mxu0 0.0
        %2582 = vmatpush2.msra.mxu0 0.0
        %2583 = vmatprep.subr.mxu0 0.0
        %2584 = vmatpush2.msra.mxu0 0.0
        %2585 = vmatprep.subr.mxu0 0.0
        %2586 = vmatpush2.msra.mxu0 0.0
        %2587 = vmatprep.subr.mxu0 0.0
        %2588 = vmatpush2.msra.mxu0 0.0
        %2589 = vmatprep.subr.mxu0 0.0
        %2590 = vmatpush2.msra.mxu0 0.0
        %2591 = vmatprep.subr.mxu0 0.0
        %2592 = vmatpush2.msra.mxu0 0.0
        %2593 = vmatprep.subr.mxu0 0.0
        %2594 = vmatpush2.msra.mxu0 0.0
        %2595 = vmatprep.mubr.f32.mxu0 0.0
        %2596 = vmatmul.mubr.f32.gmra.mxu0 %v2525
        %v2597 = vpop.f32.mrf.mxu0
        %v2598 = vadd.f32 0.0, %v2597
        %v2599 = vpop.f32.mrf.mxu0
        %v2600 = vadd.f32 0.0, %v2599
        %2601 = vdwg.mxu0
        %v2602 = vadd.f32 %v2505, %v2598
        %v2603 = vadd.f32 %v2506, %v2600
        %v2604 = vld [vmem:[%s1019] sm:$0xf0]
        %v2605 = vld [vmem:[%s1019 + $0x8] sm:$0xf0]
        %v2606 = vld [vmem:[%s1019 + $0x10] sm:$0xff]
        %v2607 = vld [vmem:[%s1019 + $0x18] sm:$0xff]
        %v2608 = vld [vmem:[%s1738] sm:$0xff]
        %v2613 = vrot.slane %v2604, 4
        %v2614 = vrot.slane %v2606, 4
        %v2615 = vsel %vm1136, %v2613, %v2614
        %v2616 = vrot.slane %v2605, 4
        %v2617 = vrot.slane %v2607, 4
        %v2618 = vsel %vm1136, %v2616, %v2617
        %v2622 = vsel %vm1132, %v2608, 0
        %v2624 = vsel %vm1136, %v2614, 0
        %v2626 = vsel %vm1136, %v2617, 0
        %2628 = vmatprep.subr.mxu0 0.0
        %2629 = vmatpush1.msra.mxu0 0.0
        %2630 = vmatprep.subr.mxu0 0.0
        %2631 = vmatpush1.msra.mxu0 0.0
        %2632 = vmatprep.subr.mxu0 0.0
        %2633 = vmatpush1.msra.mxu0 0.0
        %2634 = vmatprep.subr.mxu0 0.0
        %2635 = vmatpush1.msra.mxu0 0.0
        %2636 = vmatprep.subr.mxu0 0.0
        %2637 = vmatpush1.msra.mxu0 0.0
        %2638 = vmatprep.subr.mxu0 0.0
        %2639 = vmatpush1.msra.mxu0 0.0
        %2640 = vmatprep.subr.mxu0 0.0
        %2641 = vmatpush1.msra.mxu0 0.0
        %2642 = vmatprep.subr.mxu0 0.0
        %2643 = vmatpush1.msra.mxu0 0.0
        %2644 = vmatprep.subr.mxu0 0.0
        %2645 = vmatpush1.msra.mxu0 0.0
        %2646 = vmatprep.subr.mxu0 0.0
        %2647 = vmatpush1.msra.mxu0 0.0
        %2648 = vmatprep.subr.mxu0 0.0
        %2649 = vmatpush1.msra.mxu0 0.0
        %2650 = vmatprep.subr.mxu0 0.0
        %2651 = vmatpush1.msra.mxu0 0.0
        %2652 = vmatprep.subr.mxu0 0.0
        %2653 = vmatpush1.msra.mxu0 0.0
        %2654 = vmatprep.subr.mxu0 0.0
        %2655 = vmatpush1.msra.mxu0 0.0
        %2656 = vmatprep.subr.mxu0 %v2626
        %2657 = vmatpush1.msra.mxu0 %v2624
        %2658 = vmatprep.subr.mxu0 %v2618
        %2659 = vmatpush1.msra.mxu0 %v2615
        %2660 = vmatprep.subr.mxu0 0.0
        %2661 = vmatpush2.msra.mxu0 0.0
        %2662 = vmatprep.subr.mxu0 0.0
        %2663 = vmatpush2.msra.mxu0 0.0
        %2664 = vmatprep.subr.mxu0 0.0
        %2665 = vmatpush2.msra.mxu0 0.0
        %2666 = vmatprep.subr.mxu0 0.0
        %2667 = vmatpush2.msra.mxu0 0.0
        %2668 = vmatprep.subr.mxu0 0.0
        %2669 = vmatpush2.msra.mxu0 0.0
        %2670 = vmatprep.subr.mxu0 0.0
        %2671 = vmatpush2.msra.mxu0 0.0
        %2672 = vmatprep.subr.mxu0 0.0
        %2673 = vmatpush2.msra.mxu0 0.0
        %2674 = vmatprep.subr.mxu0 0.0
        %2675 = vmatpush2.msra.mxu0 0.0
        %2676 = vmatprep.subr.mxu0 0.0
        %2677 = vmatpush2.msra.mxu0 0.0
        %2678 = vmatprep.subr.mxu0 0.0
        %2679 = vmatpush2.msra.mxu0 0.0
        %2680 = vmatprep.subr.mxu0 0.0
        %2681 = vmatpush2.msra.mxu0 0.0
        %2682 = vmatprep.subr.mxu0 0.0
        %2683 = vmatpush2.msra.mxu0 0.0
        %2684 = vmatprep.subr.mxu0 0.0
        %2685 = vmatpush2.msra.mxu0 0.0
        %2686 = vmatprep.subr.mxu0 0.0
        %2687 = vmatpush2.msra.mxu0 0.0
        %2688 = vmatprep.subr.mxu0 0.0
        %2689 = vmatpush2.msra.mxu0 0.0
        %2690 = vmatprep.subr.mxu0 0.0
        %2691 = vmatpush2.msra.mxu0 0.0
        %2692 = vmatprep.mubr.f32.mxu0 0.0
        %2693 = vmatmul.mubr.f32.gmra.mxu0 %v2622
        %v2694 = vpop.f32.mrf.mxu0
        %v2695 = vadd.f32 0.0, %v2694
        %v2696 = vpop.f32.mrf.mxu0
        %v2697 = vadd.f32 0.0, %v2696
        %2698 = vdwg.mxu0
        %v2699 = vadd.f32 %v2602, %v2695
        %v2700 = vadd.f32 %v2603, %v2697
        %v2701 = vld [vmem:[%s1116] sm:$0xf0]
        %v2702 = vld [vmem:[%s1116 + $0x8] sm:$0xf0]
        %v2703 = vld [vmem:[%s1116 + $0x10] sm:$0xff]
        %v2704 = vld [vmem:[%s1116 + $0x18] sm:$0xff]
        %v2705 = vld [vmem:[%s1826] sm:$0xff]
        %v2710 = vrot.slane %v2701, 4
        %v2711 = vrot.slane %v2703, 4
        %v2712 = vsel %vm1136, %v2710, %v2711
        %v2713 = vrot.slane %v2702, 4
        %v2714 = vrot.slane %v2704, 4
        %v2715 = vsel %vm1136, %v2713, %v2714
        %v2719 = vsel %vm1132, %v2705, 0
        %v2721 = vsel %vm1136, %v2711, 0
        %v2723 = vsel %vm1136, %v2714, 0
        %2725 = vmatprep.subr.mxu0 0.0
        %2726 = vmatpush1.msra.mxu0 0.0
        %2727 = vmatprep.subr.mxu0 0.0
        %2728 = vmatpush1.msra.mxu0 0.0
        %2729 = vmatprep.subr.mxu0 0.0
        %2730 = vmatpush1.msra.mxu0 0.0
        %2731 = vmatprep.subr.mxu0 0.0
        %2732 = vmatpush1.msra.mxu0 0.0
        %2733 = vmatprep.subr.mxu0 0.0
        %2734 = vmatpush1.msra.mxu0 0.0
        %2735 = vmatprep.subr.mxu0 0.0
        %2736 = vmatpush1.msra.mxu0 0.0
        %2737 = vmatprep.subr.mxu0 0.0
        %2738 = vmatpush1.msra.mxu0 0.0
        %2739 = vmatprep.subr.mxu0 0.0
        %2740 = vmatpush1.msra.mxu0 0.0
        %2741 = vmatprep.subr.mxu0 0.0
        %2742 = vmatpush1.msra.mxu0 0.0
        %2743 = vmatprep.subr.mxu0 0.0
        %2744 = vmatpush1.msra.mxu0 0.0
        %2745 = vmatprep.subr.mxu0 0.0
        %2746 = vmatpush1.msra.mxu0 0.0
        %2747 = vmatprep.subr.mxu0 0.0
        %2748 = vmatpush1.msra.mxu0 0.0
        %2749 = vmatprep.subr.mxu0 0.0
        %2750 = vmatpush1.msra.mxu0 0.0
        %2751 = vmatprep.subr.mxu0 0.0
        %2752 = vmatpush1.msra.mxu0 0.0
        %2753 = vmatprep.subr.mxu0 %v2723
        %2754 = vmatpush1.msra.mxu0 %v2721
        %2755 = vmatprep.subr.mxu0 %v2715
        %2756 = vmatpush1.msra.mxu0 %v2712
        %2757 = vmatprep.subr.mxu0 0.0
        %2758 = vmatpush2.msra.mxu0 0.0
        %2759 = vmatprep.subr.mxu0 0.0
        %2760 = vmatpush2.msra.mxu0 0.0
        %2761 = vmatprep.subr.mxu0 0.0
        %2762 = vmatpush2.msra.mxu0 0.0
        %2763 = vmatprep.subr.mxu0 0.0
        %2764 = vmatpush2.msra.mxu0 0.0
        %2765 = vmatprep.subr.mxu0 0.0
        %2766 = vmatpush2.msra.mxu0 0.0
        %2767 = vmatprep.subr.mxu0 0.0
        %2768 = vmatpush2.msra.mxu0 0.0
        %2769 = vmatprep.subr.mxu0 0.0
        %2770 = vmatpush2.msra.mxu0 0.0
        %2771 = vmatprep.subr.mxu0 0.0
        %2772 = vmatpush2.msra.mxu0 0.0
        %2773 = vmatprep.subr.mxu0 0.0
        %2774 = vmatpush2.msra.mxu0 0.0
        %2775 = vmatprep.subr.mxu0 0.0
        %2776 = vmatpush2.msra.mxu0 0.0
        %2777 = vmatprep.subr.mxu0 0.0
        %2778 = vmatpush2.msra.mxu0 0.0
        %2779 = vmatprep.subr.mxu0 0.0
        %2780 = vmatpush2.msra.mxu0 0.0
        %2781 = vmatprep.subr.mxu0 0.0
        %2782 = vmatpush2.msra.mxu0 0.0
        %2783 = vmatprep.subr.mxu0 0.0
        %2784 = vmatpush2.msra.mxu0 0.0
        %2785 = vmatprep.subr.mxu0 0.0
        %2786 = vmatpush2.msra.mxu0 0.0
        %2787 = vmatprep.subr.mxu0 0.0
        %2788 = vmatpush2.msra.mxu0 0.0
        %2789 = vmatprep.mubr.f32.mxu0 0.0
        %2790 = vmatmul.mubr.f32.gmra.mxu0 %v2719
        %v2791 = vpop.f32.mrf.mxu0
        %v2792 = vadd.f32 0.0, %v2791
        %v2793 = vpop.f32.mrf.mxu0
        %v2794 = vadd.f32 0.0, %v2793
        %2795 = vdwg.mxu0
        %v2796 = vadd.f32 %v2699, %v2792
        %v2797 = vadd.f32 %v2700, %v2794
        %v2798 = vpack.c.bf16 %v2796, %v2796
        %v2799 = vpack.c.bf16 %v2797, %v2797
        %v2802 = vunpack.c.l.b16 %v2798
        %v2803 = vunpack.c.l.b16 %v2799
        %v2804 = vpack.c.b16 %v2803, %v2802
        %s2806 = scalar_lea.vmem %s196, 8 [#allocation9]
        %2807 = vst [vmem:[%s2806] sm:$0xff] %v2804
        %v2808 = vadd.f32 %v2796, %v2797
        %2809 = vadd.xlane.f32.xlu0 %v2808
        %v2810 = vpop.xlane.xlu0 %2809
        %v2811 = vadd.f32 %v1922, %v2810
        %v2812 = vmul.f32 %v2796, %v2796
        %v2813 = vmul.f32 %v2797, %v2797
        %v2814 = vadd.f32 %v2812, %v2813
        %2815 = vadd.xlane.f32.xlu0 %v2814
        %v2816 = vpop.xlane.xlu0 %2815
        %v2817 = vadd.f32 %v1928, %v2816
        %vm2818 = vcmask 7168
        %v2819 = vsel %vm2818, %v2811, %v2817
        %vm2820 = vcmask 15360
        %2821 = vst.msk [vmem:[%s215] sm:$0xff] %vm2820, %v2819
        %s2822 = sand.u32 %s85, 1
        %s2823 = scalar_lea.sflag [#allocation6], %s2822
        %s2824 = sand.u32 %s85, 1
        %s2825 = smul.addr %s2824, 16
        %s2826 = scalar_lea.vmem [#allocation9], %s2825
        %p2827 = scmp.lt.s32.totalorder %s25, 1
        %s2828 = scalar_select %p2827, %s25, 1
        %p2829 = scmp.lt.s32.totalorder %s26, 1
        %s2830 = scalar_select %p2829, %s26, 1
        %s2831 = smul.addr %s2828, 2
        %s2832 = sadd.s32 %s2830, %s2831
        %s2833 = smul.addr %s2832, 8
        %s2834 = scalar_lea.vmem %s4, %s2833
        // Predicated region
        $region42: #{tpu_custom_call.1} parent=27 // pred_check
          %p2835 = pneg %p95
        $region43: #{tpu_custom_call.1} parent=27 // pred_check_branch
          %2837 = sbr.rel (%p2835) target = $region45
        $region44: #{tpu_custom_call.1} parent=27 // pred_region
          %s2838 = smul.u32 2, %s26
          %s2840 = ssub.s32 256, 256
          %2841 = vsyncadd %s2823, %s2840
          %s2842 = smul.addr %s2838, 2
          %s2843 = smul.addr %s25, 8
          %s2844 = sadd.s32 %s2842, %s2843
          %s2845 = smul.addr %s2844, 64
          %s2846 = scalar_lea.hbm %s3, %s2845
          %s2847 = sshll.u32 %s2826, 4
          %s2848 = int_to_ptr.vmem [resolvable:$true] %s2847
          %2853 = dma.vmem_to_hbm [thread:$0]  %s2848, 256, %s2846, %s2823, 128, 128, 8
        $region45: #{tpu_custom_call.1} parent=27 // pred_fallthru
          _
        // Predicated region
        $region46: #{tpu_custom_call.1} parent=27 // pred_check
          %p2854 = pneg %p123
        $region47: #{tpu_custom_call.1} parent=27 // pred_check_branch
          %2856 = sbr.rel (%p2854) target = $region49
        $region48: #{tpu_custom_call.1} parent=27 // pred_region
          _
        $region49: #{tpu_custom_call.1} parent=27 // pred_fallthru
          _
      $region28: #{tpu_custom_call.1} parent=5 // pred_fallthru
        _
      %p2857 = scmp.le.s32.totalorder 2, %s16
      // Predicated region
      $region50: #{tpu_custom_call.1} parent=5 // pred_check
        %p2858 = pneg %p2857
      $region51: #{tpu_custom_call.1} parent=5 // pred_check_branch
        %2860 = sbr.rel (%p2858) target = $region53
      $region52: #{tpu_custom_call.1} parent=5 // pred_region
        %s2861 = ssub.s32 %s16, 2
        // Predicated region
        $region54: #{tpu_custom_call.1} parent=52 // pred_check
          %p2862 = pneg %p101
        $region55: #{tpu_custom_call.1} parent=52 // pred_check_branch
          %2864 = sbr.rel (%p2862) target = $region57
        $region56: #{tpu_custom_call.1} parent=52 // pred_region
          %s2865 = sand.u32 %s86, 1
          %s2866 = scalar_lea.sflag [#allocation6], %s2865
          %s2867 = sand.u32 %s86, 1
          %s2868 = smul.addr %s2867, 16
          %s2869 = scalar_lea.vmem [#allocation9], %s2868
          %2870 = dma.done %s2866, 256
        $region57: #{tpu_custom_call.1} parent=52 // pred_fallthru
          _
        // Predicated region
        $region58: #{tpu_custom_call.1} parent=52 // pred_check
          %p2871 = pneg %p129
        $region59: #{tpu_custom_call.1} parent=52 // pred_check_branch
          %2873 = sbr.rel (%p2871) target = $region61
        $region60: #{tpu_custom_call.1} parent=52 // pred_region
          %p2874 = scmp.lt.s32.totalorder %s27, 1
          %s2875 = scalar_select %p2874, %s27, 1
          %p2876 = scmp.lt.s32.totalorder %s28, 1
          %s2877 = scalar_select %p2876, %s28, 1
          %s2878 = smul.addr %s2875, 2
          %s2879 = sadd.s32 %s2877, %s2878
          %s2880 = smul.addr %s2879, 8
          %s2881 = scalar_lea.vmem %s4, %s2880
        $region61: #{tpu_custom_call.1} parent=52 // pred_fallthru
          _
      $region53: #{tpu_custom_call.1} parent=5 // pred_fallthru
        _
    $region6: #{tpu_custom_call.1} parent=1 // loop_footer
      %s20 = sadd.s32 1, %s16
    $region7: #{tpu_custom_call.1} parent=1 // loop_footer_branch
      %15 = sbr.rel target = $region3
    $region8: #{tpu_custom_call.1} parent=1 // loop_exit
      _
    %2882 = vsyncpa [#allocation5], 1
    %s2883 = scalar_lea.sflag [#allocation5], 1
    %2884 = vsyncpa %s2883, 1
    %2885 = vsyncpa [#allocation8], 1
    %2886 = vsyncpa [#allocation6], 1
    %s2887 = scalar_lea.sflag [#allocation6], 1
    %2888 = vsyncpa %s2887, 1

</llo_original>
